<compile_context>
chip_gen: v7x
topology: tpu7x:2x2x1
jax: 0.10.0
libtpu: 0.0.40
codegen_flags: <defaults>
</compile_context>

<pallas_src>
import functools

import jax
import jax.numpy as jnp
from jax.experimental import pallas as pl
from jax.experimental.pallas import tpu as pltpu


def _contrastor_kernel(x_ref, w1t_ref, b1_ref, w2t_ref, o_ref):
    # x_ref:   (B, In)      resident, dtype == W1 streaming dtype
    # w1t_ref: (In, tk)     streamed tile of W1^T (bf16 by default)
    # b1_ref:  (1, tk)      streamed tile of b1 (f32)
    # w2t_ref: (tk, Out)    streamed tile of W2^T (f32)
    # o_ref:   (B, Out) f32 resident output slab for this core split
    k = pl.program_id(1)

    @pl.when(k == 0)
    def _init():
        o_ref[...] = jnp.zeros_like(o_ref)

    # Layer 1 partial: h_tile = relu(x @ W1T[:, tile] + b1[tile])  (f32 acc)
    h = jnp.dot(x_ref[...], w1t_ref[...], preferred_element_type=jnp.float32)
    h = jnp.maximum(h + b1_ref[...], 0.0)

    # Layer 2 partial accumulation directly into the resident f32 output.
    o_ref[...] += jnp.dot(h, w2t_ref[...], preferred_element_type=jnp.float32)


def _pick_hidden_tile(h_per_split, in_f, out_f, batch, w1_bytes,
                      budget_bytes=14 * 1024 * 1024):
    """Largest hidden-dim tile whose full double-buffered VMEM footprint
    (streamed W1^T, W2^T, b1 tiles + resident x and output) stays under the
    budget (fits every generation's default scoped VMEM, incl. v5e 16 MiB)."""
    def vmem_bytes(tk):
        return (2 * in_f * tk * w1_bytes       # W1^T tile, double-buffered
                + 2 * tk * out_f * 4           # W2^T tile, double-buffered
                + 2 * tk * 4                   # b1 tile
                + 2 * batch * in_f * w1_bytes  # resident x
                + 2 * batch * out_f * 4)       # resident output slab
    for cand in (1024, 512, 256, 128):
        if cand <= h_per_split and h_per_split % cand == 0 \
                and vmem_bytes(cand) <= budget_bytes:
            return cand
    return 128 if h_per_split % 128 == 0 else h_per_split


def prepare_contrastor_params(w1, b1, w2, b2, *, w1_dtype=jnp.bfloat16):
    """One-time parameter prep (do NOT call per forward): transpose to MXU
    (K, N) orientation and cast W1 to its streaming dtype (bf16 by default).
    W2 / biases stay f32 (W2 is only ~2 MB) to avoid stacking quant error."""
    w1t = jnp.asarray(w1.T, dtype=w1_dtype)            # (In, H)
    b1r = jnp.asarray(b1, dtype=jnp.float32).reshape(1, -1)  # (1, H)
    w2t = jnp.asarray(w2.T, dtype=jnp.float32)         # (H, Out)
    b2r = jnp.asarray(b2, dtype=jnp.float32)           # (Out,)
    return w1t, b1r, w2t, b2r


def contrastor_forward(x, params, *, tk=None, core_splits=2):
    """Forward pass of `contrastor`.

    x:      (B, In) float32
    params: output of prepare_contrastor_params (pre-transposed / pre-cast)
    returns (B, Out) float32
    """
    w1t, b1r, w2t, b2r = params
    In, H = w1t.shape
    H2, Out = w2t.shape
    assert H == H2 and b1r.shape == (1, H) and b2r.shape == (Out,)
    B, In_x = x.shape
    assert In_x == In

    w1_bytes = jnp.dtype(w1t.dtype).itemsize

    # Split the hidden reduction across TensorCores (2 on v7x; a cheap no-op
    # extra grid step + tiny XLA add on single-TC v5e/v6e).
    splits = core_splits if (core_splits >= 1 and H % (core_splits * 128) == 0) else 1
    h_per_split = H // splits

    if tk is None:
        tk = _pick_hidden_tile(h_per_split, In, Out, B, w1_bytes)
    assert h_per_split % tk == 0, "hidden dim per core split must be divisible by tk"
    steps_per_split = h_per_split // tk

    # x streams through the first matmul in W1's dtype (tiny 64 KB cast).
    x_in = x.astype(w1t.dtype)

    cost = pl.CostEstimate(
        flops=2 * B * In * H + 2 * B * H * Out,
        transcendentals=0,
        bytes_accessed=(
            B * In * w1_bytes            # x
            + In * H * w1_bytes          # W1^T  (dominant term)
            + H * 4                      # b1
            + H * Out * 4                # W2^T
            + splits * B * Out * 4       # partial outputs
        ),
    )

    def w1_map(c, k, spc=steps_per_split):
        return (0, c * spc + k)

    def b1_map(c, k, spc=steps_per_split):
        return (0, c * spc + k)

    def w2_map(c, k, spc=steps_per_split):
        return (c * spc + k, 0)

    partials = pl.pallas_call(
        _contrastor_kernel,
        out_shape=jax.ShapeDtypeStruct((splits, B, Out), jnp.float32),
        grid_spec=pltpu.PrefetchScalarGridSpec(
            num_scalar_prefetch=0,
            grid=(splits, steps_per_split),
            in_specs=[
                pl.BlockSpec((B, In), lambda c, k: (0, 0)),    # x: resident
                pl.BlockSpec((In, tk), w1_map),                # W1^T tile
                pl.BlockSpec((1, tk), b1_map),                 # b1 tile
                pl.BlockSpec((tk, Out), w2_map),               # W2^T tile
            ],
            out_specs=pl.BlockSpec((None, B, Out), lambda c, k: (c, 0, 0)),
        ),
        compiler_params=pltpu.CompilerParams(
            # leading axis shards across TensorCores (v7x); trailing axis is
            # the hidden-dim reduction with the output resident/accumulating.
            dimension_semantics=("parallel", "arbitrary"),
        ),
        cost_estimate=cost,
    )(x_in, w1t, b1r, w2t)

    # Combine per-core partial sums and add the (tiny) second-layer bias.
    return partials.sum(axis=0) + b2r


def contrastor_ref(x, w1, b1, w2, b2):
    h = jnp.maximum(x @ w1.T + b1, 0.0)
    return h @ w2.T + b2


if __name__ == "__main__":
    # Shapes fixed by the module: Linear(2048->2048) -> ReLU -> Linear(2048->256).
    B, In, H, Out = 8, 2048, 2048, 256

    key = jax.random.PRNGKey(0)
    kx, k1, kb1, k2, kb2 = jax.random.split(key, 5)

    x = jax.random.normal(kx, (B, In), dtype=jnp.float32)
    bound1 = 1.0 / (In ** 0.5)
    w1 = jax.random.uniform(k1, (H, In), jnp.float32, -bound1, bound1)
    b1 = jax.random.uniform(kb1, (H,), jnp.float32, -bound1, bound1)
    bound2 = 1.0 / (H ** 0.5)
    w2 = jax.random.uniform(k2, (Out, H), jnp.float32, -bound2, bound2)
    b2 = jax.random.uniform(kb2, (Out,), jnp.float32, -bound2, bound2)

    ref = contrastor_ref(x, w1, b1, w2, b2)

    # Exact f32 path (matches the PyTorch module's dtype).
    params_f32 = prepare_contrastor_params(w1, b1, w2, b2, w1_dtype=jnp.float32)
    out_f32 = jax.block_until_ready(contrastor_forward(x, params_f32))
    assert out_f32.shape == (B, Out)
    assert jnp.allclose(out_f32, ref, atol=1e-3, rtol=1e-3), "f32 mismatch vs reference"

    # Default path: bf16 W1 streaming (bandwidth-optimal), f32 W2/h/accumulate.
    params_bf16 = prepare_contrastor_params(w1, b1, w2, b2)   # w1_dtype=bf16
    out_bf16 = jax.block_until_ready(contrastor_forward(x, params_bf16))
    assert out_bf16.shape == (B, Out)
    assert jnp.allclose(out_bf16, ref, atol=3e-2, rtol=3e-2), "bf16 mismatch vs reference"

    print("KERNEL_OK")
</pallas_src>

<mosaic_0001>
module attributes {stable_mosaic.version = 11 : i64} {
  func.func @_contrastor_kernel(%arg0: i32, %arg1: i32, %arg2: memref<8x2048xf32, #tpu.memory_space<vmem>>, %arg3: memref<2048x512xf32, #tpu.memory_space<vmem>>, %arg4: memref<1x512xf32, #tpu.memory_space<vmem>>, %arg5: memref<512x256xf32, #tpu.memory_space<vmem>>, %arg6: memref<1x8x256xf32, #tpu.memory_space<vmem>>) attributes {dimension_semantics = [#tpu.dimension_semantics<parallel>, #tpu.dimension_semantics<arbitrary>], iteration_bounds = array<i64: 2, 2>, scalar_prefetch = 0 : i64, scratch_operands = 0 : i64, tpu.core_type = #tpu.core_type<tc>, window_params = [{pipeline_mode = #tpu.pipeline_mode<synchronous>, transform_indices = @transform_0, window_bounds = array<i64: 8, 2048>}, {transform_indices = @transform_1, window_bounds = array<i64: 2048, 512>}, {transform_indices = @transform_2, window_bounds = array<i64: 1, 512>}, {transform_indices = @transform_3, window_bounds = array<i64: 512, 256>}, {transform_indices = @transform_4, window_bounds = array<i64: 1, 8, 256>}]} {
    %c0_i32 = arith.constant 0 : i32
    %0 = arith.cmpi eq, %arg1, %c0_i32 : i32
    %1 = arith.extui %0 : i1 to i32
    %c0_i32_0 = arith.constant 0 : i32
    %2 = arith.cmpi ne, %1, %c0_i32_0 : i32
    scf.if %2 {
      %cst_16 = arith.constant 0.000000e+00 : f32
      %19 = vector.broadcast %cst_16 : f32 to vector<8x256xf32>
      %c0_17 = arith.constant 0 : index
      %c0_18 = arith.constant 0 : index
      %c0_19 = arith.constant 0 : index
      %20 = vector.load %arg6[%c0_17, %c0_18, %c0_19] : memref<1x8x256xf32, #tpu.memory_space<vmem>>, vector<1x8x256xf32>
      %21 = vector.shape_cast %20 : vector<1x8x256xf32> to vector<8x256xf32>
      %22 = vector.shape_cast %19 : vector<8x256xf32> to vector<1x8x256xf32>
      tpu.vector_store %arg6[%c0_17, %c0_18, %c0_19], %22 {strides = array<i32>} : memref<1x8x256xf32, #tpu.memory_space<vmem>>, vector<1x8x256xf32>,
    } else {
    }
    %c0 = arith.constant 0 : index
    %c0_1 = arith.constant 0 : index
    %3 = vector.load %arg2[%c0, %c0_1] : memref<8x2048xf32, #tpu.memory_space<vmem>>, vector<8x2048xf32>
    %c0_2 = arith.constant 0 : index
    %c0_3 = arith.constant 0 : index
    %4 = vector.load %arg3[%c0_2, %c0_3] : memref<2048x512xf32, #tpu.memory_space<vmem>>, vector<2048x512xf32>
    %cst = arith.constant dense<0.000000e+00> : vector<8x512xf32>
    %5 = tpu.matmul %3, %4, %cst {dimension_numbers = #tpu.dot_dimension_numbers<[1], [0], [0], [1], [0, 0, 1, 1], [], []>} : vector<8x2048xf32>, vector<2048x512xf32>, vector<8x512xf32> -> vector<8x512xf32>
    %c0_4 = arith.constant 0 : index
    %c0_5 = arith.constant 0 : index
    %6 = vector.load %arg4[%c0_4, %c0_5] : memref<1x512xf32, #tpu.memory_space<vmem>>, vector<1x512xf32>
    %7 = vector.broadcast %6 : vector<1x512xf32> to vector<8x512xf32>
    %8 = arith.addf %5, %7 : vector<8x512xf32>
    %cst_6 = arith.constant 0.000000e+00 : f32
    %9 = vector.broadcast %cst_6 : f32 to vector<8x512xf32>
    %10 = arith.maximumf %8, %9 : vector<8x512xf32>
    %c0_7 = arith.constant 0 : index
    %c0_8 = arith.constant 0 : index
    %c0_9 = arith.constant 0 : index
    %11 = vector.load %arg6[%c0_7, %c0_8, %c0_9] : memref<1x8x256xf32, #tpu.memory_space<vmem>>, vector<1x8x256xf32>
    %12 = vector.shape_cast %11 : vector<1x8x256xf32> to vector<8x256xf32>
    %c0_10 = arith.constant 0 : index
    %c0_11 = arith.constant 0 : index
    %13 = vector.load %arg5[%c0_10, %c0_11] : memref<512x256xf32, #tpu.memory_space<vmem>>, vector<512x256xf32>
    %cst_12 = arith.constant dense<0.000000e+00> : vector<8x256xf32>
    %14 = tpu.matmul %10, %13, %cst_12 {dimension_numbers = #tpu.dot_dimension_numbers<[1], [0], [0], [1], [0, 0, 1, 1], [], []>} : vector<8x512xf32>, vector<512x256xf32>, vector<8x256xf32> -> vector<8x256xf32>
    %15 = arith.addf %12, %14 : vector<8x256xf32>
    %c0_13 = arith.constant 0 : index
    %c0_14 = arith.constant 0 : index
    %c0_15 = arith.constant 0 : index
    %16 = vector.load %arg6[%c0_13, %c0_14, %c0_15] : memref<1x8x256xf32, #tpu.memory_space<vmem>>, vector<1x8x256xf32>
    %17 = vector.shape_cast %16 : vector<1x8x256xf32> to vector<8x256xf32>
    %18 = vector.shape_cast %15 : vector<8x256xf32> to vector<1x8x256xf32>
    tpu.vector_store %arg6[%c0_13, %c0_14, %c0_15], %18 {strides = array<i32>} : memref<1x8x256xf32, #tpu.memory_space<vmem>>, vector<1x8x256xf32>,
    return
  }
  func.func @transform_0(%arg0: i32, %arg1: i32) -> (i32, i32) {
    %c0_i32 = arith.constant 0 : i32
    %c0_i32_0 = arith.constant 0 : i32
    %c0_i32_1 = arith.constant 0 : i32
    return %c0_i32, %c0_i32_0 : i32, i32
  }
  func.func @transform_1(%arg0: i32, %arg1: i32) -> (i32, i32) {
    %c2_i32 = arith.constant 2 : i32
    %0 = arith.muli %arg0, %c2_i32 : i32
    %1 = arith.addi %0, %arg1 : i32
    %c0_i32 = arith.constant 0 : i32
    %c0_i32_0 = arith.constant 0 : i32
    return %c0_i32, %1 : i32, i32
  }
  func.func @transform_2(%arg0: i32, %arg1: i32) -> (i32, i32) {
    %c2_i32 = arith.constant 2 : i32
    %0 = arith.muli %arg0, %c2_i32 : i32
    %1 = arith.addi %0, %arg1 : i32
    %c0_i32 = arith.constant 0 : i32
    %c0_i32_0 = arith.constant 0 : i32
    return %c0_i32, %1 : i32, i32
  }
  func.func @transform_3(%arg0: i32, %arg1: i32) -> (i32, i32) {
    %c2_i32 = arith.constant 2 : i32
    %0 = arith.muli %arg0, %c2_i32 : i32
    %1 = arith.addi %0, %arg1 : i32
    %c0_i32 = arith.constant 0 : i32
    %c0_i32_0 = arith.constant 0 : i32
    return %1, %c0_i32 : i32, i32
  }
  func.func @transform_4(%arg0: i32, %arg1: i32) -> (i32, i32, i32) {
    %c0_i32 = arith.constant 0 : i32
    %c0_i32_0 = arith.constant 0 : i32
    %c0_i32_1 = arith.constant 0 : i32
    return %arg0, %c0_i32, %c0_i32_0 : i32, i32, i32
  }
}

</mosaic_0001>

<llo_original>
// kernel: tpu_custom_call.1
$region0: #{tpu_custom_call.1}
  #allocation0 [shape = 'u32[]', space=smem, size = 0x4, offset = 0x4, fixed_abs, tag = 'smem constant byte address 0x4 - core index']
  #allocation1 [shape = 'u32[144,128]{1,0:T(1,128)}', space=vmem, size = 0x12000, scoped, tag = 'internal scratch']
  %s0 = inlined_call_operand.hbm [shape: f32[8,2048], index: 0, kind: input, shape index: {}]
  %s1 = inlined_call_operand.hbm [shape: f32[2048,2048], index: 1, kind: input, shape index: {}]
  %s2 = inlined_call_operand.hbm [shape: f32[1,2048], index: 2, kind: input, shape index: {}]
  %s3 = inlined_call_operand.hbm [shape: f32[2048,256], index: 3, kind: input, shape index: {}]
  %s4 = inlined_call_operand.hbm [shape: f32[2,8,256], index: 4, kind: output, shape index: {}]
  %s5 = sld [smem:[#allocation0]]
  $region69: #{tpu_custom_call.1} parent=0
    _
  %s7 = ssub.s32 1, %s5
  %s8 = scalar_select 0, %s7, %s5
  $region1: #{tpu_custom_call.1} parent=0
    #allocation2 [shape = 'u8[65536]{0}', space=vmem, size = 0x10000, scoped, tag = 'input window, operand 0, single buffered']
    #allocation3 [shape = 's32[2]{0}', space=sflag, size = 0x8, scoped, tag = 'scoped memory for tpu_custom_call.1']
    #allocation4 [shape = 's32[2]{0}', space=sflag, size = 0x8, scoped, tag = 'scoped memory for tpu_custom_call.1']
    #allocation5 [shape = 'u8[8388608]{0}', space=vmem, size = 0x800000, scoped, tag = 'input window, operand 1']
    #allocation6 [shape = 's32[2]{0}', space=sflag, size = 0x8, scoped, tag = 'scoped memory for tpu_custom_call.1']
    #allocation7 [shape = 'u8[4096]{0}', space=vmem, size = 0x1000, scoped, tag = 'input window, operand 2']
    #allocation8 [shape = 'u8[1048576]{0}', space=vmem, size = 0x100000, scoped, tag = 'input window, operand 3']
    #allocation9 [shape = 's32[2]{0}', space=sflag, size = 0x8, scoped, tag = 'scoped memory for tpu_custom_call.1']
    #allocation10 [shape = 'u8[16384]{0}', space=vmem, size = 0x4000, scoped, tag = 'output window, operand 0']
    %9 = vsyncpa [#allocation3], 0
    %10 = vsyncpa [#allocation6], 0
    %s11 = scalar_lea.sflag [#allocation6], 1
    %12 = vsyncpa %s11, 0
    %13 = vsyncpa [#allocation9], 0
    %s14 = scalar_lea.sflag [#allocation9], 1
    %15 = vsyncpa %s14, 0
    %16 = vsyncpa [#allocation4], 0
    %s17 = scalar_lea.sflag [#allocation4], 1
    %18 = vsyncpa %s17, 0
    loop: start=0, step=1, limit=6
    $region2: #{tpu_custom_call.1} parent=1 // loop_pre_header
      _
    $region3: #{tpu_custom_call.1} parent=1 // loop_header
      %s20 = sphi 0, %s24
      %p21 = scmp.ge.s32.totalorder %s20, 6
      %s27 = sphi 0, %s39
      %s28 = sphi 0, %s35
      %s29 = sphi 0, %s27
      %s30 = sphi 0, %s28
      %s31 = sphi 0, %s29
      %s32 = sphi 0, %s30
      %s40 = sphi 0, %s40
      %s42 = sphi 0, %s40
      %s43 = sphi 0, %s42
      %s57 = sphi 0, %s43
      %s67 = sphi 0, %s69
      %s70 = sphi 0, %s67
      %s71 = sphi 0, %s70
      %s87 = sphi 0, %s71
      %s97 = sphi 0, %s99
      %s100 = sphi 0, %s97
      %s101 = sphi 0, %s100
      %s117 = sphi 0, %s101
      %s127 = sphi 0, %s129
      %s130 = sphi 0, %s127
      %s131 = sphi 0, %s130
      %s147 = sphi 0, %s131
      %s153 = sphi 0, %s155
      %s156 = sphi 0, %s153
      %s157 = sphi 0, %s156
      %s173 = sphi 0, %s157
    $region4: #{tpu_custom_call.1} parent=1 // loop_header_branch
      %23 = sbr.rel (%p21) target = $region8
    $region5: #{tpu_custom_call.1} parent=1 // loop_body
      %s25 = ssub.s32 %s20, 1
      %s26 = ssub.s32 %s20, 2
      %s33 = sadd.s32 1, %s28
      %p34 = scmp.ge.s32.totalorder %s33, 2
      %s35 = scalar_select %p34, 0, %s33
      %s36 = sadd.s32 1, %s27
      %s37 = scalar_select %p34, %s36, %s27
      %p38 = scmp.ge.s32.totalorder %s37, 2
      %s39 = scalar_select %p38, 0, %s37
      %s41 = sadd.s32 %s40, 1
      %p44 = scmp.eq.s32.totalorder %s20, 3
      %p45 = scmp.ne.s32.totalorder %s40, %s42
      %p46 = scmp.eq.s32.totalorder %s20, 0
      %p47 = por %p45, %p46
      %p48 = scmp.ne.s32.totalorder %s40, %s42
      %p49 = scmp.eq.s32.totalorder %s25, 3
      %p50 = por %p48, %p49
      %p51 = scmp.ne.s32.totalorder %s42, %s43
      %p52 = scmp.eq.s32.totalorder %s25, 0
      %p53 = por %p51, %p52
      %p54 = scmp.ne.s32.totalorder %s42, %s43
      %p55 = scmp.eq.s32.totalorder %s26, 3
      %p56 = por %p54, %p55
      %p58 = scmp.ne.s32.totalorder %s43, %s57
      %p59 = scmp.eq.s32.totalorder %s26, 0
      %p60 = por %p58, %p59
      %s61 = smul.u32 %s27, 2
      %s62 = sadd.s32 %s61, %s28
      %s63 = smul.u32 %s39, 2
      %s64 = sadd.s32 %s63, %s35
      %s65 = ssub.s32 %s62, %s64
      %p66 = scmp.eq.s32.totalorder %s65, 0
      %s68 = sadd.s32 %s67, 1
      %s69 = scalar_select %p66, %s67, %s68
      %p72 = pneg %p66
      %p73 = scmp.eq.s32.totalorder %s20, 3
      %p74 = por %p72, %p73
      %p75 = scmp.ne.s32.totalorder %s67, %s70
      %p76 = scmp.eq.s32.totalorder %s20, 0
      %p77 = por %p75, %p76
      %p78 = scmp.ne.s32.totalorder %s67, %s70
      %p79 = scmp.eq.s32.totalorder %s25, 3
      %p80 = por %p78, %p79
      %p81 = scmp.ne.s32.totalorder %s70, %s71
      %p82 = scmp.eq.s32.totalorder %s25, 0
      %p83 = por %p81, %p82
      %p84 = scmp.ne.s32.totalorder %s70, %s71
      %p85 = scmp.eq.s32.totalorder %s26, 3
      %p86 = por %p84, %p85
      %p88 = scmp.ne.s32.totalorder %s71, %s87
      %p89 = scmp.eq.s32.totalorder %s26, 0
      %p90 = por %p88, %p89
      %s91 = smul.u32 %s27, 2
      %s92 = sadd.s32 %s91, %s28
      %s93 = smul.u32 %s39, 2
      %s94 = sadd.s32 %s93, %s35
      %s95 = ssub.s32 %s92, %s94
      %p96 = scmp.eq.s32.totalorder %s95, 0
      %s98 = sadd.s32 %s97, 1
      %s99 = scalar_select %p96, %s97, %s98
      %p102 = pneg %p96
      %p103 = scmp.eq.s32.totalorder %s20, 3
      %p104 = por %p102, %p103
      %p105 = scmp.ne.s32.totalorder %s97, %s100
      %p106 = scmp.eq.s32.totalorder %s20, 0
      %p107 = por %p105, %p106
      %p108 = scmp.ne.s32.totalorder %s97, %s100
      %p109 = scmp.eq.s32.totalorder %s25, 3
      %p110 = por %p108, %p109
      %p111 = scmp.ne.s32.totalorder %s100, %s101
      %p112 = scmp.eq.s32.totalorder %s25, 0
      %p113 = por %p111, %p112
      %p114 = scmp.ne.s32.totalorder %s100, %s101
      %p115 = scmp.eq.s32.totalorder %s26, 3
      %p116 = por %p114, %p115
      %p118 = scmp.ne.s32.totalorder %s101, %s117
      %p119 = scmp.eq.s32.totalorder %s26, 0
      %p120 = por %p118, %p119
      %s121 = smul.u32 %s27, 2
      %s122 = sadd.s32 %s121, %s28
      %s123 = smul.u32 %s39, 2
      %s124 = sadd.s32 %s123, %s35
      %s125 = ssub.s32 %s122, %s124
      %p126 = scmp.eq.s32.totalorder %s125, 0
      %s128 = sadd.s32 %s127, 1
      %s129 = scalar_select %p126, %s127, %s128
      %p132 = pneg %p126
      %p133 = scmp.eq.s32.totalorder %s20, 3
      %p134 = por %p132, %p133
      %p135 = scmp.ne.s32.totalorder %s127, %s130
      %p136 = scmp.eq.s32.totalorder %s20, 0
      %p137 = por %p135, %p136
      %p138 = scmp.ne.s32.totalorder %s127, %s130
      %p139 = scmp.eq.s32.totalorder %s25, 3
      %p140 = por %p138, %p139
      %p141 = scmp.ne.s32.totalorder %s130, %s131
      %p142 = scmp.eq.s32.totalorder %s25, 0
      %p143 = por %p141, %p142
      %p144 = scmp.ne.s32.totalorder %s130, %s131
      %p145 = scmp.eq.s32.totalorder %s26, 3
      %p146 = por %p144, %p145
      %p148 = scmp.ne.s32.totalorder %s131, %s147
      %p149 = scmp.eq.s32.totalorder %s26, 0
      %p150 = por %p148, %p149
      %s151 = ssub.s32 %s27, %s39
      %p152 = scmp.eq.s32.totalorder %s151, 0
      %s154 = sadd.s32 %s153, 1
      %s155 = scalar_select %p152, %s153, %s154
      %p158 = pneg %p152
      %p159 = scmp.eq.s32.totalorder %s20, 3
      %p160 = por %p158, %p159
      %p161 = scmp.ne.s32.totalorder %s153, %s156
      %p162 = scmp.eq.s32.totalorder %s20, 0
      %p163 = por %p161, %p162
      %p164 = scmp.ne.s32.totalorder %s153, %s156
      %p165 = scmp.eq.s32.totalorder %s25, 3
      %p166 = por %p164, %p165
      %p167 = scmp.ne.s32.totalorder %s156, %s157
      %p168 = scmp.eq.s32.totalorder %s25, 0
      %p169 = por %p167, %p168
      %p170 = scmp.ne.s32.totalorder %s156, %s157
      %p171 = scmp.eq.s32.totalorder %s26, 3
      %p172 = por %p170, %p171
      %p174 = scmp.ne.s32.totalorder %s157, %s173
      %p175 = scmp.eq.s32.totalorder %s26, 0
      %p176 = por %p174, %p175
      %p177 = scmp.le.s32.totalorder 1, %s20
      %p178 = scmp.lt.s32.totalorder %s20, 5
      %p179 = pnand %p177, %p178
      %p180 = pneg %p179
      // Predicated region
      $region9: #{tpu_custom_call.1} parent=5 // pred_check
        _
      $region10: #{tpu_custom_call.1} parent=5 // pred_check_branch
        %182 = sbr.rel (%p179) target = $region12
      $region11: #{tpu_custom_call.1} parent=5 // pred_region
        %s183 = ssub.s32 %s20, 1
        // Predicated region
        $region13: #{tpu_custom_call.1} parent=11 // pred_check
          %p184 = pneg %p53
        $region14: #{tpu_custom_call.1} parent=11 // pred_check_branch
          %186 = sbr.rel (%p184) target = $region16
        $region15: #{tpu_custom_call.1} parent=11 // pred_region
          %s188 = ssub.s32 2048, 2048
          %189 = vsyncadd [#allocation3], %s188
          %s191 = sshll.u32 [#allocation2], 4
          %s192 = int_to_ptr.vmem [resolvable:$true] %s191
          %194 = dma.hbm_to_vmem [thread:$0]  %s0, 2048, %s192, [#allocation3]
        $region16: #{tpu_custom_call.1} parent=11 // pred_fallthru
          _
      $region12: #{tpu_custom_call.1} parent=5 // pred_fallthru
        _
      %p195 = scmp.lt.s32.totalorder %s20, 4
      // Predicated region
      $region17: #{tpu_custom_call.1} parent=5 // pred_check
        %p196 = pneg %p195
      $region18: #{tpu_custom_call.1} parent=5 // pred_check_branch
        %198 = sbr.rel (%p196) target = $region20
      $region19: #{tpu_custom_call.1} parent=5 // pred_region
        // Predicated region
        $region21: #{tpu_custom_call.1} parent=19 // pred_check
          %p199 = pneg %p77
        $region22: #{tpu_custom_call.1} parent=19 // pred_check_branch
          %201 = sbr.rel (%p199) target = $region24
        $region23: #{tpu_custom_call.1} parent=19 // pred_region
          %s202 = sand.u32 %s20, 1
          %s203 = scalar_lea.sflag [#allocation6], %s202
          %s204 = sand.u32 %s67, 1
          %s205 = smul.addr %s204, 8192
          %s206 = scalar_lea.vmem [#allocation5], %s205
          %s207 = smul.u32 %s27, 2
          %s208 = sadd.s32 %s207, %s28
          %s209 = smul.u32 4, %s208
          %s211 = ssub.s32 131072, 131072
          %212 = vsyncadd %s203, %s211
          %s213 = smul.addr %s209, 128
          %s214 = scalar_lea.hbm %s1, %s213
          %s215 = sshll.u32 %s206, 4
          %s216 = int_to_ptr.vmem [resolvable:$true] %s215
          %221 = dma.hbm_to_vmem [thread:$0]  %s214, 131072, %s216, %s203, 2048, 512, 32
        $region24: #{tpu_custom_call.1} parent=19 // pred_fallthru
          _
        // Predicated region
        $region25: #{tpu_custom_call.1} parent=19 // pred_check
          %p222 = pneg %p107
        $region26: #{tpu_custom_call.1} parent=19 // pred_check_branch
          %224 = sbr.rel (%p222) target = $region28
        $region27: #{tpu_custom_call.1} parent=19 // pred_region
          %s225 = sand.u32 %s20, 1
          %s226 = scalar_lea.sflag [#allocation6], %s225
          %s227 = sand.u32 %s97, 1
          %s228 = smul.addr %s227, 4
          %s229 = scalar_lea.vmem [#allocation7], %s228
          %s230 = smul.u32 %s27, 2
          %s231 = sadd.s32 %s230, %s28
          %s232 = smul.u32 4, %s231
          %s234 = ssub.s32 64, 64
          %235 = vsyncadd %s226, %s234
          %s236 = smul.addr %s232, 16
          %s237 = scalar_lea.hbm %s2, %s236
          %s239 = sshll.u32 %s229, 4
          %s240 = int_to_ptr.vmem [resolvable:$true] %s239
          %242 = dma.hbm_to_vmem [thread:$0]  %s237, 64, %s240, %s226
        $region28: #{tpu_custom_call.1} parent=19 // pred_fallthru
          _
        // Predicated region
        $region29: #{tpu_custom_call.1} parent=19 // pred_check
          %p243 = pneg %p137
        $region30: #{tpu_custom_call.1} parent=19 // pred_check_branch
          %245 = sbr.rel (%p243) target = $region32
        $region31: #{tpu_custom_call.1} parent=19 // pred_region
          %s246 = sand.u32 %s127, 1
          %s247 = scalar_lea.sflag [#allocation9], %s246
          %s248 = sand.u32 %s127, 1
          %s249 = smul.addr %s248, 1024
          %s250 = scalar_lea.vmem [#allocation8], %s249
          %s251 = smul.u32 %s27, 2
          %s252 = sadd.s32 %s251, %s28
          %s253 = smul.u32 64, %s252
          %s255 = ssub.s32 16384, 16384
          %256 = vsyncadd %s247, %s255
          %s257 = smul.addr %s253, 2
          %s258 = smul.addr %s257, 128
          %s259 = scalar_lea.hbm %s3, %s258
          %s260 = sshll.u32 %s250, 4
          %s261 = int_to_ptr.vmem [resolvable:$true] %s260
          %266 = dma.hbm_to_vmem [thread:$0]  %s259, 16384, %s261, %s247, 256, 256, 16
        $region32: #{tpu_custom_call.1} parent=19 // pred_fallthru
          _
      $region20: #{tpu_custom_call.1} parent=5 // pred_fallthru
        _
      %p267 = scmp.le.s32.totalorder 1, %s20
      %p268 = scmp.lt.s32.totalorder %s20, 5
      %p269 = pnand %p267, %p268
      %p270 = pneg %p269
      // Predicated region
      $region33: #{tpu_custom_call.1} parent=5 // pred_check
        _
      $region34: #{tpu_custom_call.1} parent=5 // pred_check_branch
        %272 = sbr.rel (%p269) target = $region36
      $region35: #{tpu_custom_call.1} parent=5 // pred_region
        %s273 = ssub.s32 %s20, 1
        // Predicated region
        $region37: #{tpu_custom_call.1} parent=35 // pred_check
          %p274 = pneg %p53
        $region38: #{tpu_custom_call.1} parent=35 // pred_check_branch
          %276 = sbr.rel (%p274) target = $region40
        $region39: #{tpu_custom_call.1} parent=35 // pred_region
          %277 = dma.done [#allocation3], 2048
        $region40: #{tpu_custom_call.1} parent=35 // pred_fallthru
          _
        %s278 = sand.u32 %s25, 1
        %s279 = scalar_lea.sflag [#allocation6], %s278
        %s280 = sand.u32 %s70, 1
        %s281 = smul.addr %s280, 8192
        %s282 = scalar_lea.vmem [#allocation5], %s281
        // Predicated region
        $region41: #{tpu_custom_call.1} parent=35 // pred_check
          %p283 = pneg %p83
        $region42: #{tpu_custom_call.1} parent=35 // pred_check_branch
          %285 = sbr.rel (%p283) target = $region44
        $region43: #{tpu_custom_call.1} parent=35 // pred_region
          %286 = dma.done %s279, 131072
        $region44: #{tpu_custom_call.1} parent=35 // pred_fallthru
          _
        %s287 = sand.u32 %s25, 1
        %s288 = scalar_lea.sflag [#allocation6], %s287
        %s289 = sand.u32 %s100, 1
        %s290 = smul.addr %s289, 4
        %s291 = scalar_lea.vmem [#allocation7], %s290
        // Predicated region
        $region45: #{tpu_custom_call.1} parent=35 // pred_check
          %p292 = pneg %p113
        $region46: #{tpu_custom_call.1} parent=35 // pred_check_branch
          %294 = sbr.rel (%p292) target = $region48
        $region47: #{tpu_custom_call.1} parent=35 // pred_region
          %295 = dma.done %s288, 64
        $region48: #{tpu_custom_call.1} parent=35 // pred_fallthru
          _
        %s296 = sand.u32 %s130, 1
        %s297 = scalar_lea.sflag [#allocation9], %s296
        %s298 = sand.u32 %s130, 1
        %s299 = smul.addr %s298, 1024
        %s300 = scalar_lea.vmem [#allocation8], %s299
        // Predicated region
        $region49: #{tpu_custom_call.1} parent=35 // pred_check
          %p301 = pneg %p143
        $region50: #{tpu_custom_call.1} parent=35 // pred_check_branch
          %303 = sbr.rel (%p301) target = $region52
        $region51: #{tpu_custom_call.1} parent=35 // pred_region
          %304 = dma.done %s297, 16384
        $region52: #{tpu_custom_call.1} parent=35 // pred_fallthru
          _
        %p305 = pneg %p53
        %p306 = pneg %p50
        %s307 = sand.u32 %s25, 1
        %s308 = scalar_lea.sflag [#allocation6], %s307
        %s309 = sand.u32 %s70, 1
        %s310 = smul.addr %s309, 8192
        %s311 = scalar_lea.vmem [#allocation5], %s310
        %p312 = pneg %p83
        %p313 = pneg %p80
        %s314 = sand.u32 %s25, 1
        %s315 = scalar_lea.sflag [#allocation6], %s314
        %s316 = sand.u32 %s100, 1
        %s317 = smul.addr %s316, 4
        %s318 = scalar_lea.vmem [#allocation7], %s317
        %p319 = pneg %p113
        %p320 = pneg %p110
        %s321 = sand.u32 %s130, 1
        %s322 = scalar_lea.sflag [#allocation9], %s321
        %s323 = sand.u32 %s130, 1
        %s324 = smul.addr %s323, 1024
        %s325 = scalar_lea.vmem [#allocation8], %s324
        %p326 = pneg %p143
        %p327 = pneg %p140
        %p328 = pneg %p169
        %p329 = pneg %p166
        %s330 = sand.u32 %s156, 1
        %s331 = scalar_lea.sflag [#allocation4], %s330
        %s332 = sand.u32 %s156, 1
        %s333 = smul.addr %s332, 16
        %s334 = scalar_lea.vmem [#allocation10], %s333
        %s335 = smul.u32 %s29, 2
        %s336 = sadd.s32 %s335, %s30
        %s337 = smul.u32 4, %s336
        %s338 = smul.u32 %s29, 2
        %s339 = sadd.s32 %s338, %s30
        %s340 = smul.u32 4, %s339
        %s341 = smul.u32 %s29, 2
        %s342 = sadd.s32 %s341, %s30
        %s343 = smul.u32 64, %s342
        %p344 = scmp.eq.s32.totalorder %s30, 0
        // Predicated region
        $region53: #{tpu_custom_call.1} parent=35 // pred_check
          %p345 = pneg %p344
        $region54: #{tpu_custom_call.1} parent=35 // pred_check_branch
          %347 = sbr.rel (%p345) target = $region56
        $region55: #{tpu_custom_call.1} parent=35 // pred_region
          %348 = vst [vmem:[%s334] sm:$0xff] 0.0
          %349 = vst [vmem:[%s334 + $0x8] sm:$0xff] 0.0
        $region56: #{tpu_custom_call.1} parent=35 // pred_fallthru
          _
        %v350 = vld [vmem:[#allocation2] sm:$0xff]
        %v351 = vld [vmem:[#allocation2 + $0x8] sm:$0xff]
        %v352 = vld [vmem:[#allocation2 + $0x10] sm:$0xff]
        %v353 = vld [vmem:[#allocation2 + $0x18] sm:$0xff]
        %v354 = vld [vmem:[#allocation2 + $0x20] sm:$0xff]
        %v355 = vld [vmem:[#allocation2 + $0x28] sm:$0xff]
        %v356 = vld [vmem:[#allocation2 + $0x30] sm:$0xff]
        %v357 = vld [vmem:[#allocation2 + $0x38] sm:$0xff]
        %v358 = vld [vmem:[#allocation2 + $0x40] sm:$0xff]
        %v359 = vld [vmem:[#allocation2 + $0x48] sm:$0xff]
        %v360 = vld [vmem:[#allocation2 + $0x50] sm:$0xff]
        %v361 = vld [vmem:[#allocation2 + $0x58] sm:$0xff]
        %v362 = vld [vmem:[#allocation2 + $0x60] sm:$0xff]
        %v363 = vld [vmem:[#allocation2 + $0x68] sm:$0xff]
        %v364 = vld [vmem:[#allocation2 + $0x70] sm:$0xff]
        %v365 = vld [vmem:[#allocation2 + $0x78] sm:$0xff]
        %v366 = vld [vmem:[%s282] sm:$0xff]
        %v367 = vld [vmem:[%s282 + $0x8] sm:$0xff]
        %v368 = vld [vmem:[%s282 + $0x10] sm:$0xff]
        %v369 = vld [vmem:[%s282 + $0x18] sm:$0xff]
        %v370 = vld [vmem:[%s282 + $0x20] sm:$0xff]
        %v371 = vld [vmem:[%s282 + $0x28] sm:$0xff]
        %v372 = vld [vmem:[%s282 + $0x30] sm:$0xff]
        %v373 = vld [vmem:[%s282 + $0x38] sm:$0xff]
        %v374 = vld [vmem:[%s282 + $0x40] sm:$0xff]
        %v375 = vld [vmem:[%s282 + $0x48] sm:$0xff]
        %v376 = vld [vmem:[%s282 + $0x50] sm:$0xff]
        %v377 = vld [vmem:[%s282 + $0x58] sm:$0xff]
        %v378 = vld [vmem:[%s282 + $0x60] sm:$0xff]
        %v379 = vld [vmem:[%s282 + $0x68] sm:$0xff]
        %v380 = vld [vmem:[%s282 + $0x70] sm:$0xff]
        %v381 = vld [vmem:[%s282 + $0x78] sm:$0xff]
        %v382 = vld [vmem:[%s282 + $0x80] sm:$0xff]
        %v383 = vld [vmem:[%s282 + $0x88] sm:$0xff]
        %v384 = vld [vmem:[%s282 + $0x90] sm:$0xff]
        %v385 = vld [vmem:[%s282 + $0x98] sm:$0xff]
        %v386 = vld [vmem:[%s282 + $0xa0] sm:$0xff]
        %v387 = vld [vmem:[%s282 + $0xa8] sm:$0xff]
        %v388 = vld [vmem:[%s282 + $0xb0] sm:$0xff]
        %v389 = vld [vmem:[%s282 + $0xb8] sm:$0xff]
        %v390 = vld [vmem:[%s282 + $0xc0] sm:$0xff]
        %v391 = vld [vmem:[%s282 + $0xc8] sm:$0xff]
        %v392 = vld [vmem:[%s282 + $0xd0] sm:$0xff]
        %v393 = vld [vmem:[%s282 + $0xd8] sm:$0xff]
        %v394 = vld [vmem:[%s282 + $0xe0] sm:$0xff]
        %v395 = vld [vmem:[%s282 + $0xe8] sm:$0xff]
        %v396 = vld [vmem:[%s282 + $0xf0] sm:$0xff]
        %v397 = vld [vmem:[%s282 + $0xf8] sm:$0xff]
        %v398 = vld [vmem:[%s282 + $0x100] sm:$0xff]
        %v399 = vld [vmem:[%s282 + $0x108] sm:$0xff]
        %v400 = vld [vmem:[%s282 + $0x110] sm:$0xff]
        %v401 = vld [vmem:[%s282 + $0x118] sm:$0xff]
        %v402 = vld [vmem:[%s282 + $0x120] sm:$0xff]
        %v403 = vld [vmem:[%s282 + $0x128] sm:$0xff]
        %v404 = vld [vmem:[%s282 + $0x130] sm:$0xff]
        %v405 = vld [vmem:[%s282 + $0x138] sm:$0xff]
        %v406 = vld [vmem:[%s282 + $0x140] sm:$0xff]
        %v407 = vld [vmem:[%s282 + $0x148] sm:$0xff]
        %v408 = vld [vmem:[%s282 + $0x150] sm:$0xff]
        %v409 = vld [vmem:[%s282 + $0x158] sm:$0xff]
        %v410 = vld [vmem:[%s282 + $0x160] sm:$0xff]
        %v411 = vld [vmem:[%s282 + $0x168] sm:$0xff]
        %v412 = vld [vmem:[%s282 + $0x170] sm:$0xff]
        %v413 = vld [vmem:[%s282 + $0x178] sm:$0xff]
        %v414 = vld [vmem:[%s282 + $0x180] sm:$0xff]
        %v415 = vld [vmem:[%s282 + $0x188] sm:$0xff]
        %v416 = vld [vmem:[%s282 + $0x190] sm:$0xff]
        %v417 = vld [vmem:[%s282 + $0x198] sm:$0xff]
        %v418 = vld [vmem:[%s282 + $0x1a0] sm:$0xff]
        %v419 = vld [vmem:[%s282 + $0x1a8] sm:$0xff]
        %v420 = vld [vmem:[%s282 + $0x1b0] sm:$0xff]
        %v421 = vld [vmem:[%s282 + $0x1b8] sm:$0xff]
        %v422 = vld [vmem:[%s282 + $0x1c0] sm:$0xff]
        %v423 = vld [vmem:[%s282 + $0x1c8] sm:$0xff]
        %v424 = vld [vmem:[%s282 + $0x1d0] sm:$0xff]
        %v425 = vld [vmem:[%s282 + $0x1d8] sm:$0xff]
        %v426 = vld [vmem:[%s282 + $0x1e0] sm:$0xff]
        %v427 = vld [vmem:[%s282 + $0x1e8] sm:$0xff]
        %v428 = vld [vmem:[%s282 + $0x1f0] sm:$0xff]
        %v429 = vld [vmem:[%s282 + $0x1f8] sm:$0xff]
        %v430 = vld [vmem:[%s282 + $0x200] sm:$0xff]
        %v431 = vld [vmem:[%s282 + $0x208] sm:$0xff]
        %v432 = vld [vmem:[%s282 + $0x210] sm:$0xff]
        %v433 = vld [vmem:[%s282 + $0x218] sm:$0xff]
        %v434 = vld [vmem:[%s282 + $0x220] sm:$0xff]
        %v435 = vld [vmem:[%s282 + $0x228] sm:$0xff]
        %v436 = vld [vmem:[%s282 + $0x230] sm:$0xff]
        %v437 = vld [vmem:[%s282 + $0x238] sm:$0xff]
        %v438 = vld [vmem:[%s282 + $0x240] sm:$0xff]
        %v439 = vld [vmem:[%s282 + $0x248] sm:$0xff]
        %v440 = vld [vmem:[%s282 + $0x250] sm:$0xff]
        %v441 = vld [vmem:[%s282 + $0x258] sm:$0xff]
        %v442 = vld [vmem:[%s282 + $0x260] sm:$0xff]
        %v443 = vld [vmem:[%s282 + $0x268] sm:$0xff]
        %v444 = vld [vmem:[%s282 + $0x270] sm:$0xff]
        %v445 = vld [vmem:[%s282 + $0x278] sm:$0xff]
        %v446 = vld [vmem:[%s282 + $0x280] sm:$0xff]
        %v447 = vld [vmem:[%s282 + $0x288] sm:$0xff]
        %v448 = vld [vmem:[%s282 + $0x290] sm:$0xff]
        %v449 = vld [vmem:[%s282 + $0x298] sm:$0xff]
        %v450 = vld [vmem:[%s282 + $0x2a0] sm:$0xff]
        %v451 = vld [vmem:[%s282 + $0x2a8] sm:$0xff]
        %v452 = vld [vmem:[%s282 + $0x2b0] sm:$0xff]
        %v453 = vld [vmem:[%s282 + $0x2b8] sm:$0xff]
        %v454 = vld [vmem:[%s282 + $0x2c0] sm:$0xff]
        %v455 = vld [vmem:[%s282 + $0x2c8] sm:$0xff]
        %v456 = vld [vmem:[%s282 + $0x2d0] sm:$0xff]
        %v457 = vld [vmem:[%s282 + $0x2d8] sm:$0xff]
        %v458 = vld [vmem:[%s282 + $0x2e0] sm:$0xff]
        %v459 = vld [vmem:[%s282 + $0x2e8] sm:$0xff]
        %v460 = vld [vmem:[%s282 + $0x2f0] sm:$0xff]
        %v461 = vld [vmem:[%s282 + $0x2f8] sm:$0xff]
        %v462 = vld [vmem:[%s282 + $0x300] sm:$0xff]
        %v463 = vld [vmem:[%s282 + $0x308] sm:$0xff]
        %v464 = vld [vmem:[%s282 + $0x310] sm:$0xff]
        %v465 = vld [vmem:[%s282 + $0x318] sm:$0xff]
        %v466 = vld [vmem:[%s282 + $0x320] sm:$0xff]
        %v467 = vld [vmem:[%s282 + $0x328] sm:$0xff]
        %v468 = vld [vmem:[%s282 + $0x330] sm:$0xff]
        %v469 = vld [vmem:[%s282 + $0x338] sm:$0xff]
        %v470 = vld [vmem:[%s282 + $0x340] sm:$0xff]
        %v471 = vld [vmem:[%s282 + $0x348] sm:$0xff]
        %v472 = vld [vmem:[%s282 + $0x350] sm:$0xff]
        %v473 = vld [vmem:[%s282 + $0x358] sm:$0xff]
        %v474 = vld [vmem:[%s282 + $0x360] sm:$0xff]
        %v475 = vld [vmem:[%s282 + $0x368] sm:$0xff]
        %v476 = vld [vmem:[%s282 + $0x370] sm:$0xff]
        %v477 = vld [vmem:[%s282 + $0x378] sm:$0xff]
        %v478 = vld [vmem:[%s282 + $0x380] sm:$0xff]
        %v479 = vld [vmem:[%s282 + $0x388] sm:$0xff]
        %v480 = vld [vmem:[%s282 + $0x390] sm:$0xff]
        %v481 = vld [vmem:[%s282 + $0x398] sm:$0xff]
        %v482 = vld [vmem:[%s282 + $0x3a0] sm:$0xff]
        %v483 = vld [vmem:[%s282 + $0x3a8] sm:$0xff]
        %v484 = vld [vmem:[%s282 + $0x3b0] sm:$0xff]
        %v485 = vld [vmem:[%s282 + $0x3b8] sm:$0xff]
        %v486 = vld [vmem:[%s282 + $0x3c0] sm:$0xff]
        %v487 = vld [vmem:[%s282 + $0x3c8] sm:$0xff]
        %v488 = vld [vmem:[%s282 + $0x3d0] sm:$0xff]
        %v489 = vld [vmem:[%s282 + $0x3d8] sm:$0xff]
        %v490 = vld [vmem:[%s282 + $0x3e0] sm:$0xff]
        %v491 = vld [vmem:[%s282 + $0x3e8] sm:$0xff]
        %v492 = vld [vmem:[%s282 + $0x3f0] sm:$0xff]
        %v493 = vld [vmem:[%s282 + $0x3f8] sm:$0xff]
        %v494 = vld [vmem:[%s282 + $0x400] sm:$0xff]
        %v495 = vld [vmem:[%s282 + $0x408] sm:$0xff]
        %v496 = vld [vmem:[%s282 + $0x410] sm:$0xff]
        %v497 = vld [vmem:[%s282 + $0x418] sm:$0xff]
        %v498 = vld [vmem:[%s282 + $0x420] sm:$0xff]
        %v499 = vld [vmem:[%s282 + $0x428] sm:$0xff]
        %v500 = vld [vmem:[%s282 + $0x430] sm:$0xff]
        %v501 = vld [vmem:[%s282 + $0x438] sm:$0xff]
        %v502 = vld [vmem:[%s282 + $0x440] sm:$0xff]
        %v503 = vld [vmem:[%s282 + $0x448] sm:$0xff]
        %v504 = vld [vmem:[%s282 + $0x450] sm:$0xff]
        %v505 = vld [vmem:[%s282 + $0x458] sm:$0xff]
        %v506 = vld [vmem:[%s282 + $0x460] sm:$0xff]
        %v507 = vld [vmem:[%s282 + $0x468] sm:$0xff]
        %v508 = vld [vmem:[%s282 + $0x470] sm:$0xff]
        %v509 = vld [vmem:[%s282 + $0x478] sm:$0xff]
        %v510 = vld [vmem:[%s282 + $0x480] sm:$0xff]
        %v511 = vld [vmem:[%s282 + $0x488] sm:$0xff]
        %v512 = vld [vmem:[%s282 + $0x490] sm:$0xff]
        %v513 = vld [vmem:[%s282 + $0x498] sm:$0xff]
        %v514 = vld [vmem:[%s282 + $0x4a0] sm:$0xff]
        %v515 = vld [vmem:[%s282 + $0x4a8] sm:$0xff]
        %v516 = vld [vmem:[%s282 + $0x4b0] sm:$0xff]
        %v517 = vld [vmem:[%s282 + $0x4b8] sm:$0xff]
        %v518 = vld [vmem:[%s282 + $0x4c0] sm:$0xff]
        %v519 = vld [vmem:[%s282 + $0x4c8] sm:$0xff]
        %v520 = vld [vmem:[%s282 + $0x4d0] sm:$0xff]
        %v521 = vld [vmem:[%s282 + $0x4d8] sm:$0xff]
        %v522 = vld [vmem:[%s282 + $0x4e0] sm:$0xff]
        %v523 = vld [vmem:[%s282 + $0x4e8] sm:$0xff]
        %v524 = vld [vmem:[%s282 + $0x4f0] sm:$0xff]
        %v525 = vld [vmem:[%s282 + $0x4f8] sm:$0xff]
        %v526 = vld [vmem:[%s282 + $0x500] sm:$0xff]
        %v527 = vld [vmem:[%s282 + $0x508] sm:$0xff]
        %v528 = vld [vmem:[%s282 + $0x510] sm:$0xff]
        %v529 = vld [vmem:[%s282 + $0x518] sm:$0xff]
        %v530 = vld [vmem:[%s282 + $0x520] sm:$0xff]
        %v531 = vld [vmem:[%s282 + $0x528] sm:$0xff]
        %v532 = vld [vmem:[%s282 + $0x530] sm:$0xff]
        %v533 = vld [vmem:[%s282 + $0x538] sm:$0xff]
        %v534 = vld [vmem:[%s282 + $0x540] sm:$0xff]
        %v535 = vld [vmem:[%s282 + $0x548] sm:$0xff]
        %v536 = vld [vmem:[%s282 + $0x550] sm:$0xff]
        %v537 = vld [vmem:[%s282 + $0x558] sm:$0xff]
        %v538 = vld [vmem:[%s282 + $0x560] sm:$0xff]
        %v539 = vld [vmem:[%s282 + $0x568] sm:$0xff]
        %v540 = vld [vmem:[%s282 + $0x570] sm:$0xff]
        %v541 = vld [vmem:[%s282 + $0x578] sm:$0xff]
        %v542 = vld [vmem:[%s282 + $0x580] sm:$0xff]
        %v543 = vld [vmem:[%s282 + $0x588] sm:$0xff]
        %v544 = vld [vmem:[%s282 + $0x590] sm:$0xff]
        %v545 = vld [vmem:[%s282 + $0x598] sm:$0xff]
        %v546 = vld [vmem:[%s282 + $0x5a0] sm:$0xff]
        %v547 = vld [vmem:[%s282 + $0x5a8] sm:$0xff]
        %v548 = vld [vmem:[%s282 + $0x5b0] sm:$0xff]
        %v549 = vld [vmem:[%s282 + $0x5b8] sm:$0xff]
        %v550 = vld [vmem:[%s282 + $0x5c0] sm:$0xff]
        %v551 = vld [vmem:[%s282 + $0x5c8] sm:$0xff]
        %v552 = vld [vmem:[%s282 + $0x5d0] sm:$0xff]
        %v553 = vld [vmem:[%s282 + $0x5d8] sm:$0xff]
        %v554 = vld [vmem:[%s282 + $0x5e0] sm:$0xff]
        %v555 = vld [vmem:[%s282 + $0x5e8] sm:$0xff]
        %v556 = vld [vmem:[%s282 + $0x5f0] sm:$0xff]
        %v557 = vld [vmem:[%s282 + $0x5f8] sm:$0xff]
        %v558 = vld [vmem:[%s282 + $0x600] sm:$0xff]
        %v559 = vld [vmem:[%s282 + $0x608] sm:$0xff]
        %v560 = vld [vmem:[%s282 + $0x610] sm:$0xff]
        %v561 = vld [vmem:[%s282 + $0x618] sm:$0xff]
        %v562 = vld [vmem:[%s282 + $0x620] sm:$0xff]
        %v563 = vld [vmem:[%s282 + $0x628] sm:$0xff]
        %v564 = vld [vmem:[%s282 + $0x630] sm:$0xff]
        %v565 = vld [vmem:[%s282 + $0x638] sm:$0xff]
        %v566 = vld [vmem:[%s282 + $0x640] sm:$0xff]
        %v567 = vld [vmem:[%s282 + $0x648] sm:$0xff]
        %v568 = vld [vmem:[%s282 + $0x650] sm:$0xff]
        %v569 = vld [vmem:[%s282 + $0x658] sm:$0xff]
        %v570 = vld [vmem:[%s282 + $0x660] sm:$0xff]
        %v571 = vld [vmem:[%s282 + $0x668] sm:$0xff]
        %v572 = vld [vmem:[%s282 + $0x670] sm:$0xff]
        %v573 = vld [vmem:[%s282 + $0x678] sm:$0xff]
        %v574 = vld [vmem:[%s282 + $0x680] sm:$0xff]
        %v575 = vld [vmem:[%s282 + $0x688] sm:$0xff]
        %v576 = vld [vmem:[%s282 + $0x690] sm:$0xff]
        %v577 = vld [vmem:[%s282 + $0x698] sm:$0xff]
        %v578 = vld [vmem:[%s282 + $0x6a0] sm:$0xff]
        %v579 = vld [vmem:[%s282 + $0x6a8] sm:$0xff]
        %v580 = vld [vmem:[%s282 + $0x6b0] sm:$0xff]
        %v581 = vld [vmem:[%s282 + $0x6b8] sm:$0xff]
        %v582 = vld [vmem:[%s282 + $0x6c0] sm:$0xff]
        %v583 = vld [vmem:[%s282 + $0x6c8] sm:$0xff]
        %v584 = vld [vmem:[%s282 + $0x6d0] sm:$0xff]
        %v585 = vld [vmem:[%s282 + $0x6d8] sm:$0xff]
        %v586 = vld [vmem:[%s282 + $0x6e0] sm:$0xff]
        %v587 = vld [vmem:[%s282 + $0x6e8] sm:$0xff]
        %v588 = vld [vmem:[%s282 + $0x6f0] sm:$0xff]
        %v589 = vld [vmem:[%s282 + $0x6f8] sm:$0xff]
        %v590 = vld [vmem:[%s282 + $0x700] sm:$0xff]
        %v591 = vld [vmem:[%s282 + $0x708] sm:$0xff]
        %v592 = vld [vmem:[%s282 + $0x710] sm:$0xff]
        %v593 = vld [vmem:[%s282 + $0x718] sm:$0xff]
        %v594 = vld [vmem:[%s282 + $0x720] sm:$0xff]
        %v595 = vld [vmem:[%s282 + $0x728] sm:$0xff]
        %v596 = vld [vmem:[%s282 + $0x730] sm:$0xff]
        %v597 = vld [vmem:[%s282 + $0x738] sm:$0xff]
        %v598 = vld [vmem:[%s282 + $0x740] sm:$0xff]
        %v599 = vld [vmem:[%s282 + $0x748] sm:$0xff]
        %v600 = vld [vmem:[%s282 + $0x750] sm:$0xff]
        %v601 = vld [vmem:[%s282 + $0x758] sm:$0xff]
        %v602 = vld [vmem:[%s282 + $0x760] sm:$0xff]
        %v603 = vld [vmem:[%s282 + $0x768] sm:$0xff]
        %v604 = vld [vmem:[%s282 + $0x770] sm:$0xff]
        %v605 = vld [vmem:[%s282 + $0x778] sm:$0xff]
        %v606 = vld [vmem:[%s282 + $0x780] sm:$0xff]
        %v607 = vld [vmem:[%s282 + $0x788] sm:$0xff]
        %v608 = vld [vmem:[%s282 + $0x790] sm:$0xff]
        %v609 = vld [vmem:[%s282 + $0x798] sm:$0xff]
        %v610 = vld [vmem:[%s282 + $0x7a0] sm:$0xff]
        %v611 = vld [vmem:[%s282 + $0x7a8] sm:$0xff]
        %v612 = vld [vmem:[%s282 + $0x7b0] sm:$0xff]
        %v613 = vld [vmem:[%s282 + $0x7b8] sm:$0xff]
        %v614 = vld [vmem:[%s282 + $0x7c0] sm:$0xff]
        %v615 = vld [vmem:[%s282 + $0x7c8] sm:$0xff]
        %v616 = vld [vmem:[%s282 + $0x7d0] sm:$0xff]
        %v617 = vld [vmem:[%s282 + $0x7d8] sm:$0xff]
        %v618 = vld [vmem:[%s282 + $0x7e0] sm:$0xff]
        %v619 = vld [vmem:[%s282 + $0x7e8] sm:$0xff]
        %v620 = vld [vmem:[%s282 + $0x7f0] sm:$0xff]
        %v621 = vld [vmem:[%s282 + $0x7f8] sm:$0xff]
        %v622 = vld [vmem:[%s282 + $0x800] sm:$0xff]
        %v623 = vld [vmem:[%s282 + $0x808] sm:$0xff]
        %v624 = vld [vmem:[%s282 + $0x810] sm:$0xff]
        %v625 = vld [vmem:[%s282 + $0x818] sm:$0xff]
        %v626 = vld [vmem:[%s282 + $0x820] sm:$0xff]
        %v627 = vld [vmem:[%s282 + $0x828] sm:$0xff]
        %v628 = vld [vmem:[%s282 + $0x830] sm:$0xff]
        %v629 = vld [vmem:[%s282 + $0x838] sm:$0xff]
        %v630 = vld [vmem:[%s282 + $0x840] sm:$0xff]
        %v631 = vld [vmem:[%s282 + $0x848] sm:$0xff]
        %v632 = vld [vmem:[%s282 + $0x850] sm:$0xff]
        %v633 = vld [vmem:[%s282 + $0x858] sm:$0xff]
        %v634 = vld [vmem:[%s282 + $0x860] sm:$0xff]
        %v635 = vld [vmem:[%s282 + $0x868] sm:$0xff]
        %v636 = vld [vmem:[%s282 + $0x870] sm:$0xff]
        %v637 = vld [vmem:[%s282 + $0x878] sm:$0xff]
        %v638 = vld [vmem:[%s282 + $0x880] sm:$0xff]
        %v639 = vld [vmem:[%s282 + $0x888] sm:$0xff]
        %v640 = vld [vmem:[%s282 + $0x890] sm:$0xff]
        %v641 = vld [vmem:[%s282 + $0x898] sm:$0xff]
        %v642 = vld [vmem:[%s282 + $0x8a0] sm:$0xff]
        %v643 = vld [vmem:[%s282 + $0x8a8] sm:$0xff]
        %v644 = vld [vmem:[%s282 + $0x8b0] sm:$0xff]
        %v645 = vld [vmem:[%s282 + $0x8b8] sm:$0xff]
        %v646 = vld [vmem:[%s282 + $0x8c0] sm:$0xff]
        %v647 = vld [vmem:[%s282 + $0x8c8] sm:$0xff]
        %v648 = vld [vmem:[%s282 + $0x8d0] sm:$0xff]
        %v649 = vld [vmem:[%s282 + $0x8d8] sm:$0xff]
        %v650 = vld [vmem:[%s282 + $0x8e0] sm:$0xff]
        %v651 = vld [vmem:[%s282 + $0x8e8] sm:$0xff]
        %v652 = vld [vmem:[%s282 + $0x8f0] sm:$0xff]
        %v653 = vld [vmem:[%s282 + $0x8f8] sm:$0xff]
        %v654 = vld [vmem:[%s282 + $0x900] sm:$0xff]
        %v655 = vld [vmem:[%s282 + $0x908] sm:$0xff]
        %v656 = vld [vmem:[%s282 + $0x910] sm:$0xff]
        %v657 = vld [vmem:[%s282 + $0x918] sm:$0xff]
        %v658 = vld [vmem:[%s282 + $0x920] sm:$0xff]
        %v659 = vld [vmem:[%s282 + $0x928] sm:$0xff]
        %v660 = vld [vmem:[%s282 + $0x930] sm:$0xff]
        %v661 = vld [vmem:[%s282 + $0x938] sm:$0xff]
        %v662 = vld [vmem:[%s282 + $0x940] sm:$0xff]
        %v663 = vld [vmem:[%s282 + $0x948] sm:$0xff]
        %v664 = vld [vmem:[%s282 + $0x950] sm:$0xff]
        %v665 = vld [vmem:[%s282 + $0x958] sm:$0xff]
        %v666 = vld [vmem:[%s282 + $0x960] sm:$0xff]
        %v667 = vld [vmem:[%s282 + $0x968] sm:$0xff]
        %v668 = vld [vmem:[%s282 + $0x970] sm:$0xff]
        %v669 = vld [vmem:[%s282 + $0x978] sm:$0xff]
        %v670 = vld [vmem:[%s282 + $0x980] sm:$0xff]
        %v671 = vld [vmem:[%s282 + $0x988] sm:$0xff]
        %v672 = vld [vmem:[%s282 + $0x990] sm:$0xff]
        %v673 = vld [vmem:[%s282 + $0x998] sm:$0xff]
        %v674 = vld [vmem:[%s282 + $0x9a0] sm:$0xff]
        %v675 = vld [vmem:[%s282 + $0x9a8] sm:$0xff]
        %v676 = vld [vmem:[%s282 + $0x9b0] sm:$0xff]
        %v677 = vld [vmem:[%s282 + $0x9b8] sm:$0xff]
        %v678 = vld [vmem:[%s282 + $0x9c0] sm:$0xff]
        %v679 = vld [vmem:[%s282 + $0x9c8] sm:$0xff]
        %v680 = vld [vmem:[%s282 + $0x9d0] sm:$0xff]
        %v681 = vld [vmem:[%s282 + $0x9d8] sm:$0xff]
        %v682 = vld [vmem:[%s282 + $0x9e0] sm:$0xff]
        %v683 = vld [vmem:[%s282 + $0x9e8] sm:$0xff]
        %v684 = vld [vmem:[%s282 + $0x9f0] sm:$0xff]
        %v685 = vld [vmem:[%s282 + $0x9f8] sm:$0xff]
        %v686 = vld [vmem:[%s282 + $0xa00] sm:$0xff]
        %v687 = vld [vmem:[%s282 + $0xa08] sm:$0xff]
        %v688 = vld [vmem:[%s282 + $0xa10] sm:$0xff]
        %v689 = vld [vmem:[%s282 + $0xa18] sm:$0xff]
        %v690 = vld [vmem:[%s282 + $0xa20] sm:$0xff]
        %v691 = vld [vmem:[%s282 + $0xa28] sm:$0xff]
        %v692 = vld [vmem:[%s282 + $0xa30] sm:$0xff]
        %v693 = vld [vmem:[%s282 + $0xa38] sm:$0xff]
        %v694 = vld [vmem:[%s282 + $0xa40] sm:$0xff]
        %v695 = vld [vmem:[%s282 + $0xa48] sm:$0xff]
        %v696 = vld [vmem:[%s282 + $0xa50] sm:$0xff]
        %v697 = vld [vmem:[%s282 + $0xa58] sm:$0xff]
        %v698 = vld [vmem:[%s282 + $0xa60] sm:$0xff]
        %v699 = vld [vmem:[%s282 + $0xa68] sm:$0xff]
        %v700 = vld [vmem:[%s282 + $0xa70] sm:$0xff]
        %v701 = vld [vmem:[%s282 + $0xa78] sm:$0xff]
        %v702 = vld [vmem:[%s282 + $0xa80] sm:$0xff]
        %v703 = vld [vmem:[%s282 + $0xa88] sm:$0xff]
        %v704 = vld [vmem:[%s282 + $0xa90] sm:$0xff]
        %v705 = vld [vmem:[%s282 + $0xa98] sm:$0xff]
        %v706 = vld [vmem:[%s282 + $0xaa0] sm:$0xff]
        %v707 = vld [vmem:[%s282 + $0xaa8] sm:$0xff]
        %v708 = vld [vmem:[%s282 + $0xab0] sm:$0xff]
        %v709 = vld [vmem:[%s282 + $0xab8] sm:$0xff]
        %v710 = vld [vmem:[%s282 + $0xac0] sm:$0xff]
        %v711 = vld [vmem:[%s282 + $0xac8] sm:$0xff]
        %v712 = vld [vmem:[%s282 + $0xad0] sm:$0xff]
        %v713 = vld [vmem:[%s282 + $0xad8] sm:$0xff]
        %v714 = vld [vmem:[%s282 + $0xae0] sm:$0xff]
        %v715 = vld [vmem:[%s282 + $0xae8] sm:$0xff]
        %v716 = vld [vmem:[%s282 + $0xaf0] sm:$0xff]
        %v717 = vld [vmem:[%s282 + $0xaf8] sm:$0xff]
        %v718 = vld [vmem:[%s282 + $0xb00] sm:$0xff]
        %v719 = vld [vmem:[%s282 + $0xb08] sm:$0xff]
        %v720 = vld [vmem:[%s282 + $0xb10] sm:$0xff]
        %v721 = vld [vmem:[%s282 + $0xb18] sm:$0xff]
        %v722 = vld [vmem:[%s282 + $0xb20] sm:$0xff]
        %v723 = vld [vmem:[%s282 + $0xb28] sm:$0xff]
        %v724 = vld [vmem:[%s282 + $0xb30] sm:$0xff]
        %v725 = vld [vmem:[%s282 + $0xb38] sm:$0xff]
        %v726 = vld [vmem:[%s282 + $0xb40] sm:$0xff]
        %v727 = vld [vmem:[%s282 + $0xb48] sm:$0xff]
        %v728 = vld [vmem:[%s282 + $0xb50] sm:$0xff]
        %v729 = vld [vmem:[%s282 + $0xb58] sm:$0xff]
        %v730 = vld [vmem:[%s282 + $0xb60] sm:$0xff]
        %v731 = vld [vmem:[%s282 + $0xb68] sm:$0xff]
        %v732 = vld [vmem:[%s282 + $0xb70] sm:$0xff]
        %v733 = vld [vmem:[%s282 + $0xb78] sm:$0xff]
        %v734 = vld [vmem:[%s282 + $0xb80] sm:$0xff]
        %v735 = vld [vmem:[%s282 + $0xb88] sm:$0xff]
        %v736 = vld [vmem:[%s282 + $0xb90] sm:$0xff]
        %v737 = vld [vmem:[%s282 + $0xb98] sm:$0xff]
        %v738 = vld [vmem:[%s282 + $0xba0] sm:$0xff]
        %v739 = vld [vmem:[%s282 + $0xba8] sm:$0xff]
        %v740 = vld [vmem:[%s282 + $0xbb0] sm:$0xff]
        %v741 = vld [vmem:[%s282 + $0xbb8] sm:$0xff]
        %v742 = vld [vmem:[%s282 + $0xbc0] sm:$0xff]
        %v743 = vld [vmem:[%s282 + $0xbc8] sm:$0xff]
        %v744 = vld [vmem:[%s282 + $0xbd0] sm:$0xff]
        %v745 = vld [vmem:[%s282 + $0xbd8] sm:$0xff]
        %v746 = vld [vmem:[%s282 + $0xbe0] sm:$0xff]
        %v747 = vld [vmem:[%s282 + $0xbe8] sm:$0xff]
        %v748 = vld [vmem:[%s282 + $0xbf0] sm:$0xff]
        %v749 = vld [vmem:[%s282 + $0xbf8] sm:$0xff]
        %v750 = vld [vmem:[%s282 + $0xc00] sm:$0xff]
        %v751 = vld [vmem:[%s282 + $0xc08] sm:$0xff]
        %v752 = vld [vmem:[%s282 + $0xc10] sm:$0xff]
        %v753 = vld [vmem:[%s282 + $0xc18] sm:$0xff]
        %v754 = vld [vmem:[%s282 + $0xc20] sm:$0xff]
        %v755 = vld [vmem:[%s282 + $0xc28] sm:$0xff]
        %v756 = vld [vmem:[%s282 + $0xc30] sm:$0xff]
        %v757 = vld [vmem:[%s282 + $0xc38] sm:$0xff]
        %v758 = vld [vmem:[%s282 + $0xc40] sm:$0xff]
        %v759 = vld [vmem:[%s282 + $0xc48] sm:$0xff]
        %v760 = vld [vmem:[%s282 + $0xc50] sm:$0xff]
        %v761 = vld [vmem:[%s282 + $0xc58] sm:$0xff]
        %v762 = vld [vmem:[%s282 + $0xc60] sm:$0xff]
        %v763 = vld [vmem:[%s282 + $0xc68] sm:$0xff]
        %v764 = vld [vmem:[%s282 + $0xc70] sm:$0xff]
        %v765 = vld [vmem:[%s282 + $0xc78] sm:$0xff]
        %v766 = vld [vmem:[%s282 + $0xc80] sm:$0xff]
        %v767 = vld [vmem:[%s282 + $0xc88] sm:$0xff]
        %v768 = vld [vmem:[%s282 + $0xc90] sm:$0xff]
        %v769 = vld [vmem:[%s282 + $0xc98] sm:$0xff]
        %v770 = vld [vmem:[%s282 + $0xca0] sm:$0xff]
        %v771 = vld [vmem:[%s282 + $0xca8] sm:$0xff]
        %v772 = vld [vmem:[%s282 + $0xcb0] sm:$0xff]
        %v773 = vld [vmem:[%s282 + $0xcb8] sm:$0xff]
        %v774 = vld [vmem:[%s282 + $0xcc0] sm:$0xff]
        %v775 = vld [vmem:[%s282 + $0xcc8] sm:$0xff]
        %v776 = vld [vmem:[%s282 + $0xcd0] sm:$0xff]
        %v777 = vld [vmem:[%s282 + $0xcd8] sm:$0xff]
        %v778 = vld [vmem:[%s282 + $0xce0] sm:$0xff]
        %v779 = vld [vmem:[%s282 + $0xce8] sm:$0xff]
        %v780 = vld [vmem:[%s282 + $0xcf0] sm:$0xff]
        %v781 = vld [vmem:[%s282 + $0xcf8] sm:$0xff]
        %v782 = vld [vmem:[%s282 + $0xd00] sm:$0xff]
        %v783 = vld [vmem:[%s282 + $0xd08] sm:$0xff]
        %v784 = vld [vmem:[%s282 + $0xd10] sm:$0xff]
        %v785 = vld [vmem:[%s282 + $0xd18] sm:$0xff]
        %v786 = vld [vmem:[%s282 + $0xd20] sm:$0xff]
        %v787 = vld [vmem:[%s282 + $0xd28] sm:$0xff]
        %v788 = vld [vmem:[%s282 + $0xd30] sm:$0xff]
        %v789 = vld [vmem:[%s282 + $0xd38] sm:$0xff]
        %v790 = vld [vmem:[%s282 + $0xd40] sm:$0xff]
        %v791 = vld [vmem:[%s282 + $0xd48] sm:$0xff]
        %v792 = vld [vmem:[%s282 + $0xd50] sm:$0xff]
        %v793 = vld [vmem:[%s282 + $0xd58] sm:$0xff]
        %v794 = vld [vmem:[%s282 + $0xd60] sm:$0xff]
        %v795 = vld [vmem:[%s282 + $0xd68] sm:$0xff]
        %v796 = vld [vmem:[%s282 + $0xd70] sm:$0xff]
        %v797 = vld [vmem:[%s282 + $0xd78] sm:$0xff]
        %v798 = vld [vmem:[%s282 + $0xd80] sm:$0xff]
        %v799 = vld [vmem:[%s282 + $0xd88] sm:$0xff]
        %v800 = vld [vmem:[%s282 + $0xd90] sm:$0xff]
        %v801 = vld [vmem:[%s282 + $0xd98] sm:$0xff]
        %v802 = vld [vmem:[%s282 + $0xda0] sm:$0xff]
        %v803 = vld [vmem:[%s282 + $0xda8] sm:$0xff]
        %v804 = vld [vmem:[%s282 + $0xdb0] sm:$0xff]
        %v805 = vld [vmem:[%s282 + $0xdb8] sm:$0xff]
        %v806 = vld [vmem:[%s282 + $0xdc0] sm:$0xff]
        %v807 = vld [vmem:[%s282 + $0xdc8] sm:$0xff]
        %v808 = vld [vmem:[%s282 + $0xdd0] sm:$0xff]
        %v809 = vld [vmem:[%s282 + $0xdd8] sm:$0xff]
        %v810 = vld [vmem:[%s282 + $0xde0] sm:$0xff]
        %v811 = vld [vmem:[%s282 + $0xde8] sm:$0xff]
        %v812 = vld [vmem:[%s282 + $0xdf0] sm:$0xff]
        %v813 = vld [vmem:[%s282 + $0xdf8] sm:$0xff]
        %v814 = vld [vmem:[%s282 + $0xe00] sm:$0xff]
        %v815 = vld [vmem:[%s282 + $0xe08] sm:$0xff]
        %v816 = vld [vmem:[%s282 + $0xe10] sm:$0xff]
        %v817 = vld [vmem:[%s282 + $0xe18] sm:$0xff]
        %v818 = vld [vmem:[%s282 + $0xe20] sm:$0xff]
        %v819 = vld [vmem:[%s282 + $0xe28] sm:$0xff]
        %v820 = vld [vmem:[%s282 + $0xe30] sm:$0xff]
        %v821 = vld [vmem:[%s282 + $0xe38] sm:$0xff]
        %v822 = vld [vmem:[%s282 + $0xe40] sm:$0xff]
        %v823 = vld [vmem:[%s282 + $0xe48] sm:$0xff]
        %v824 = vld [vmem:[%s282 + $0xe50] sm:$0xff]
        %v825 = vld [vmem:[%s282 + $0xe58] sm:$0xff]
        %v826 = vld [vmem:[%s282 + $0xe60] sm:$0xff]
        %v827 = vld [vmem:[%s282 + $0xe68] sm:$0xff]
        %v828 = vld [vmem:[%s282 + $0xe70] sm:$0xff]
        %v829 = vld [vmem:[%s282 + $0xe78] sm:$0xff]
        %v830 = vld [vmem:[%s282 + $0xe80] sm:$0xff]
        %v831 = vld [vmem:[%s282 + $0xe88] sm:$0xff]
        %v832 = vld [vmem:[%s282 + $0xe90] sm:$0xff]
        %v833 = vld [vmem:[%s282 + $0xe98] sm:$0xff]
        %v834 = vld [vmem:[%s282 + $0xea0] sm:$0xff]
        %v835 = vld [vmem:[%s282 + $0xea8] sm:$0xff]
        %v836 = vld [vmem:[%s282 + $0xeb0] sm:$0xff]
        %v837 = vld [vmem:[%s282 + $0xeb8] sm:$0xff]
        %v838 = vld [vmem:[%s282 + $0xec0] sm:$0xff]
        %v839 = vld [vmem:[%s282 + $0xec8] sm:$0xff]
        %v840 = vld [vmem:[%s282 + $0xed0] sm:$0xff]
        %v841 = vld [vmem:[%s282 + $0xed8] sm:$0xff]
        %v842 = vld [vmem:[%s282 + $0xee0] sm:$0xff]
        %v843 = vld [vmem:[%s282 + $0xee8] sm:$0xff]
        %v844 = vld [vmem:[%s282 + $0xef0] sm:$0xff]
        %v845 = vld [vmem:[%s282 + $0xef8] sm:$0xff]
        %v846 = vld [vmem:[%s282 + $0xf00] sm:$0xff]
        %v847 = vld [vmem:[%s282 + $0xf08] sm:$0xff]
        %v848 = vld [vmem:[%s282 + $0xf10] sm:$0xff]
        %v849 = vld [vmem:[%s282 + $0xf18] sm:$0xff]
        %v850 = vld [vmem:[%s282 + $0xf20] sm:$0xff]
        %v851 = vld [vmem:[%s282 + $0xf28] sm:$0xff]
        %v852 = vld [vmem:[%s282 + $0xf30] sm:$0xff]
        %v853 = vld [vmem:[%s282 + $0xf38] sm:$0xff]
        %v854 = vld [vmem:[%s282 + $0xf40] sm:$0xff]
        %v855 = vld [vmem:[%s282 + $0xf48] sm:$0xff]
        %v856 = vld [vmem:[%s282 + $0xf50] sm:$0xff]
        %v857 = vld [vmem:[%s282 + $0xf58] sm:$0xff]
        %v858 = vld [vmem:[%s282 + $0xf60] sm:$0xff]
        %v859 = vld [vmem:[%s282 + $0xf68] sm:$0xff]
        %v860 = vld [vmem:[%s282 + $0xf70] sm:$0xff]
        %v861 = vld [vmem:[%s282 + $0xf78] sm:$0xff]
        %v862 = vld [vmem:[%s282 + $0xf80] sm:$0xff]
        %v863 = vld [vmem:[%s282 + $0xf88] sm:$0xff]
        %v864 = vld [vmem:[%s282 + $0xf90] sm:$0xff]
        %v865 = vld [vmem:[%s282 + $0xf98] sm:$0xff]
        %v866 = vld [vmem:[%s282 + $0xfa0] sm:$0xff]
        %v867 = vld [vmem:[%s282 + $0xfa8] sm:$0xff]
        %v868 = vld [vmem:[%s282 + $0xfb0] sm:$0xff]
        %v869 = vld [vmem:[%s282 + $0xfb8] sm:$0xff]
        %v870 = vld [vmem:[%s282 + $0xfc0] sm:$0xff]
        %v871 = vld [vmem:[%s282 + $0xfc8] sm:$0xff]
        %v872 = vld [vmem:[%s282 + $0xfd0] sm:$0xff]
        %v873 = vld [vmem:[%s282 + $0xfd8] sm:$0xff]
        %v874 = vld [vmem:[%s282 + $0xfe0] sm:$0xff]
        %v875 = vld [vmem:[%s282 + $0xfe8] sm:$0xff]
        %v876 = vld [vmem:[%s282 + $0xff0] sm:$0xff]
        %v877 = vld [vmem:[%s282 + $0xff8] sm:$0xff]
        %v878 = vld [vmem:[%s282 + $0x1000] sm:$0xff]
        %v879 = vld [vmem:[%s282 + $0x1008] sm:$0xff]
        %v880 = vld [vmem:[%s282 + $0x1010] sm:$0xff]
        %v881 = vld [vmem:[%s282 + $0x1018] sm:$0xff]
        %v882 = vld [vmem:[%s282 + $0x1020] sm:$0xff]
        %v883 = vld [vmem:[%s282 + $0x1028] sm:$0xff]
        %v884 = vld [vmem:[%s282 + $0x1030] sm:$0xff]
        %v885 = vld [vmem:[%s282 + $0x1038] sm:$0xff]
        %v886 = vld [vmem:[%s282 + $0x1040] sm:$0xff]
        %v887 = vld [vmem:[%s282 + $0x1048] sm:$0xff]
        %v888 = vld [vmem:[%s282 + $0x1050] sm:$0xff]
        %v889 = vld [vmem:[%s282 + $0x1058] sm:$0xff]
        %v890 = vld [vmem:[%s282 + $0x1060] sm:$0xff]
        %v891 = vld [vmem:[%s282 + $0x1068] sm:$0xff]
        %v892 = vld [vmem:[%s282 + $0x1070] sm:$0xff]
        %v893 = vld [vmem:[%s282 + $0x1078] sm:$0xff]
        %v894 = vld [vmem:[%s282 + $0x1080] sm:$0xff]
        %v895 = vld [vmem:[%s282 + $0x1088] sm:$0xff]
        %v896 = vld [vmem:[%s282 + $0x1090] sm:$0xff]
        %v897 = vld [vmem:[%s282 + $0x1098] sm:$0xff]
        %v898 = vld [vmem:[%s282 + $0x10a0] sm:$0xff]
        %v899 = vld [vmem:[%s282 + $0x10a8] sm:$0xff]
        %v900 = vld [vmem:[%s282 + $0x10b0] sm:$0xff]
        %v901 = vld [vmem:[%s282 + $0x10b8] sm:$0xff]
        %v902 = vld [vmem:[%s282 + $0x10c0] sm:$0xff]
        %v903 = vld [vmem:[%s282 + $0x10c8] sm:$0xff]
        %v904 = vld [vmem:[%s282 + $0x10d0] sm:$0xff]
        %v905 = vld [vmem:[%s282 + $0x10d8] sm:$0xff]
        %v906 = vld [vmem:[%s282 + $0x10e0] sm:$0xff]
        %v907 = vld [vmem:[%s282 + $0x10e8] sm:$0xff]
        %v908 = vld [vmem:[%s282 + $0x10f0] sm:$0xff]
        %v909 = vld [vmem:[%s282 + $0x10f8] sm:$0xff]
        %v910 = vld [vmem:[%s282 + $0x1100] sm:$0xff]
        %v911 = vld [vmem:[%s282 + $0x1108] sm:$0xff]
        %v912 = vld [vmem:[%s282 + $0x1110] sm:$0xff]
        %v913 = vld [vmem:[%s282 + $0x1118] sm:$0xff]
        %v914 = vld [vmem:[%s282 + $0x1120] sm:$0xff]
        %v915 = vld [vmem:[%s282 + $0x1128] sm:$0xff]
        %v916 = vld [vmem:[%s282 + $0x1130] sm:$0xff]
        %v917 = vld [vmem:[%s282 + $0x1138] sm:$0xff]
        %v918 = vld [vmem:[%s282 + $0x1140] sm:$0xff]
        %v919 = vld [vmem:[%s282 + $0x1148] sm:$0xff]
        %v920 = vld [vmem:[%s282 + $0x1150] sm:$0xff]
        %v921 = vld [vmem:[%s282 + $0x1158] sm:$0xff]
        %v922 = vld [vmem:[%s282 + $0x1160] sm:$0xff]
        %v923 = vld [vmem:[%s282 + $0x1168] sm:$0xff]
        %v924 = vld [vmem:[%s282 + $0x1170] sm:$0xff]
        %v925 = vld [vmem:[%s282 + $0x1178] sm:$0xff]
        %v926 = vld [vmem:[%s282 + $0x1180] sm:$0xff]
        %v927 = vld [vmem:[%s282 + $0x1188] sm:$0xff]
        %v928 = vld [vmem:[%s282 + $0x1190] sm:$0xff]
        %v929 = vld [vmem:[%s282 + $0x1198] sm:$0xff]
        %v930 = vld [vmem:[%s282 + $0x11a0] sm:$0xff]
        %v931 = vld [vmem:[%s282 + $0x11a8] sm:$0xff]
        %v932 = vld [vmem:[%s282 + $0x11b0] sm:$0xff]
        %v933 = vld [vmem:[%s282 + $0x11b8] sm:$0xff]
        %v934 = vld [vmem:[%s282 + $0x11c0] sm:$0xff]
        %v935 = vld [vmem:[%s282 + $0x11c8] sm:$0xff]
        %v936 = vld [vmem:[%s282 + $0x11d0] sm:$0xff]
        %v937 = vld [vmem:[%s282 + $0x11d8] sm:$0xff]
        %v938 = vld [vmem:[%s282 + $0x11e0] sm:$0xff]
        %v939 = vld [vmem:[%s282 + $0x11e8] sm:$0xff]
        %v940 = vld [vmem:[%s282 + $0x11f0] sm:$0xff]
        %v941 = vld [vmem:[%s282 + $0x11f8] sm:$0xff]
        %v942 = vld [vmem:[%s282 + $0x1200] sm:$0xff]
        %v943 = vld [vmem:[%s282 + $0x1208] sm:$0xff]
        %v944 = vld [vmem:[%s282 + $0x1210] sm:$0xff]
        %v945 = vld [vmem:[%s282 + $0x1218] sm:$0xff]
        %v946 = vld [vmem:[%s282 + $0x1220] sm:$0xff]
        %v947 = vld [vmem:[%s282 + $0x1228] sm:$0xff]
        %v948 = vld [vmem:[%s282 + $0x1230] sm:$0xff]
        %v949 = vld [vmem:[%s282 + $0x1238] sm:$0xff]
        %v950 = vld [vmem:[%s282 + $0x1240] sm:$0xff]
        %v951 = vld [vmem:[%s282 + $0x1248] sm:$0xff]
        %v952 = vld [vmem:[%s282 + $0x1250] sm:$0xff]
        %v953 = vld [vmem:[%s282 + $0x1258] sm:$0xff]
        %v954 = vld [vmem:[%s282 + $0x1260] sm:$0xff]
        %v955 = vld [vmem:[%s282 + $0x1268] sm:$0xff]
        %v956 = vld [vmem:[%s282 + $0x1270] sm:$0xff]
        %v957 = vld [vmem:[%s282 + $0x1278] sm:$0xff]
        %v958 = vld [vmem:[%s282 + $0x1280] sm:$0xff]
        %v959 = vld [vmem:[%s282 + $0x1288] sm:$0xff]
        %v960 = vld [vmem:[%s282 + $0x1290] sm:$0xff]
        %v961 = vld [vmem:[%s282 + $0x1298] sm:$0xff]
        %v962 = vld [vmem:[%s282 + $0x12a0] sm:$0xff]
        %v963 = vld [vmem:[%s282 + $0x12a8] sm:$0xff]
        %v964 = vld [vmem:[%s282 + $0x12b0] sm:$0xff]
        %v965 = vld [vmem:[%s282 + $0x12b8] sm:$0xff]
        %v966 = vld [vmem:[%s282 + $0x12c0] sm:$0xff]
        %v967 = vld [vmem:[%s282 + $0x12c8] sm:$0xff]
        %v968 = vld [vmem:[%s282 + $0x12d0] sm:$0xff]
        %v969 = vld [vmem:[%s282 + $0x12d8] sm:$0xff]
        %v970 = vld [vmem:[%s282 + $0x12e0] sm:$0xff]
        %v971 = vld [vmem:[%s282 + $0x12e8] sm:$0xff]
        %v972 = vld [vmem:[%s282 + $0x12f0] sm:$0xff]
        %v973 = vld [vmem:[%s282 + $0x12f8] sm:$0xff]
        %v974 = vld [vmem:[%s282 + $0x1300] sm:$0xff]
        %v975 = vld [vmem:[%s282 + $0x1308] sm:$0xff]
        %v976 = vld [vmem:[%s282 + $0x1310] sm:$0xff]
        %v977 = vld [vmem:[%s282 + $0x1318] sm:$0xff]
        %v978 = vld [vmem:[%s282 + $0x1320] sm:$0xff]
        %v979 = vld [vmem:[%s282 + $0x1328] sm:$0xff]
        %v980 = vld [vmem:[%s282 + $0x1330] sm:$0xff]
        %v981 = vld [vmem:[%s282 + $0x1338] sm:$0xff]
        %v982 = vld [vmem:[%s282 + $0x1340] sm:$0xff]
        %v983 = vld [vmem:[%s282 + $0x1348] sm:$0xff]
        %v984 = vld [vmem:[%s282 + $0x1350] sm:$0xff]
        %v985 = vld [vmem:[%s282 + $0x1358] sm:$0xff]
        %v986 = vld [vmem:[%s282 + $0x1360] sm:$0xff]
        %v987 = vld [vmem:[%s282 + $0x1368] sm:$0xff]
        %v988 = vld [vmem:[%s282 + $0x1370] sm:$0xff]
        %v989 = vld [vmem:[%s282 + $0x1378] sm:$0xff]
        %v990 = vld [vmem:[%s282 + $0x1380] sm:$0xff]
        %v991 = vld [vmem:[%s282 + $0x1388] sm:$0xff]
        %v992 = vld [vmem:[%s282 + $0x1390] sm:$0xff]
        %v993 = vld [vmem:[%s282 + $0x1398] sm:$0xff]
        %v994 = vld [vmem:[%s282 + $0x13a0] sm:$0xff]
        %v995 = vld [vmem:[%s282 + $0x13a8] sm:$0xff]
        %v996 = vld [vmem:[%s282 + $0x13b0] sm:$0xff]
        %v997 = vld [vmem:[%s282 + $0x13b8] sm:$0xff]
        %v998 = vld [vmem:[%s282 + $0x13c0] sm:$0xff]
        %v999 = vld [vmem:[%s282 + $0x13c8] sm:$0xff]
        %v1000 = vld [vmem:[%s282 + $0x13d0] sm:$0xff]
        %v1001 = vld [vmem:[%s282 + $0x13d8] sm:$0xff]
        %v1002 = vld [vmem:[%s282 + $0x13e0] sm:$0xff]
        %v1003 = vld [vmem:[%s282 + $0x13e8] sm:$0xff]
        %v1004 = vld [vmem:[%s282 + $0x13f0] sm:$0xff]
        %v1005 = vld [vmem:[%s282 + $0x13f8] sm:$0xff]
        %v1006 = vld [vmem:[%s282 + $0x1400] sm:$0xff]
        %v1007 = vld [vmem:[%s282 + $0x1408] sm:$0xff]
        %v1008 = vld [vmem:[%s282 + $0x1410] sm:$0xff]
        %v1009 = vld [vmem:[%s282 + $0x1418] sm:$0xff]
        %v1010 = vld [vmem:[%s282 + $0x1420] sm:$0xff]
        %v1011 = vld [vmem:[%s282 + $0x1428] sm:$0xff]
        %v1012 = vld [vmem:[%s282 + $0x1430] sm:$0xff]
        %v1013 = vld [vmem:[%s282 + $0x1438] sm:$0xff]
        %v1014 = vld [vmem:[%s282 + $0x1440] sm:$0xff]
        %v1015 = vld [vmem:[%s282 + $0x1448] sm:$0xff]
        %v1016 = vld [vmem:[%s282 + $0x1450] sm:$0xff]
        %v1017 = vld [vmem:[%s282 + $0x1458] sm:$0xff]
        %v1018 = vld [vmem:[%s282 + $0x1460] sm:$0xff]
        %v1019 = vld [vmem:[%s282 + $0x1468] sm:$0xff]
        %v1020 = vld [vmem:[%s282 + $0x1470] sm:$0xff]
        %v1021 = vld [vmem:[%s282 + $0x1478] sm:$0xff]
        %v1022 = vld [vmem:[%s282 + $0x1480] sm:$0xff]
        %v1023 = vld [vmem:[%s282 + $0x1488] sm:$0xff]
        %v1024 = vld [vmem:[%s282 + $0x1490] sm:$0xff]
        %v1025 = vld [vmem:[%s282 + $0x1498] sm:$0xff]
        %v1026 = vld [vmem:[%s282 + $0x14a0] sm:$0xff]
        %v1027 = vld [vmem:[%s282 + $0x14a8] sm:$0xff]
        %v1028 = vld [vmem:[%s282 + $0x14b0] sm:$0xff]
        %v1029 = vld [vmem:[%s282 + $0x14b8] sm:$0xff]
        %v1030 = vld [vmem:[%s282 + $0x14c0] sm:$0xff]
        %v1031 = vld [vmem:[%s282 + $0x14c8] sm:$0xff]
        %v1032 = vld [vmem:[%s282 + $0x14d0] sm:$0xff]
        %v1033 = vld [vmem:[%s282 + $0x14d8] sm:$0xff]
        %v1034 = vld [vmem:[%s282 + $0x14e0] sm:$0xff]
        %v1035 = vld [vmem:[%s282 + $0x14e8] sm:$0xff]
        %v1036 = vld [vmem:[%s282 + $0x14f0] sm:$0xff]
        %v1037 = vld [vmem:[%s282 + $0x14f8] sm:$0xff]
        %v1038 = vld [vmem:[%s282 + $0x1500] sm:$0xff]
        %v1039 = vld [vmem:[%s282 + $0x1508] sm:$0xff]
        %v1040 = vld [vmem:[%s282 + $0x1510] sm:$0xff]
        %v1041 = vld [vmem:[%s282 + $0x1518] sm:$0xff]
        %v1042 = vld [vmem:[%s282 + $0x1520] sm:$0xff]
        %v1043 = vld [vmem:[%s282 + $0x1528] sm:$0xff]
        %v1044 = vld [vmem:[%s282 + $0x1530] sm:$0xff]
        %v1045 = vld [vmem:[%s282 + $0x1538] sm:$0xff]
        %v1046 = vld [vmem:[%s282 + $0x1540] sm:$0xff]
        %v1047 = vld [vmem:[%s282 + $0x1548] sm:$0xff]
        %v1048 = vld [vmem:[%s282 + $0x1550] sm:$0xff]
        %v1049 = vld [vmem:[%s282 + $0x1558] sm:$0xff]
        %v1050 = vld [vmem:[%s282 + $0x1560] sm:$0xff]
        %v1051 = vld [vmem:[%s282 + $0x1568] sm:$0xff]
        %v1052 = vld [vmem:[%s282 + $0x1570] sm:$0xff]
        %v1053 = vld [vmem:[%s282 + $0x1578] sm:$0xff]
        %v1054 = vld [vmem:[%s282 + $0x1580] sm:$0xff]
        %v1055 = vld [vmem:[%s282 + $0x1588] sm:$0xff]
        %v1056 = vld [vmem:[%s282 + $0x1590] sm:$0xff]
        %v1057 = vld [vmem:[%s282 + $0x1598] sm:$0xff]
        %v1058 = vld [vmem:[%s282 + $0x15a0] sm:$0xff]
        %v1059 = vld [vmem:[%s282 + $0x15a8] sm:$0xff]
        %v1060 = vld [vmem:[%s282 + $0x15b0] sm:$0xff]
        %v1061 = vld [vmem:[%s282 + $0x15b8] sm:$0xff]
        %v1062 = vld [vmem:[%s282 + $0x15c0] sm:$0xff]
        %v1063 = vld [vmem:[%s282 + $0x15c8] sm:$0xff]
        %v1064 = vld [vmem:[%s282 + $0x15d0] sm:$0xff]
        %v1065 = vld [vmem:[%s282 + $0x15d8] sm:$0xff]
        %v1066 = vld [vmem:[%s282 + $0x15e0] sm:$0xff]
        %v1067 = vld [vmem:[%s282 + $0x15e8] sm:$0xff]
        %v1068 = vld [vmem:[%s282 + $0x15f0] sm:$0xff]
        %v1069 = vld [vmem:[%s282 + $0x15f8] sm:$0xff]
        %v1070 = vld [vmem:[%s282 + $0x1600] sm:$0xff]
        %v1071 = vld [vmem:[%s282 + $0x1608] sm:$0xff]
        %v1072 = vld [vmem:[%s282 + $0x1610] sm:$0xff]
        %v1073 = vld [vmem:[%s282 + $0x1618] sm:$0xff]
        %v1074 = vld [vmem:[%s282 + $0x1620] sm:$0xff]
        %v1075 = vld [vmem:[%s282 + $0x1628] sm:$0xff]
        %v1076 = vld [vmem:[%s282 + $0x1630] sm:$0xff]
        %v1077 = vld [vmem:[%s282 + $0x1638] sm:$0xff]
        %v1078 = vld [vmem:[%s282 + $0x1640] sm:$0xff]
        %v1079 = vld [vmem:[%s282 + $0x1648] sm:$0xff]
        %v1080 = vld [vmem:[%s282 + $0x1650] sm:$0xff]
        %v1081 = vld [vmem:[%s282 + $0x1658] sm:$0xff]
        %v1082 = vld [vmem:[%s282 + $0x1660] sm:$0xff]
        %v1083 = vld [vmem:[%s282 + $0x1668] sm:$0xff]
        %v1084 = vld [vmem:[%s282 + $0x1670] sm:$0xff]
        %v1085 = vld [vmem:[%s282 + $0x1678] sm:$0xff]
        %v1086 = vld [vmem:[%s282 + $0x1680] sm:$0xff]
        %v1087 = vld [vmem:[%s282 + $0x1688] sm:$0xff]
        %v1088 = vld [vmem:[%s282 + $0x1690] sm:$0xff]
        %v1089 = vld [vmem:[%s282 + $0x1698] sm:$0xff]
        %v1090 = vld [vmem:[%s282 + $0x16a0] sm:$0xff]
        %v1091 = vld [vmem:[%s282 + $0x16a8] sm:$0xff]
        %v1092 = vld [vmem:[%s282 + $0x16b0] sm:$0xff]
        %v1093 = vld [vmem:[%s282 + $0x16b8] sm:$0xff]
        %v1094 = vld [vmem:[%s282 + $0x16c0] sm:$0xff]
        %v1095 = vld [vmem:[%s282 + $0x16c8] sm:$0xff]
        %v1096 = vld [vmem:[%s282 + $0x16d0] sm:$0xff]
        %v1097 = vld [vmem:[%s282 + $0x16d8] sm:$0xff]
        %v1098 = vld [vmem:[%s282 + $0x16e0] sm:$0xff]
        %v1099 = vld [vmem:[%s282 + $0x16e8] sm:$0xff]
        %v1100 = vld [vmem:[%s282 + $0x16f0] sm:$0xff]
        %v1101 = vld [vmem:[%s282 + $0x16f8] sm:$0xff]
        %v1102 = vld [vmem:[%s282 + $0x1700] sm:$0xff]
        %v1103 = vld [vmem:[%s282 + $0x1708] sm:$0xff]
        %v1104 = vld [vmem:[%s282 + $0x1710] sm:$0xff]
        %v1105 = vld [vmem:[%s282 + $0x1718] sm:$0xff]
        %v1106 = vld [vmem:[%s282 + $0x1720] sm:$0xff]
        %v1107 = vld [vmem:[%s282 + $0x1728] sm:$0xff]
        %v1108 = vld [vmem:[%s282 + $0x1730] sm:$0xff]
        %v1109 = vld [vmem:[%s282 + $0x1738] sm:$0xff]
        %v1110 = vld [vmem:[%s282 + $0x1740] sm:$0xff]
        %v1111 = vld [vmem:[%s282 + $0x1748] sm:$0xff]
        %v1112 = vld [vmem:[%s282 + $0x1750] sm:$0xff]
        %v1113 = vld [vmem:[%s282 + $0x1758] sm:$0xff]
        %v1114 = vld [vmem:[%s282 + $0x1760] sm:$0xff]
        %v1115 = vld [vmem:[%s282 + $0x1768] sm:$0xff]
        %v1116 = vld [vmem:[%s282 + $0x1770] sm:$0xff]
        %v1117 = vld [vmem:[%s282 + $0x1778] sm:$0xff]
        %v1118 = vld [vmem:[%s282 + $0x1780] sm:$0xff]
        %v1119 = vld [vmem:[%s282 + $0x1788] sm:$0xff]
        %v1120 = vld [vmem:[%s282 + $0x1790] sm:$0xff]
        %v1121 = vld [vmem:[%s282 + $0x1798] sm:$0xff]
        %v1122 = vld [vmem:[%s282 + $0x17a0] sm:$0xff]
        %v1123 = vld [vmem:[%s282 + $0x17a8] sm:$0xff]
        %v1124 = vld [vmem:[%s282 + $0x17b0] sm:$0xff]
        %v1125 = vld [vmem:[%s282 + $0x17b8] sm:$0xff]
        %v1126 = vld [vmem:[%s282 + $0x17c0] sm:$0xff]
        %v1127 = vld [vmem:[%s282 + $0x17c8] sm:$0xff]
        %v1128 = vld [vmem:[%s282 + $0x17d0] sm:$0xff]
        %v1129 = vld [vmem:[%s282 + $0x17d8] sm:$0xff]
        %v1130 = vld [vmem:[%s282 + $0x17e0] sm:$0xff]
        %v1131 = vld [vmem:[%s282 + $0x17e8] sm:$0xff]
        %v1132 = vld [vmem:[%s282 + $0x17f0] sm:$0xff]
        %v1133 = vld [vmem:[%s282 + $0x17f8] sm:$0xff]
        %v1134 = vld [vmem:[%s282 + $0x1800] sm:$0xff]
        %v1135 = vld [vmem:[%s282 + $0x1808] sm:$0xff]
        %v1136 = vld [vmem:[%s282 + $0x1810] sm:$0xff]
        %v1137 = vld [vmem:[%s282 + $0x1818] sm:$0xff]
        %v1138 = vld [vmem:[%s282 + $0x1820] sm:$0xff]
        %v1139 = vld [vmem:[%s282 + $0x1828] sm:$0xff]
        %v1140 = vld [vmem:[%s282 + $0x1830] sm:$0xff]
        %v1141 = vld [vmem:[%s282 + $0x1838] sm:$0xff]
        %v1142 = vld [vmem:[%s282 + $0x1840] sm:$0xff]
        %v1143 = vld [vmem:[%s282 + $0x1848] sm:$0xff]
        %v1144 = vld [vmem:[%s282 + $0x1850] sm:$0xff]
        %v1145 = vld [vmem:[%s282 + $0x1858] sm:$0xff]
        %v1146 = vld [vmem:[%s282 + $0x1860] sm:$0xff]
        %v1147 = vld [vmem:[%s282 + $0x1868] sm:$0xff]
        %v1148 = vld [vmem:[%s282 + $0x1870] sm:$0xff]
        %v1149 = vld [vmem:[%s282 + $0x1878] sm:$0xff]
        %v1150 = vld [vmem:[%s282 + $0x1880] sm:$0xff]
        %v1151 = vld [vmem:[%s282 + $0x1888] sm:$0xff]
        %v1152 = vld [vmem:[%s282 + $0x1890] sm:$0xff]
        %v1153 = vld [vmem:[%s282 + $0x1898] sm:$0xff]
        %v1154 = vld [vmem:[%s282 + $0x18a0] sm:$0xff]
        %v1155 = vld [vmem:[%s282 + $0x18a8] sm:$0xff]
        %v1156 = vld [vmem:[%s282 + $0x18b0] sm:$0xff]
        %v1157 = vld [vmem:[%s282 + $0x18b8] sm:$0xff]
        %v1158 = vld [vmem:[%s282 + $0x18c0] sm:$0xff]
        %v1159 = vld [vmem:[%s282 + $0x18c8] sm:$0xff]
        %v1160 = vld [vmem:[%s282 + $0x18d0] sm:$0xff]
        %v1161 = vld [vmem:[%s282 + $0x18d8] sm:$0xff]
        %v1162 = vld [vmem:[%s282 + $0x18e0] sm:$0xff]
        %v1163 = vld [vmem:[%s282 + $0x18e8] sm:$0xff]
        %v1164 = vld [vmem:[%s282 + $0x18f0] sm:$0xff]
        %v1165 = vld [vmem:[%s282 + $0x18f8] sm:$0xff]
        %v1166 = vld [vmem:[%s282 + $0x1900] sm:$0xff]
        %v1167 = vld [vmem:[%s282 + $0x1908] sm:$0xff]
        %v1168 = vld [vmem:[%s282 + $0x1910] sm:$0xff]
        %v1169 = vld [vmem:[%s282 + $0x1918] sm:$0xff]
        %v1170 = vld [vmem:[%s282 + $0x1920] sm:$0xff]
        %v1171 = vld [vmem:[%s282 + $0x1928] sm:$0xff]
        %v1172 = vld [vmem:[%s282 + $0x1930] sm:$0xff]
        %v1173 = vld [vmem:[%s282 + $0x1938] sm:$0xff]
        %v1174 = vld [vmem:[%s282 + $0x1940] sm:$0xff]
        %v1175 = vld [vmem:[%s282 + $0x1948] sm:$0xff]
        %v1176 = vld [vmem:[%s282 + $0x1950] sm:$0xff]
        %v1177 = vld [vmem:[%s282 + $0x1958] sm:$0xff]
        %v1178 = vld [vmem:[%s282 + $0x1960] sm:$0xff]
        %v1179 = vld [vmem:[%s282 + $0x1968] sm:$0xff]
        %v1180 = vld [vmem:[%s282 + $0x1970] sm:$0xff]
        %v1181 = vld [vmem:[%s282 + $0x1978] sm:$0xff]
        %v1182 = vld [vmem:[%s282 + $0x1980] sm:$0xff]
        %v1183 = vld [vmem:[%s282 + $0x1988] sm:$0xff]
        %v1184 = vld [vmem:[%s282 + $0x1990] sm:$0xff]
        %v1185 = vld [vmem:[%s282 + $0x1998] sm:$0xff]
        %v1186 = vld [vmem:[%s282 + $0x19a0] sm:$0xff]
        %v1187 = vld [vmem:[%s282 + $0x19a8] sm:$0xff]
        %v1188 = vld [vmem:[%s282 + $0x19b0] sm:$0xff]
        %v1189 = vld [vmem:[%s282 + $0x19b8] sm:$0xff]
        %v1190 = vld [vmem:[%s282 + $0x19c0] sm:$0xff]
        %v1191 = vld [vmem:[%s282 + $0x19c8] sm:$0xff]
        %v1192 = vld [vmem:[%s282 + $0x19d0] sm:$0xff]
        %v1193 = vld [vmem:[%s282 + $0x19d8] sm:$0xff]
        %v1194 = vld [vmem:[%s282 + $0x19e0] sm:$0xff]
        %v1195 = vld [vmem:[%s282 + $0x19e8] sm:$0xff]
        %v1196 = vld [vmem:[%s282 + $0x19f0] sm:$0xff]
        %v1197 = vld [vmem:[%s282 + $0x19f8] sm:$0xff]
        %v1198 = vld [vmem:[%s282 + $0x1a00] sm:$0xff]
        %v1199 = vld [vmem:[%s282 + $0x1a08] sm:$0xff]
        %v1200 = vld [vmem:[%s282 + $0x1a10] sm:$0xff]
        %v1201 = vld [vmem:[%s282 + $0x1a18] sm:$0xff]
        %v1202 = vld [vmem:[%s282 + $0x1a20] sm:$0xff]
        %v1203 = vld [vmem:[%s282 + $0x1a28] sm:$0xff]
        %v1204 = vld [vmem:[%s282 + $0x1a30] sm:$0xff]
        %v1205 = vld [vmem:[%s282 + $0x1a38] sm:$0xff]
        %v1206 = vld [vmem:[%s282 + $0x1a40] sm:$0xff]
        %v1207 = vld [vmem:[%s282 + $0x1a48] sm:$0xff]
        %v1208 = vld [vmem:[%s282 + $0x1a50] sm:$0xff]
        %v1209 = vld [vmem:[%s282 + $0x1a58] sm:$0xff]
        %v1210 = vld [vmem:[%s282 + $0x1a60] sm:$0xff]
        %v1211 = vld [vmem:[%s282 + $0x1a68] sm:$0xff]
        %v1212 = vld [vmem:[%s282 + $0x1a70] sm:$0xff]
        %v1213 = vld [vmem:[%s282 + $0x1a78] sm:$0xff]
        %v1214 = vld [vmem:[%s282 + $0x1a80] sm:$0xff]
        %v1215 = vld [vmem:[%s282 + $0x1a88] sm:$0xff]
        %v1216 = vld [vmem:[%s282 + $0x1a90] sm:$0xff]
        %v1217 = vld [vmem:[%s282 + $0x1a98] sm:$0xff]
        %v1218 = vld [vmem:[%s282 + $0x1aa0] sm:$0xff]
        %v1219 = vld [vmem:[%s282 + $0x1aa8] sm:$0xff]
        %v1220 = vld [vmem:[%s282 + $0x1ab0] sm:$0xff]
        %v1221 = vld [vmem:[%s282 + $0x1ab8] sm:$0xff]
        %v1222 = vld [vmem:[%s282 + $0x1ac0] sm:$0xff]
        %v1223 = vld [vmem:[%s282 + $0x1ac8] sm:$0xff]
        %v1224 = vld [vmem:[%s282 + $0x1ad0] sm:$0xff]
        %v1225 = vld [vmem:[%s282 + $0x1ad8] sm:$0xff]
        %v1226 = vld [vmem:[%s282 + $0x1ae0] sm:$0xff]
        %v1227 = vld [vmem:[%s282 + $0x1ae8] sm:$0xff]
        %v1228 = vld [vmem:[%s282 + $0x1af0] sm:$0xff]
        %v1229 = vld [vmem:[%s282 + $0x1af8] sm:$0xff]
        %v1230 = vld [vmem:[%s282 + $0x1b00] sm:$0xff]
        %v1231 = vld [vmem:[%s282 + $0x1b08] sm:$0xff]
        %v1232 = vld [vmem:[%s282 + $0x1b10] sm:$0xff]
        %v1233 = vld [vmem:[%s282 + $0x1b18] sm:$0xff]
        %v1234 = vld [vmem:[%s282 + $0x1b20] sm:$0xff]
        %v1235 = vld [vmem:[%s282 + $0x1b28] sm:$0xff]
        %v1236 = vld [vmem:[%s282 + $0x1b30] sm:$0xff]
        %v1237 = vld [vmem:[%s282 + $0x1b38] sm:$0xff]
        %v1238 = vld [vmem:[%s282 + $0x1b40] sm:$0xff]
        %v1239 = vld [vmem:[%s282 + $0x1b48] sm:$0xff]
        %v1240 = vld [vmem:[%s282 + $0x1b50] sm:$0xff]
        %v1241 = vld [vmem:[%s282 + $0x1b58] sm:$0xff]
        %v1242 = vld [vmem:[%s282 + $0x1b60] sm:$0xff]
        %v1243 = vld [vmem:[%s282 + $0x1b68] sm:$0xff]
        %v1244 = vld [vmem:[%s282 + $0x1b70] sm:$0xff]
        %v1245 = vld [vmem:[%s282 + $0x1b78] sm:$0xff]
        %v1246 = vld [vmem:[%s282 + $0x1b80] sm:$0xff]
        %v1247 = vld [vmem:[%s282 + $0x1b88] sm:$0xff]
        %v1248 = vld [vmem:[%s282 + $0x1b90] sm:$0xff]
        %v1249 = vld [vmem:[%s282 + $0x1b98] sm:$0xff]
        %v1250 = vld [vmem:[%s282 + $0x1ba0] sm:$0xff]
        %v1251 = vld [vmem:[%s282 + $0x1ba8] sm:$0xff]
        %v1252 = vld [vmem:[%s282 + $0x1bb0] sm:$0xff]
        %v1253 = vld [vmem:[%s282 + $0x1bb8] sm:$0xff]
        %v1254 = vld [vmem:[%s282 + $0x1bc0] sm:$0xff]
        %v1255 = vld [vmem:[%s282 + $0x1bc8] sm:$0xff]
        %v1256 = vld [vmem:[%s282 + $0x1bd0] sm:$0xff]
        %v1257 = vld [vmem:[%s282 + $0x1bd8] sm:$0xff]
        %v1258 = vld [vmem:[%s282 + $0x1be0] sm:$0xff]
        %v1259 = vld [vmem:[%s282 + $0x1be8] sm:$0xff]
        %v1260 = vld [vmem:[%s282 + $0x1bf0] sm:$0xff]
        %v1261 = vld [vmem:[%s282 + $0x1bf8] sm:$0xff]
        %v1262 = vld [vmem:[%s282 + $0x1c00] sm:$0xff]
        %v1263 = vld [vmem:[%s282 + $0x1c08] sm:$0xff]
        %v1264 = vld [vmem:[%s282 + $0x1c10] sm:$0xff]
        %v1265 = vld [vmem:[%s282 + $0x1c18] sm:$0xff]
        %v1266 = vld [vmem:[%s282 + $0x1c20] sm:$0xff]
        %v1267 = vld [vmem:[%s282 + $0x1c28] sm:$0xff]
        %v1268 = vld [vmem:[%s282 + $0x1c30] sm:$0xff]
        %v1269 = vld [vmem:[%s282 + $0x1c38] sm:$0xff]
        %v1270 = vld [vmem:[%s282 + $0x1c40] sm:$0xff]
        %v1271 = vld [vmem:[%s282 + $0x1c48] sm:$0xff]
        %v1272 = vld [vmem:[%s282 + $0x1c50] sm:$0xff]
        %v1273 = vld [vmem:[%s282 + $0x1c58] sm:$0xff]
        %v1274 = vld [vmem:[%s282 + $0x1c60] sm:$0xff]
        %v1275 = vld [vmem:[%s282 + $0x1c68] sm:$0xff]
        %v1276 = vld [vmem:[%s282 + $0x1c70] sm:$0xff]
        %v1277 = vld [vmem:[%s282 + $0x1c78] sm:$0xff]
        %v1278 = vld [vmem:[%s282 + $0x1c80] sm:$0xff]
        %v1279 = vld [vmem:[%s282 + $0x1c88] sm:$0xff]
        %v1280 = vld [vmem:[%s282 + $0x1c90] sm:$0xff]
        %v1281 = vld [vmem:[%s282 + $0x1c98] sm:$0xff]
        %v1282 = vld [vmem:[%s282 + $0x1ca0] sm:$0xff]
        %v1283 = vld [vmem:[%s282 + $0x1ca8] sm:$0xff]
        %v1284 = vld [vmem:[%s282 + $0x1cb0] sm:$0xff]
        %v1285 = vld [vmem:[%s282 + $0x1cb8] sm:$0xff]
        %v1286 = vld [vmem:[%s282 + $0x1cc0] sm:$0xff]
        %v1287 = vld [vmem:[%s282 + $0x1cc8] sm:$0xff]
        %v1288 = vld [vmem:[%s282 + $0x1cd0] sm:$0xff]
        %v1289 = vld [vmem:[%s282 + $0x1cd8] sm:$0xff]
        %v1290 = vld [vmem:[%s282 + $0x1ce0] sm:$0xff]
        %v1291 = vld [vmem:[%s282 + $0x1ce8] sm:$0xff]
        %v1292 = vld [vmem:[%s282 + $0x1cf0] sm:$0xff]
        %v1293 = vld [vmem:[%s282 + $0x1cf8] sm:$0xff]
        %v1294 = vld [vmem:[%s282 + $0x1d00] sm:$0xff]
        %v1295 = vld [vmem:[%s282 + $0x1d08] sm:$0xff]
        %v1296 = vld [vmem:[%s282 + $0x1d10] sm:$0xff]
        %v1297 = vld [vmem:[%s282 + $0x1d18] sm:$0xff]
        %v1298 = vld [vmem:[%s282 + $0x1d20] sm:$0xff]
        %v1299 = vld [vmem:[%s282 + $0x1d28] sm:$0xff]
        %v1300 = vld [vmem:[%s282 + $0x1d30] sm:$0xff]
        %v1301 = vld [vmem:[%s282 + $0x1d38] sm:$0xff]
        %v1302 = vld [vmem:[%s282 + $0x1d40] sm:$0xff]
        %v1303 = vld [vmem:[%s282 + $0x1d48] sm:$0xff]
        %v1304 = vld [vmem:[%s282 + $0x1d50] sm:$0xff]
        %v1305 = vld [vmem:[%s282 + $0x1d58] sm:$0xff]
        %v1306 = vld [vmem:[%s282 + $0x1d60] sm:$0xff]
        %v1307 = vld [vmem:[%s282 + $0x1d68] sm:$0xff]
        %v1308 = vld [vmem:[%s282 + $0x1d70] sm:$0xff]
        %v1309 = vld [vmem:[%s282 + $0x1d78] sm:$0xff]
        %v1310 = vld [vmem:[%s282 + $0x1d80] sm:$0xff]
        %v1311 = vld [vmem:[%s282 + $0x1d88] sm:$0xff]
        %v1312 = vld [vmem:[%s282 + $0x1d90] sm:$0xff]
        %v1313 = vld [vmem:[%s282 + $0x1d98] sm:$0xff]
        %v1314 = vld [vmem:[%s282 + $0x1da0] sm:$0xff]
        %v1315 = vld [vmem:[%s282 + $0x1da8] sm:$0xff]
        %v1316 = vld [vmem:[%s282 + $0x1db0] sm:$0xff]
        %v1317 = vld [vmem:[%s282 + $0x1db8] sm:$0xff]
        %v1318 = vld [vmem:[%s282 + $0x1dc0] sm:$0xff]
        %v1319 = vld [vmem:[%s282 + $0x1dc8] sm:$0xff]
        %v1320 = vld [vmem:[%s282 + $0x1dd0] sm:$0xff]
        %v1321 = vld [vmem:[%s282 + $0x1dd8] sm:$0xff]
        %v1322 = vld [vmem:[%s282 + $0x1de0] sm:$0xff]
        %v1323 = vld [vmem:[%s282 + $0x1de8] sm:$0xff]
        %v1324 = vld [vmem:[%s282 + $0x1df0] sm:$0xff]
        %v1325 = vld [vmem:[%s282 + $0x1df8] sm:$0xff]
        %v1326 = vld [vmem:[%s282 + $0x1e00] sm:$0xff]
        %v1327 = vld [vmem:[%s282 + $0x1e08] sm:$0xff]
        %v1328 = vld [vmem:[%s282 + $0x1e10] sm:$0xff]
        %v1329 = vld [vmem:[%s282 + $0x1e18] sm:$0xff]
        %v1330 = vld [vmem:[%s282 + $0x1e20] sm:$0xff]
        %v1331 = vld [vmem:[%s282 + $0x1e28] sm:$0xff]
        %v1332 = vld [vmem:[%s282 + $0x1e30] sm:$0xff]
        %v1333 = vld [vmem:[%s282 + $0x1e38] sm:$0xff]
        %v1334 = vld [vmem:[%s282 + $0x1e40] sm:$0xff]
        %v1335 = vld [vmem:[%s282 + $0x1e48] sm:$0xff]
        %v1336 = vld [vmem:[%s282 + $0x1e50] sm:$0xff]
        %v1337 = vld [vmem:[%s282 + $0x1e58] sm:$0xff]
        %v1338 = vld [vmem:[%s282 + $0x1e60] sm:$0xff]
        %v1339 = vld [vmem:[%s282 + $0x1e68] sm:$0xff]
        %v1340 = vld [vmem:[%s282 + $0x1e70] sm:$0xff]
        %v1341 = vld [vmem:[%s282 + $0x1e78] sm:$0xff]
        %v1342 = vld [vmem:[%s282 + $0x1e80] sm:$0xff]
        %v1343 = vld [vmem:[%s282 + $0x1e88] sm:$0xff]
        %v1344 = vld [vmem:[%s282 + $0x1e90] sm:$0xff]
        %v1345 = vld [vmem:[%s282 + $0x1e98] sm:$0xff]
        %v1346 = vld [vmem:[%s282 + $0x1ea0] sm:$0xff]
        %v1347 = vld [vmem:[%s282 + $0x1ea8] sm:$0xff]
        %v1348 = vld [vmem:[%s282 + $0x1eb0] sm:$0xff]
        %v1349 = vld [vmem:[%s282 + $0x1eb8] sm:$0xff]
        %v1350 = vld [vmem:[%s282 + $0x1ec0] sm:$0xff]
        %v1351 = vld [vmem:[%s282 + $0x1ec8] sm:$0xff]
        %v1352 = vld [vmem:[%s282 + $0x1ed0] sm:$0xff]
        %v1353 = vld [vmem:[%s282 + $0x1ed8] sm:$0xff]
        %v1354 = vld [vmem:[%s282 + $0x1ee0] sm:$0xff]
        %v1355 = vld [vmem:[%s282 + $0x1ee8] sm:$0xff]
        %v1356 = vld [vmem:[%s282 + $0x1ef0] sm:$0xff]
        %v1357 = vld [vmem:[%s282 + $0x1ef8] sm:$0xff]
        %v1358 = vld [vmem:[%s282 + $0x1f00] sm:$0xff]
        %v1359 = vld [vmem:[%s282 + $0x1f08] sm:$0xff]
        %v1360 = vld [vmem:[%s282 + $0x1f10] sm:$0xff]
        %v1361 = vld [vmem:[%s282 + $0x1f18] sm:$0xff]
        %v1362 = vld [vmem:[%s282 + $0x1f20] sm:$0xff]
        %v1363 = vld [vmem:[%s282 + $0x1f28] sm:$0xff]
        %v1364 = vld [vmem:[%s282 + $0x1f30] sm:$0xff]
        %v1365 = vld [vmem:[%s282 + $0x1f38] sm:$0xff]
        %v1366 = vld [vmem:[%s282 + $0x1f40] sm:$0xff]
        %v1367 = vld [vmem:[%s282 + $0x1f48] sm:$0xff]
        %v1368 = vld [vmem:[%s282 + $0x1f50] sm:$0xff]
        %v1369 = vld [vmem:[%s282 + $0x1f58] sm:$0xff]
        %v1370 = vld [vmem:[%s282 + $0x1f60] sm:$0xff]
        %v1371 = vld [vmem:[%s282 + $0x1f68] sm:$0xff]
        %v1372 = vld [vmem:[%s282 + $0x1f70] sm:$0xff]
        %v1373 = vld [vmem:[%s282 + $0x1f78] sm:$0xff]
        %v1374 = vld [vmem:[%s282 + $0x1f80] sm:$0xff]
        %v1375 = vld [vmem:[%s282 + $0x1f88] sm:$0xff]
        %v1376 = vld [vmem:[%s282 + $0x1f90] sm:$0xff]
        %v1377 = vld [vmem:[%s282 + $0x1f98] sm:$0xff]
        %v1378 = vld [vmem:[%s282 + $0x1fa0] sm:$0xff]
        %v1379 = vld [vmem:[%s282 + $0x1fa8] sm:$0xff]
        %v1380 = vld [vmem:[%s282 + $0x1fb0] sm:$0xff]
        %v1381 = vld [vmem:[%s282 + $0x1fb8] sm:$0xff]
        %v1382 = vld [vmem:[%s282 + $0x1fc0] sm:$0xff]
        %v1383 = vld [vmem:[%s282 + $0x1fc8] sm:$0xff]
        %v1384 = vld [vmem:[%s282 + $0x1fd0] sm:$0xff]
        %v1385 = vld [vmem:[%s282 + $0x1fd8] sm:$0xff]
        %v1386 = vld [vmem:[%s282 + $0x1fe0] sm:$0xff]
        %v1387 = vld [vmem:[%s282 + $0x1fe8] sm:$0xff]
        %v1388 = vld [vmem:[%s282 + $0x1ff0] sm:$0xff]
        %v1389 = vld [vmem:[%s282 + $0x1ff8] sm:$0xff]
        %v1390 = vld [vmem:[%s291] sm:$0xf]
        %v1392 = vlaneseq
        %v1393 = vshrl.u32 %v1392, 7
        %v1394 = vsub.s32 0, %v1393
        %v1395 = vrot.slane %v1390, %v1394
        %v1396 = vlaneseq
        %v1397 = vshrl.u32 %v1396, 7
        %v1398 = vsub.s32 1, %v1397
        %v1399 = vrot.slane %v1390, %v1398
        %v1400 = vlaneseq
        %v1401 = vshrl.u32 %v1400, 7
        %v1402 = vsub.s32 2, %v1401
        %v1403 = vrot.slane %v1390, %v1402
        %v1404 = vlaneseq
        %v1405 = vshrl.u32 %v1404, 7
        %v1406 = vsub.s32 3, %v1405
        %v1407 = vrot.slane %v1390, %v1406
        %1412 = vmatprep.subr.mxu0 %v367
        %1413 = vmatpush1.msra.mxu0 %v366
        %1414 = vmatprep.subr.mxu0 %v371
        %1415 = vmatpush1.msra.mxu0 %v370
        %1416 = vmatprep.subr.mxu0 %v375
        %1417 = vmatpush1.msra.mxu0 %v374
        %1418 = vmatprep.subr.mxu0 %v379
        %1419 = vmatpush1.msra.mxu0 %v378
        %1420 = vmatprep.subr.mxu0 %v383
        %1421 = vmatpush1.msra.mxu0 %v382
        %1422 = vmatprep.subr.mxu0 %v387
        %1423 = vmatpush1.msra.mxu0 %v386
        %1424 = vmatprep.subr.mxu0 %v391
        %1425 = vmatpush1.msra.mxu0 %v390
        %1426 = vmatprep.subr.mxu0 %v395
        %1427 = vmatpush1.msra.mxu0 %v394
        %1428 = vmatprep.subr.mxu0 %v399
        %1429 = vmatpush1.msra.mxu0 %v398
        %1430 = vmatprep.subr.mxu0 %v403
        %1431 = vmatpush1.msra.mxu0 %v402
        %1432 = vmatprep.subr.mxu0 %v407
        %1433 = vmatpush1.msra.mxu0 %v406
        %1434 = vmatprep.subr.mxu0 %v411
        %1435 = vmatpush1.msra.mxu0 %v410
        %1436 = vmatprep.subr.mxu0 %v415
        %1437 = vmatpush1.msra.mxu0 %v414
        %1438 = vmatprep.subr.mxu0 %v419
        %1439 = vmatpush1.msra.mxu0 %v418
        %1440 = vmatprep.subr.mxu0 %v423
        %1441 = vmatpush1.msra.mxu0 %v422
        %1442 = vmatprep.subr.mxu0 %v427
        %1443 = vmatpush1.msra.mxu0 %v426
        %1444 = vmatprep.subr.mxu0 %v431
        %1445 = vmatpush1.msra.mxu0 %v430
        %1446 = vmatprep.subr.mxu0 %v435
        %1447 = vmatpush1.msra.mxu0 %v434
        %1448 = vmatprep.subr.mxu0 %v439
        %1449 = vmatpush1.msra.mxu0 %v438
        %1450 = vmatprep.subr.mxu0 %v443
        %1451 = vmatpush1.msra.mxu0 %v442
        %1452 = vmatprep.subr.mxu0 %v447
        %1453 = vmatpush1.msra.mxu0 %v446
        %1454 = vmatprep.subr.mxu0 %v451
        %1455 = vmatpush1.msra.mxu0 %v450
        %1456 = vmatprep.subr.mxu0 %v455
        %1457 = vmatpush1.msra.mxu0 %v454
        %1458 = vmatprep.subr.mxu0 %v459
        %1459 = vmatpush1.msra.mxu0 %v458
        %1460 = vmatprep.subr.mxu0 %v463
        %1461 = vmatpush1.msra.mxu0 %v462
        %1462 = vmatprep.subr.mxu0 %v467
        %1463 = vmatpush1.msra.mxu0 %v466
        %1464 = vmatprep.subr.mxu0 %v471
        %1465 = vmatpush1.msra.mxu0 %v470
        %1466 = vmatprep.subr.mxu0 %v475
        %1467 = vmatpush1.msra.mxu0 %v474
        %1468 = vmatprep.subr.mxu0 %v479
        %1469 = vmatpush1.msra.mxu0 %v478
        %1470 = vmatprep.subr.mxu0 %v483
        %1471 = vmatpush1.msra.mxu0 %v482
        %1472 = vmatprep.subr.mxu0 %v487
        %1473 = vmatpush1.msra.mxu0 %v486
        %1474 = vmatprep.subr.mxu0 %v491
        %1475 = vmatpush1.msra.mxu0 %v490
        %1476 = vmatprep.mubr.f32.mxu0 %v351
        %1477 = vmatmul.mubr.f32.gmra.mrb[0].mxu0 %v350
        %v1478 = vpop.f32.mrb[0].mxu0
        %v1479 = vadd.f32 %v1395, %v1478
        %v1480 = vpop.f32.mrb[0].mxu0
        %v1481 = vadd.f32 %v1399, %v1480
        %1482 = vdwg.mxu0
        %1483 = vmatprep.subr.mxu0 %v495
        %1484 = vmatpush1.msra.mxu0 %v494
        %1485 = vmatprep.subr.mxu0 %v499
        %1486 = vmatpush1.msra.mxu0 %v498
        %1487 = vmatprep.subr.mxu0 %v503
        %1488 = vmatpush1.msra.mxu0 %v502
        %1489 = vmatprep.subr.mxu0 %v507
        %1490 = vmatpush1.msra.mxu0 %v506
        %1491 = vmatprep.subr.mxu0 %v511
        %1492 = vmatpush1.msra.mxu0 %v510
        %1493 = vmatprep.subr.mxu0 %v515
        %1494 = vmatpush1.msra.mxu0 %v514
        %1495 = vmatprep.subr.mxu0 %v519
        %1496 = vmatpush1.msra.mxu0 %v518
        %1497 = vmatprep.subr.mxu0 %v523
        %1498 = vmatpush1.msra.mxu0 %v522
        %1499 = vmatprep.subr.mxu0 %v527
        %1500 = vmatpush1.msra.mxu0 %v526
        %1501 = vmatprep.subr.mxu0 %v531
        %1502 = vmatpush1.msra.mxu0 %v530
        %1503 = vmatprep.subr.mxu0 %v535
        %1504 = vmatpush1.msra.mxu0 %v534
        %1505 = vmatprep.subr.mxu0 %v539
        %1506 = vmatpush1.msra.mxu0 %v538
        %1507 = vmatprep.subr.mxu0 %v543
        %1508 = vmatpush1.msra.mxu0 %v542
        %1509 = vmatprep.subr.mxu0 %v547
        %1510 = vmatpush1.msra.mxu0 %v546
        %1511 = vmatprep.subr.mxu0 %v551
        %1512 = vmatpush1.msra.mxu0 %v550
        %1513 = vmatprep.subr.mxu0 %v555
        %1514 = vmatpush1.msra.mxu0 %v554
        %1515 = vmatprep.subr.mxu0 %v559
        %1516 = vmatpush1.msra.mxu0 %v558
        %1517 = vmatprep.subr.mxu0 %v563
        %1518 = vmatpush1.msra.mxu0 %v562
        %1519 = vmatprep.subr.mxu0 %v567
        %1520 = vmatpush1.msra.mxu0 %v566
        %1521 = vmatprep.subr.mxu0 %v571
        %1522 = vmatpush1.msra.mxu0 %v570
        %1523 = vmatprep.subr.mxu0 %v575
        %1524 = vmatpush1.msra.mxu0 %v574
        %1525 = vmatprep.subr.mxu0 %v579
        %1526 = vmatpush1.msra.mxu0 %v578
        %1527 = vmatprep.subr.mxu0 %v583
        %1528 = vmatpush1.msra.mxu0 %v582
        %1529 = vmatprep.subr.mxu0 %v587
        %1530 = vmatpush1.msra.mxu0 %v586
        %1531 = vmatprep.subr.mxu0 %v591
        %1532 = vmatpush1.msra.mxu0 %v590
        %1533 = vmatprep.subr.mxu0 %v595
        %1534 = vmatpush1.msra.mxu0 %v594
        %1535 = vmatprep.subr.mxu0 %v599
        %1536 = vmatpush1.msra.mxu0 %v598
        %1537 = vmatprep.subr.mxu0 %v603
        %1538 = vmatpush1.msra.mxu0 %v602
        %1539 = vmatprep.subr.mxu0 %v607
        %1540 = vmatpush1.msra.mxu0 %v606
        %1541 = vmatprep.subr.mxu0 %v611
        %1542 = vmatpush1.msra.mxu0 %v610
        %1543 = vmatprep.subr.mxu0 %v615
        %1544 = vmatpush1.msra.mxu0 %v614
        %1545 = vmatprep.subr.mxu0 %v619
        %1546 = vmatpush1.msra.mxu0 %v618
        %1547 = vmatprep.mubr.f32.mxu0 %v353
        %1548 = vmatmul.mubr.f32.gmra.mrb[0].mxu0 %v352
        %v1549 = vpop.f32.mrb[0].mxu0
        %v1550 = vadd.f32 %v1479, %v1549
        %v1551 = vpop.f32.mrb[0].mxu0
        %v1552 = vadd.f32 %v1481, %v1551
        %1553 = vdwg.mxu0
        %1554 = vmatprep.subr.mxu0 %v623
        %1555 = vmatpush1.msra.mxu0 %v622
        %1556 = vmatprep.subr.mxu0 %v627
        %1557 = vmatpush1.msra.mxu0 %v626
        %1558 = vmatprep.subr.mxu0 %v631
        %1559 = vmatpush1.msra.mxu0 %v630
        %1560 = vmatprep.subr.mxu0 %v635
        %1561 = vmatpush1.msra.mxu0 %v634
        %1562 = vmatprep.subr.mxu0 %v639
        %1563 = vmatpush1.msra.mxu0 %v638
        %1564 = vmatprep.subr.mxu0 %v643
        %1565 = vmatpush1.msra.mxu0 %v642
        %1566 = vmatprep.subr.mxu0 %v647
        %1567 = vmatpush1.msra.mxu0 %v646
        %1568 = vmatprep.subr.mxu0 %v651
        %1569 = vmatpush1.msra.mxu0 %v650
        %1570 = vmatprep.subr.mxu0 %v655
        %1571 = vmatpush1.msra.mxu0 %v654
        %1572 = vmatprep.subr.mxu0 %v659
        %1573 = vmatpush1.msra.mxu0 %v658
        %1574 = vmatprep.subr.mxu0 %v663
        %1575 = vmatpush1.msra.mxu0 %v662
        %1576 = vmatprep.subr.mxu0 %v667
        %1577 = vmatpush1.msra.mxu0 %v666
        %1578 = vmatprep.subr.mxu0 %v671
        %1579 = vmatpush1.msra.mxu0 %v670
        %1580 = vmatprep.subr.mxu0 %v675
        %1581 = vmatpush1.msra.mxu0 %v674
        %1582 = vmatprep.subr.mxu0 %v679
        %1583 = vmatpush1.msra.mxu0 %v678
        %1584 = vmatprep.subr.mxu0 %v683
        %1585 = vmatpush1.msra.mxu0 %v682
        %1586 = vmatprep.subr.mxu0 %v687
        %1587 = vmatpush1.msra.mxu0 %v686
        %1588 = vmatprep.subr.mxu0 %v691
        %1589 = vmatpush1.msra.mxu0 %v690
        %1590 = vmatprep.subr.mxu0 %v695
        %1591 = vmatpush1.msra.mxu0 %v694
        %1592 = vmatprep.subr.mxu0 %v699
        %1593 = vmatpush1.msra.mxu0 %v698
        %1594 = vmatprep.subr.mxu0 %v703
        %1595 = vmatpush1.msra.mxu0 %v702
        %1596 = vmatprep.subr.mxu0 %v707
        %1597 = vmatpush1.msra.mxu0 %v706
        %1598 = vmatprep.subr.mxu0 %v711
        %1599 = vmatpush1.msra.mxu0 %v710
        %1600 = vmatprep.subr.mxu0 %v715
        %1601 = vmatpush1.msra.mxu0 %v714
        %1602 = vmatprep.subr.mxu0 %v719
        %1603 = vmatpush1.msra.mxu0 %v718
        %1604 = vmatprep.subr.mxu0 %v723
        %1605 = vmatpush1.msra.mxu0 %v722
        %1606 = vmatprep.subr.mxu0 %v727
        %1607 = vmatpush1.msra.mxu0 %v726
        %1608 = vmatprep.subr.mxu0 %v731
        %1609 = vmatpush1.msra.mxu0 %v730
        %1610 = vmatprep.subr.mxu0 %v735
        %1611 = vmatpush1.msra.mxu0 %v734
        %1612 = vmatprep.subr.mxu0 %v739
        %1613 = vmatpush1.msra.mxu0 %v738
        %1614 = vmatprep.subr.mxu0 %v743
        %1615 = vmatpush1.msra.mxu0 %v742
        %1616 = vmatprep.subr.mxu0 %v747
        %1617 = vmatpush1.msra.mxu0 %v746
        %1618 = vmatprep.mubr.f32.mxu0 %v355
        %1619 = vmatmul.mubr.f32.gmra.mrb[0].mxu0 %v354
        %v1620 = vpop.f32.mrb[0].mxu0
        %v1621 = vadd.f32 %v1550, %v1620
        %v1622 = vpop.f32.mrb[0].mxu0
        %v1623 = vadd.f32 %v1552, %v1622
        %1624 = vdwg.mxu0
        %1625 = vmatprep.subr.mxu0 %v751
        %1626 = vmatpush1.msra.mxu0 %v750
        %1627 = vmatprep.subr.mxu0 %v755
        %1628 = vmatpush1.msra.mxu0 %v754
        %1629 = vmatprep.subr.mxu0 %v759
        %1630 = vmatpush1.msra.mxu0 %v758
        %1631 = vmatprep.subr.mxu0 %v763
        %1632 = vmatpush1.msra.mxu0 %v762
        %1633 = vmatprep.subr.mxu0 %v767
        %1634 = vmatpush1.msra.mxu0 %v766
        %1635 = vmatprep.subr.mxu0 %v771
        %1636 = vmatpush1.msra.mxu0 %v770
        %1637 = vmatprep.subr.mxu0 %v775
        %1638 = vmatpush1.msra.mxu0 %v774
        %1639 = vmatprep.subr.mxu0 %v779
        %1640 = vmatpush1.msra.mxu0 %v778
        %1641 = vmatprep.subr.mxu0 %v783
        %1642 = vmatpush1.msra.mxu0 %v782
        %1643 = vmatprep.subr.mxu0 %v787
        %1644 = vmatpush1.msra.mxu0 %v786
        %1645 = vmatprep.subr.mxu0 %v791
        %1646 = vmatpush1.msra.mxu0 %v790
        %1647 = vmatprep.subr.mxu0 %v795
        %1648 = vmatpush1.msra.mxu0 %v794
        %1649 = vmatprep.subr.mxu0 %v799
        %1650 = vmatpush1.msra.mxu0 %v798
        %1651 = vmatprep.subr.mxu0 %v803
        %1652 = vmatpush1.msra.mxu0 %v802
        %1653 = vmatprep.subr.mxu0 %v807
        %1654 = vmatpush1.msra.mxu0 %v806
        %1655 = vmatprep.subr.mxu0 %v811
        %1656 = vmatpush1.msra.mxu0 %v810
        %1657 = vmatprep.subr.mxu0 %v815
        %1658 = vmatpush1.msra.mxu0 %v814
        %1659 = vmatprep.subr.mxu0 %v819
        %1660 = vmatpush1.msra.mxu0 %v818
        %1661 = vmatprep.subr.mxu0 %v823
        %1662 = vmatpush1.msra.mxu0 %v822
        %1663 = vmatprep.subr.mxu0 %v827
        %1664 = vmatpush1.msra.mxu0 %v826
        %1665 = vmatprep.subr.mxu0 %v831
        %1666 = vmatpush1.msra.mxu0 %v830
        %1667 = vmatprep.subr.mxu0 %v835
        %1668 = vmatpush1.msra.mxu0 %v834
        %1669 = vmatprep.subr.mxu0 %v839
        %1670 = vmatpush1.msra.mxu0 %v838
        %1671 = vmatprep.subr.mxu0 %v843
        %1672 = vmatpush1.msra.mxu0 %v842
        %1673 = vmatprep.subr.mxu0 %v847
        %1674 = vmatpush1.msra.mxu0 %v846
        %1675 = vmatprep.subr.mxu0 %v851
        %1676 = vmatpush1.msra.mxu0 %v850
        %1677 = vmatprep.subr.mxu0 %v855
        %1678 = vmatpush1.msra.mxu0 %v854
        %1679 = vmatprep.subr.mxu0 %v859
        %1680 = vmatpush1.msra.mxu0 %v858
        %1681 = vmatprep.subr.mxu0 %v863
        %1682 = vmatpush1.msra.mxu0 %v862
        %1683 = vmatprep.subr.mxu0 %v867
        %1684 = vmatpush1.msra.mxu0 %v866
        %1685 = vmatprep.subr.mxu0 %v871
        %1686 = vmatpush1.msra.mxu0 %v870
        %1687 = vmatprep.subr.mxu0 %v875
        %1688 = vmatpush1.msra.mxu0 %v874
        %1689 = vmatprep.mubr.f32.mxu0 %v357
        %1690 = vmatmul.mubr.f32.gmra.mrb[0].mxu0 %v356
        %v1691 = vpop.f32.mrb[0].mxu0
        %v1692 = vadd.f32 %v1621, %v1691
        %v1693 = vpop.f32.mrb[0].mxu0
        %v1694 = vadd.f32 %v1623, %v1693
        %1695 = vdwg.mxu0
        %1696 = vmatprep.subr.mxu0 %v879
        %1697 = vmatpush1.msra.mxu0 %v878
        %1698 = vmatprep.subr.mxu0 %v883
        %1699 = vmatpush1.msra.mxu0 %v882
        %1700 = vmatprep.subr.mxu0 %v887
        %1701 = vmatpush1.msra.mxu0 %v886
        %1702 = vmatprep.subr.mxu0 %v891
        %1703 = vmatpush1.msra.mxu0 %v890
        %1704 = vmatprep.subr.mxu0 %v895
        %1705 = vmatpush1.msra.mxu0 %v894
        %1706 = vmatprep.subr.mxu0 %v899
        %1707 = vmatpush1.msra.mxu0 %v898
        %1708 = vmatprep.subr.mxu0 %v903
        %1709 = vmatpush1.msra.mxu0 %v902
        %1710 = vmatprep.subr.mxu0 %v907
        %1711 = vmatpush1.msra.mxu0 %v906
        %1712 = vmatprep.subr.mxu0 %v911
        %1713 = vmatpush1.msra.mxu0 %v910
        %1714 = vmatprep.subr.mxu0 %v915
        %1715 = vmatpush1.msra.mxu0 %v914
        %1716 = vmatprep.subr.mxu0 %v919
        %1717 = vmatpush1.msra.mxu0 %v918
        %1718 = vmatprep.subr.mxu0 %v923
        %1719 = vmatpush1.msra.mxu0 %v922
        %1720 = vmatprep.subr.mxu0 %v927
        %1721 = vmatpush1.msra.mxu0 %v926
        %1722 = vmatprep.subr.mxu0 %v931
        %1723 = vmatpush1.msra.mxu0 %v930
        %1724 = vmatprep.subr.mxu0 %v935
        %1725 = vmatpush1.msra.mxu0 %v934
        %1726 = vmatprep.subr.mxu0 %v939
        %1727 = vmatpush1.msra.mxu0 %v938
        %1728 = vmatprep.subr.mxu0 %v943
        %1729 = vmatpush1.msra.mxu0 %v942
        %1730 = vmatprep.subr.mxu0 %v947
        %1731 = vmatpush1.msra.mxu0 %v946
        %1732 = vmatprep.subr.mxu0 %v951
        %1733 = vmatpush1.msra.mxu0 %v950
        %1734 = vmatprep.subr.mxu0 %v955
        %1735 = vmatpush1.msra.mxu0 %v954
        %1736 = vmatprep.subr.mxu0 %v959
        %1737 = vmatpush1.msra.mxu0 %v958
        %1738 = vmatprep.subr.mxu0 %v963
        %1739 = vmatpush1.msra.mxu0 %v962
        %1740 = vmatprep.subr.mxu0 %v967
        %1741 = vmatpush1.msra.mxu0 %v966
        %1742 = vmatprep.subr.mxu0 %v971
        %1743 = vmatpush1.msra.mxu0 %v970
        %1744 = vmatprep.subr.mxu0 %v975
        %1745 = vmatpush1.msra.mxu0 %v974
        %1746 = vmatprep.subr.mxu0 %v979
        %1747 = vmatpush1.msra.mxu0 %v978
        %1748 = vmatprep.subr.mxu0 %v983
        %1749 = vmatpush1.msra.mxu0 %v982
        %1750 = vmatprep.subr.mxu0 %v987
        %1751 = vmatpush1.msra.mxu0 %v986
        %1752 = vmatprep.subr.mxu0 %v991
        %1753 = vmatpush1.msra.mxu0 %v990
        %1754 = vmatprep.subr.mxu0 %v995
        %1755 = vmatpush1.msra.mxu0 %v994
        %1756 = vmatprep.subr.mxu0 %v999
        %1757 = vmatpush1.msra.mxu0 %v998
        %1758 = vmatprep.subr.mxu0 %v1003
        %1759 = vmatpush1.msra.mxu0 %v1002
        %1760 = vmatprep.mubr.f32.mxu0 %v359
        %1761 = vmatmul.mubr.f32.gmra.mrb[0].mxu0 %v358
        %v1762 = vpop.f32.mrb[0].mxu0
        %v1763 = vadd.f32 %v1692, %v1762
        %v1764 = vpop.f32.mrb[0].mxu0
        %v1765 = vadd.f32 %v1694, %v1764
        %1766 = vdwg.mxu0
        %1767 = vmatprep.subr.mxu0 %v1007
        %1768 = vmatpush1.msra.mxu0 %v1006
        %1769 = vmatprep.subr.mxu0 %v1011
        %1770 = vmatpush1.msra.mxu0 %v1010
        %1771 = vmatprep.subr.mxu0 %v1015
        %1772 = vmatpush1.msra.mxu0 %v1014
        %1773 = vmatprep.subr.mxu0 %v1019
        %1774 = vmatpush1.msra.mxu0 %v1018
        %1775 = vmatprep.subr.mxu0 %v1023
        %1776 = vmatpush1.msra.mxu0 %v1022
        %1777 = vmatprep.subr.mxu0 %v1027
        %1778 = vmatpush1.msra.mxu0 %v1026
        %1779 = vmatprep.subr.mxu0 %v1031
        %1780 = vmatpush1.msra.mxu0 %v1030
        %1781 = vmatprep.subr.mxu0 %v1035
        %1782 = vmatpush1.msra.mxu0 %v1034
        %1783 = vmatprep.subr.mxu0 %v1039
        %1784 = vmatpush1.msra.mxu0 %v1038
        %1785 = vmatprep.subr.mxu0 %v1043
        %1786 = vmatpush1.msra.mxu0 %v1042
        %1787 = vmatprep.subr.mxu0 %v1047
        %1788 = vmatpush1.msra.mxu0 %v1046
        %1789 = vmatprep.subr.mxu0 %v1051
        %1790 = vmatpush1.msra.mxu0 %v1050
        %1791 = vmatprep.subr.mxu0 %v1055
        %1792 = vmatpush1.msra.mxu0 %v1054
        %1793 = vmatprep.subr.mxu0 %v1059
        %1794 = vmatpush1.msra.mxu0 %v1058
        %1795 = vmatprep.subr.mxu0 %v1063
        %1796 = vmatpush1.msra.mxu0 %v1062
        %1797 = vmatprep.subr.mxu0 %v1067
        %1798 = vmatpush1.msra.mxu0 %v1066
        %1799 = vmatprep.subr.mxu0 %v1071
        %1800 = vmatpush1.msra.mxu0 %v1070
        %1801 = vmatprep.subr.mxu0 %v1075
        %1802 = vmatpush1.msra.mxu0 %v1074
        %1803 = vmatprep.subr.mxu0 %v1079
        %1804 = vmatpush1.msra.mxu0 %v1078
        %1805 = vmatprep.subr.mxu0 %v1083
        %1806 = vmatpush1.msra.mxu0 %v1082
        %1807 = vmatprep.subr.mxu0 %v1087
        %1808 = vmatpush1.msra.mxu0 %v1086
        %1809 = vmatprep.subr.mxu0 %v1091
        %1810 = vmatpush1.msra.mxu0 %v1090
        %1811 = vmatprep.subr.mxu0 %v1095
        %1812 = vmatpush1.msra.mxu0 %v1094
        %1813 = vmatprep.subr.mxu0 %v1099
        %1814 = vmatpush1.msra.mxu0 %v1098
        %1815 = vmatprep.subr.mxu0 %v1103
        %1816 = vmatpush1.msra.mxu0 %v1102
        %1817 = vmatprep.subr.mxu0 %v1107
        %1818 = vmatpush1.msra.mxu0 %v1106
        %1819 = vmatprep.subr.mxu0 %v1111
        %1820 = vmatpush1.msra.mxu0 %v1110
        %1821 = vmatprep.subr.mxu0 %v1115
        %1822 = vmatpush1.msra.mxu0 %v1114
        %1823 = vmatprep.subr.mxu0 %v1119
        %1824 = vmatpush1.msra.mxu0 %v1118
        %1825 = vmatprep.subr.mxu0 %v1123
        %1826 = vmatpush1.msra.mxu0 %v1122
        %1827 = vmatprep.subr.mxu0 %v1127
        %1828 = vmatpush1.msra.mxu0 %v1126
        %1829 = vmatprep.subr.mxu0 %v1131
        %1830 = vmatpush1.msra.mxu0 %v1130
        %1831 = vmatprep.mubr.f32.mxu0 %v361
        %1832 = vmatmul.mubr.f32.gmra.mrb[0].mxu0 %v360
        %v1833 = vpop.f32.mrb[0].mxu0
        %v1834 = vadd.f32 %v1763, %v1833
        %v1835 = vpop.f32.mrb[0].mxu0
        %v1836 = vadd.f32 %v1765, %v1835
        %1837 = vdwg.mxu0
        %1838 = vmatprep.subr.mxu0 %v1135
        %1839 = vmatpush1.msra.mxu0 %v1134
        %1840 = vmatprep.subr.mxu0 %v1139
        %1841 = vmatpush1.msra.mxu0 %v1138
        %1842 = vmatprep.subr.mxu0 %v1143
        %1843 = vmatpush1.msra.mxu0 %v1142
        %1844 = vmatprep.subr.mxu0 %v1147
        %1845 = vmatpush1.msra.mxu0 %v1146
        %1846 = vmatprep.subr.mxu0 %v1151
        %1847 = vmatpush1.msra.mxu0 %v1150
        %1848 = vmatprep.subr.mxu0 %v1155
        %1849 = vmatpush1.msra.mxu0 %v1154
        %1850 = vmatprep.subr.mxu0 %v1159
        %1851 = vmatpush1.msra.mxu0 %v1158
        %1852 = vmatprep.subr.mxu0 %v1163
        %1853 = vmatpush1.msra.mxu0 %v1162
        %1854 = vmatprep.subr.mxu0 %v1167
        %1855 = vmatpush1.msra.mxu0 %v1166
        %1856 = vmatprep.subr.mxu0 %v1171
        %1857 = vmatpush1.msra.mxu0 %v1170
        %1858 = vmatprep.subr.mxu0 %v1175
        %1859 = vmatpush1.msra.mxu0 %v1174
        %1860 = vmatprep.subr.mxu0 %v1179
        %1861 = vmatpush1.msra.mxu0 %v1178
        %1862 = vmatprep.subr.mxu0 %v1183
        %1863 = vmatpush1.msra.mxu0 %v1182
        %1864 = vmatprep.subr.mxu0 %v1187
        %1865 = vmatpush1.msra.mxu0 %v1186
        %1866 = vmatprep.subr.mxu0 %v1191
        %1867 = vmatpush1.msra.mxu0 %v1190
        %1868 = vmatprep.subr.mxu0 %v1195
        %1869 = vmatpush1.msra.mxu0 %v1194
        %1870 = vmatprep.subr.mxu0 %v1199
        %1871 = vmatpush1.msra.mxu0 %v1198
        %1872 = vmatprep.subr.mxu0 %v1203
        %1873 = vmatpush1.msra.mxu0 %v1202
        %1874 = vmatprep.subr.mxu0 %v1207
        %1875 = vmatpush1.msra.mxu0 %v1206
        %1876 = vmatprep.subr.mxu0 %v1211
        %1877 = vmatpush1.msra.mxu0 %v1210
        %1878 = vmatprep.subr.mxu0 %v1215
        %1879 = vmatpush1.msra.mxu0 %v1214
        %1880 = vmatprep.subr.mxu0 %v1219
        %1881 = vmatpush1.msra.mxu0 %v1218
        %1882 = vmatprep.subr.mxu0 %v1223
        %1883 = vmatpush1.msra.mxu0 %v1222
        %1884 = vmatprep.subr.mxu0 %v1227
        %1885 = vmatpush1.msra.mxu0 %v1226
        %1886 = vmatprep.subr.mxu0 %v1231
        %1887 = vmatpush1.msra.mxu0 %v1230
        %1888 = vmatprep.subr.mxu0 %v1235
        %1889 = vmatpush1.msra.mxu0 %v1234
        %1890 = vmatprep.subr.mxu0 %v1239
        %1891 = vmatpush1.msra.mxu0 %v1238
        %1892 = vmatprep.subr.mxu0 %v1243
        %1893 = vmatpush1.msra.mxu0 %v1242
        %1894 = vmatprep.subr.mxu0 %v1247
        %1895 = vmatpush1.msra.mxu0 %v1246
        %1896 = vmatprep.subr.mxu0 %v1251
        %1897 = vmatpush1.msra.mxu0 %v1250
        %1898 = vmatprep.subr.mxu0 %v1255
        %1899 = vmatpush1.msra.mxu0 %v1254
        %1900 = vmatprep.subr.mxu0 %v1259
        %1901 = vmatpush1.msra.mxu0 %v1258
        %1902 = vmatprep.mubr.f32.mxu0 %v363
        %1903 = vmatmul.mubr.f32.gmra.mrb[0].mxu0 %v362
        %v1904 = vpop.f32.mrb[0].mxu0
        %v1905 = vadd.f32 %v1834, %v1904
        %v1906 = vpop.f32.mrb[0].mxu0
        %v1907 = vadd.f32 %v1836, %v1906
        %1908 = vdwg.mxu0
        %1909 = vmatprep.subr.mxu0 %v1263
        %1910 = vmatpush1.msra.mxu0 %v1262
        %1911 = vmatprep.subr.mxu0 %v1267
        %1912 = vmatpush1.msra.mxu0 %v1266
        %1913 = vmatprep.subr.mxu0 %v1271
        %1914 = vmatpush1.msra.mxu0 %v1270
        %1915 = vmatprep.subr.mxu0 %v1275
        %1916 = vmatpush1.msra.mxu0 %v1274
        %1917 = vmatprep.subr.mxu0 %v1279
        %1918 = vmatpush1.msra.mxu0 %v1278
        %1919 = vmatprep.subr.mxu0 %v1283
        %1920 = vmatpush1.msra.mxu0 %v1282
        %1921 = vmatprep.subr.mxu0 %v1287
        %1922 = vmatpush1.msra.mxu0 %v1286
        %1923 = vmatprep.subr.mxu0 %v1291
        %1924 = vmatpush1.msra.mxu0 %v1290
        %1925 = vmatprep.subr.mxu0 %v1295
        %1926 = vmatpush1.msra.mxu0 %v1294
        %1927 = vmatprep.subr.mxu0 %v1299
        %1928 = vmatpush1.msra.mxu0 %v1298
        %1929 = vmatprep.subr.mxu0 %v1303
        %1930 = vmatpush1.msra.mxu0 %v1302
        %1931 = vmatprep.subr.mxu0 %v1307
        %1932 = vmatpush1.msra.mxu0 %v1306
        %1933 = vmatprep.subr.mxu0 %v1311
        %1934 = vmatpush1.msra.mxu0 %v1310
        %1935 = vmatprep.subr.mxu0 %v1315
        %1936 = vmatpush1.msra.mxu0 %v1314
        %1937 = vmatprep.subr.mxu0 %v1319
        %1938 = vmatpush1.msra.mxu0 %v1318
        %1939 = vmatprep.subr.mxu0 %v1323
        %1940 = vmatpush1.msra.mxu0 %v1322
        %1941 = vmatprep.subr.mxu0 %v1327
        %1942 = vmatpush1.msra.mxu0 %v1326
        %1943 = vmatprep.subr.mxu0 %v1331
        %1944 = vmatpush1.msra.mxu0 %v1330
        %1945 = vmatprep.subr.mxu0 %v1335
        %1946 = vmatpush1.msra.mxu0 %v1334
        %1947 = vmatprep.subr.mxu0 %v1339
        %1948 = vmatpush1.msra.mxu0 %v1338
        %1949 = vmatprep.subr.mxu0 %v1343
        %1950 = vmatpush1.msra.mxu0 %v1342
        %1951 = vmatprep.subr.mxu0 %v1347
        %1952 = vmatpush1.msra.mxu0 %v1346
        %1953 = vmatprep.subr.mxu0 %v1351
        %1954 = vmatpush1.msra.mxu0 %v1350
        %1955 = vmatprep.subr.mxu0 %v1355
        %1956 = vmatpush1.msra.mxu0 %v1354
        %1957 = vmatprep.subr.mxu0 %v1359
        %1958 = vmatpush1.msra.mxu0 %v1358
        %1959 = vmatprep.subr.mxu0 %v1363
        %1960 = vmatpush1.msra.mxu0 %v1362
        %1961 = vmatprep.subr.mxu0 %v1367
        %1962 = vmatpush1.msra.mxu0 %v1366
        %1963 = vmatprep.subr.mxu0 %v1371
        %1964 = vmatpush1.msra.mxu0 %v1370
        %1965 = vmatprep.subr.mxu0 %v1375
        %1966 = vmatpush1.msra.mxu0 %v1374
        %1967 = vmatprep.subr.mxu0 %v1379
        %1968 = vmatpush1.msra.mxu0 %v1378
        %1969 = vmatprep.subr.mxu0 %v1383
        %1970 = vmatpush1.msra.mxu0 %v1382
        %1971 = vmatprep.subr.mxu0 %v1387
        %1972 = vmatpush1.msra.mxu0 %v1386
        %1973 = vmatprep.mubr.f32.mxu0 %v365
        %1974 = vmatmul.mubr.f32.gmra.mrb[0].mxu0 %v364
        %v1975 = vpop.f32.mrb[0].mxu0
        %v1976 = vadd.f32 %v1905, %v1975
        %v1977 = vpop.f32.mrb[0].mxu0
        %v1978 = vadd.f32 %v1907, %v1977
        %1979 = vdwg.mxu0
        %1980 = vmatprep.subr.mxu0 %v369
        %1981 = vmatpush1.msra.mxu0 %v368
        %1982 = vmatprep.subr.mxu0 %v373
        %1983 = vmatpush1.msra.mxu0 %v372
        %1984 = vmatprep.subr.mxu0 %v377
        %1985 = vmatpush1.msra.mxu0 %v376
        %1986 = vmatprep.subr.mxu0 %v381
        %1987 = vmatpush1.msra.mxu0 %v380
        %1988 = vmatprep.subr.mxu0 %v385
        %1989 = vmatpush1.msra.mxu0 %v384
        %1990 = vmatprep.subr.mxu0 %v389
        %1991 = vmatpush1.msra.mxu0 %v388
        %1992 = vmatprep.subr.mxu0 %v393
        %1993 = vmatpush1.msra.mxu0 %v392
        %1994 = vmatprep.subr.mxu0 %v397
        %1995 = vmatpush1.msra.mxu0 %v396
        %1996 = vmatprep.subr.mxu0 %v401
        %1997 = vmatpush1.msra.mxu0 %v400
        %1998 = vmatprep.subr.mxu0 %v405
        %1999 = vmatpush1.msra.mxu0 %v404
        %2000 = vmatprep.subr.mxu0 %v409
        %2001 = vmatpush1.msra.mxu0 %v408
        %2002 = vmatprep.subr.mxu0 %v413
        %2003 = vmatpush1.msra.mxu0 %v412
        %2004 = vmatprep.subr.mxu0 %v417
        %2005 = vmatpush1.msra.mxu0 %v416
        %2006 = vmatprep.subr.mxu0 %v421
        %2007 = vmatpush1.msra.mxu0 %v420
        %2008 = vmatprep.subr.mxu0 %v425
        %2009 = vmatpush1.msra.mxu0 %v424
        %2010 = vmatprep.subr.mxu0 %v429
        %2011 = vmatpush1.msra.mxu0 %v428
        %2012 = vmatprep.subr.mxu0 %v433
        %2013 = vmatpush1.msra.mxu0 %v432
        %2014 = vmatprep.subr.mxu0 %v437
        %2015 = vmatpush1.msra.mxu0 %v436
        %2016 = vmatprep.subr.mxu0 %v441
        %2017 = vmatpush1.msra.mxu0 %v440
        %2018 = vmatprep.subr.mxu0 %v445
        %2019 = vmatpush1.msra.mxu0 %v444
        %2020 = vmatprep.subr.mxu0 %v449
        %2021 = vmatpush1.msra.mxu0 %v448
        %2022 = vmatprep.subr.mxu0 %v453
        %2023 = vmatpush1.msra.mxu0 %v452
        %2024 = vmatprep.subr.mxu0 %v457
        %2025 = vmatpush1.msra.mxu0 %v456
        %2026 = vmatprep.subr.mxu0 %v461
        %2027 = vmatpush1.msra.mxu0 %v460
        %2028 = vmatprep.subr.mxu0 %v465
        %2029 = vmatpush1.msra.mxu0 %v464
        %2030 = vmatprep.subr.mxu0 %v469
        %2031 = vmatpush1.msra.mxu0 %v468
        %2032 = vmatprep.subr.mxu0 %v473
        %2033 = vmatpush1.msra.mxu0 %v472
        %2034 = vmatprep.subr.mxu0 %v477
        %2035 = vmatpush1.msra.mxu0 %v476
        %2036 = vmatprep.subr.mxu0 %v481
        %2037 = vmatpush1.msra.mxu0 %v480
        %2038 = vmatprep.subr.mxu0 %v485
        %2039 = vmatpush1.msra.mxu0 %v484
        %2040 = vmatprep.subr.mxu0 %v489
        %2041 = vmatpush1.msra.mxu0 %v488
        %2042 = vmatprep.subr.mxu0 %v493
        %2043 = vmatpush1.msra.mxu0 %v492
        %2044 = vmatprep.mubr.f32.mxu0 %v351
        %2045 = vmatmul.mubr.f32.gmra.mrb[0].mxu0 %v350
        %v2046 = vpop.f32.mrb[0].mxu0
        %v2047 = vadd.f32 %v1403, %v2046
        %v2048 = vpop.f32.mrb[0].mxu0
        %v2049 = vadd.f32 %v1407, %v2048
        %2050 = vdwg.mxu0
        %2051 = vmatprep.subr.mxu0 %v497
        %2052 = vmatpush1.msra.mxu0 %v496
        %2053 = vmatprep.subr.mxu0 %v501
        %2054 = vmatpush1.msra.mxu0 %v500
        %2055 = vmatprep.subr.mxu0 %v505
        %2056 = vmatpush1.msra.mxu0 %v504
        %2057 = vmatprep.subr.mxu0 %v509
        %2058 = vmatpush1.msra.mxu0 %v508
        %2059 = vmatprep.subr.mxu0 %v513
        %2060 = vmatpush1.msra.mxu0 %v512
        %2061 = vmatprep.subr.mxu0 %v517
        %2062 = vmatpush1.msra.mxu0 %v516
        %2063 = vmatprep.subr.mxu0 %v521
        %2064 = vmatpush1.msra.mxu0 %v520
        %2065 = vmatprep.subr.mxu0 %v525
        %2066 = vmatpush1.msra.mxu0 %v524
        %2067 = vmatprep.subr.mxu0 %v529
        %2068 = vmatpush1.msra.mxu0 %v528
        %2069 = vmatprep.subr.mxu0 %v533
        %2070 = vmatpush1.msra.mxu0 %v532
        %2071 = vmatprep.subr.mxu0 %v537
        %2072 = vmatpush1.msra.mxu0 %v536
        %2073 = vmatprep.subr.mxu0 %v541
        %2074 = vmatpush1.msra.mxu0 %v540
        %2075 = vmatprep.subr.mxu0 %v545
        %2076 = vmatpush1.msra.mxu0 %v544
        %2077 = vmatprep.subr.mxu0 %v549
        %2078 = vmatpush1.msra.mxu0 %v548
        %2079 = vmatprep.subr.mxu0 %v553
        %2080 = vmatpush1.msra.mxu0 %v552
        %2081 = vmatprep.subr.mxu0 %v557
        %2082 = vmatpush1.msra.mxu0 %v556
        %2083 = vmatprep.subr.mxu0 %v561
        %2084 = vmatpush1.msra.mxu0 %v560
        %2085 = vmatprep.subr.mxu0 %v565
        %2086 = vmatpush1.msra.mxu0 %v564
        %2087 = vmatprep.subr.mxu0 %v569
        %2088 = vmatpush1.msra.mxu0 %v568
        %2089 = vmatprep.subr.mxu0 %v573
        %2090 = vmatpush1.msra.mxu0 %v572
        %2091 = vmatprep.subr.mxu0 %v577
        %2092 = vmatpush1.msra.mxu0 %v576
        %2093 = vmatprep.subr.mxu0 %v581
        %2094 = vmatpush1.msra.mxu0 %v580
        %2095 = vmatprep.subr.mxu0 %v585
        %2096 = vmatpush1.msra.mxu0 %v584
        %2097 = vmatprep.subr.mxu0 %v589
        %2098 = vmatpush1.msra.mxu0 %v588
        %2099 = vmatprep.subr.mxu0 %v593
        %2100 = vmatpush1.msra.mxu0 %v592
        %2101 = vmatprep.subr.mxu0 %v597
        %2102 = vmatpush1.msra.mxu0 %v596
        %2103 = vmatprep.subr.mxu0 %v601
        %2104 = vmatpush1.msra.mxu0 %v600
        %2105 = vmatprep.subr.mxu0 %v605
        %2106 = vmatpush1.msra.mxu0 %v604
        %2107 = vmatprep.subr.mxu0 %v609
        %2108 = vmatpush1.msra.mxu0 %v608
        %2109 = vmatprep.subr.mxu0 %v613
        %2110 = vmatpush1.msra.mxu0 %v612
        %2111 = vmatprep.subr.mxu0 %v617
        %2112 = vmatpush1.msra.mxu0 %v616
        %2113 = vmatprep.subr.mxu0 %v621
        %2114 = vmatpush1.msra.mxu0 %v620
        %2115 = vmatprep.mubr.f32.mxu0 %v353
        %2116 = vmatmul.mubr.f32.gmra.mrb[0].mxu0 %v352
        %v2117 = vpop.f32.mrb[0].mxu0
        %v2118 = vadd.f32 %v2047, %v2117
        %v2119 = vpop.f32.mrb[0].mxu0
        %v2120 = vadd.f32 %v2049, %v2119
        %2121 = vdwg.mxu0
        %2122 = vmatprep.subr.mxu0 %v625
        %2123 = vmatpush1.msra.mxu0 %v624
        %2124 = vmatprep.subr.mxu0 %v629
        %2125 = vmatpush1.msra.mxu0 %v628
        %2126 = vmatprep.subr.mxu0 %v633
        %2127 = vmatpush1.msra.mxu0 %v632
        %2128 = vmatprep.subr.mxu0 %v637
        %2129 = vmatpush1.msra.mxu0 %v636
        %2130 = vmatprep.subr.mxu0 %v641
        %2131 = vmatpush1.msra.mxu0 %v640
        %2132 = vmatprep.subr.mxu0 %v645
        %2133 = vmatpush1.msra.mxu0 %v644
        %2134 = vmatprep.subr.mxu0 %v649
        %2135 = vmatpush1.msra.mxu0 %v648
        %2136 = vmatprep.subr.mxu0 %v653
        %2137 = vmatpush1.msra.mxu0 %v652
        %2138 = vmatprep.subr.mxu0 %v657
        %2139 = vmatpush1.msra.mxu0 %v656
        %2140 = vmatprep.subr.mxu0 %v661
        %2141 = vmatpush1.msra.mxu0 %v660
        %2142 = vmatprep.subr.mxu0 %v665
        %2143 = vmatpush1.msra.mxu0 %v664
        %2144 = vmatprep.subr.mxu0 %v669
        %2145 = vmatpush1.msra.mxu0 %v668
        %2146 = vmatprep.subr.mxu0 %v673
        %2147 = vmatpush1.msra.mxu0 %v672
        %2148 = vmatprep.subr.mxu0 %v677
        %2149 = vmatpush1.msra.mxu0 %v676
        %2150 = vmatprep.subr.mxu0 %v681
        %2151 = vmatpush1.msra.mxu0 %v680
        %2152 = vmatprep.subr.mxu0 %v685
        %2153 = vmatpush1.msra.mxu0 %v684
        %2154 = vmatprep.subr.mxu0 %v689
        %2155 = vmatpush1.msra.mxu0 %v688
        %2156 = vmatprep.subr.mxu0 %v693
        %2157 = vmatpush1.msra.mxu0 %v692
        %2158 = vmatprep.subr.mxu0 %v697
        %2159 = vmatpush1.msra.mxu0 %v696
        %2160 = vmatprep.subr.mxu0 %v701
        %2161 = vmatpush1.msra.mxu0 %v700
        %2162 = vmatprep.subr.mxu0 %v705
        %2163 = vmatpush1.msra.mxu0 %v704
        %2164 = vmatprep.subr.mxu0 %v709
        %2165 = vmatpush1.msra.mxu0 %v708
        %2166 = vmatprep.subr.mxu0 %v713
        %2167 = vmatpush1.msra.mxu0 %v712
        %2168 = vmatprep.subr.mxu0 %v717
        %2169 = vmatpush1.msra.mxu0 %v716
        %2170 = vmatprep.subr.mxu0 %v721
        %2171 = vmatpush1.msra.mxu0 %v720
        %2172 = vmatprep.subr.mxu0 %v725
        %2173 = vmatpush1.msra.mxu0 %v724
        %2174 = vmatprep.subr.mxu0 %v729
        %2175 = vmatpush1.msra.mxu0 %v728
        %2176 = vmatprep.subr.mxu0 %v733
        %2177 = vmatpush1.msra.mxu0 %v732
        %2178 = vmatprep.subr.mxu0 %v737
        %2179 = vmatpush1.msra.mxu0 %v736
        %2180 = vmatprep.subr.mxu0 %v741
        %2181 = vmatpush1.msra.mxu0 %v740
        %2182 = vmatprep.subr.mxu0 %v745
        %2183 = vmatpush1.msra.mxu0 %v744
        %2184 = vmatprep.subr.mxu0 %v749
        %2185 = vmatpush1.msra.mxu0 %v748
        %2186 = vmatprep.mubr.f32.mxu0 %v355
        %2187 = vmatmul.mubr.f32.gmra.mrb[0].mxu0 %v354
        %v2188 = vpop.f32.mrb[0].mxu0
        %v2189 = vadd.f32 %v2118, %v2188
        %v2190 = vpop.f32.mrb[0].mxu0
        %v2191 = vadd.f32 %v2120, %v2190
        %2192 = vdwg.mxu0
        %2193 = vmatprep.subr.mxu0 %v753
        %2194 = vmatpush1.msra.mxu0 %v752
        %2195 = vmatprep.subr.mxu0 %v757
        %2196 = vmatpush1.msra.mxu0 %v756
        %2197 = vmatprep.subr.mxu0 %v761
        %2198 = vmatpush1.msra.mxu0 %v760
        %2199 = vmatprep.subr.mxu0 %v765
        %2200 = vmatpush1.msra.mxu0 %v764
        %2201 = vmatprep.subr.mxu0 %v769
        %2202 = vmatpush1.msra.mxu0 %v768
        %2203 = vmatprep.subr.mxu0 %v773
        %2204 = vmatpush1.msra.mxu0 %v772
        %2205 = vmatprep.subr.mxu0 %v777
        %2206 = vmatpush1.msra.mxu0 %v776
        %2207 = vmatprep.subr.mxu0 %v781
        %2208 = vmatpush1.msra.mxu0 %v780
        %2209 = vmatprep.subr.mxu0 %v785
        %2210 = vmatpush1.msra.mxu0 %v784
        %2211 = vmatprep.subr.mxu0 %v789
        %2212 = vmatpush1.msra.mxu0 %v788
        %2213 = vmatprep.subr.mxu0 %v793
        %2214 = vmatpush1.msra.mxu0 %v792
        %2215 = vmatprep.subr.mxu0 %v797
        %2216 = vmatpush1.msra.mxu0 %v796
        %2217 = vmatprep.subr.mxu0 %v801
        %2218 = vmatpush1.msra.mxu0 %v800
        %2219 = vmatprep.subr.mxu0 %v805
        %2220 = vmatpush1.msra.mxu0 %v804
        %2221 = vmatprep.subr.mxu0 %v809
        %2222 = vmatpush1.msra.mxu0 %v808
        %2223 = vmatprep.subr.mxu0 %v813
        %2224 = vmatpush1.msra.mxu0 %v812
        %2225 = vmatprep.subr.mxu0 %v817
        %2226 = vmatpush1.msra.mxu0 %v816
        %2227 = vmatprep.subr.mxu0 %v821
        %2228 = vmatpush1.msra.mxu0 %v820
        %2229 = vmatprep.subr.mxu0 %v825
        %2230 = vmatpush1.msra.mxu0 %v824
        %2231 = vmatprep.subr.mxu0 %v829
        %2232 = vmatpush1.msra.mxu0 %v828
        %2233 = vmatprep.subr.mxu0 %v833
        %2234 = vmatpush1.msra.mxu0 %v832
        %2235 = vmatprep.subr.mxu0 %v837
        %2236 = vmatpush1.msra.mxu0 %v836
        %2237 = vmatprep.subr.mxu0 %v841
        %2238 = vmatpush1.msra.mxu0 %v840
        %2239 = vmatprep.subr.mxu0 %v845
        %2240 = vmatpush1.msra.mxu0 %v844
        %2241 = vmatprep.subr.mxu0 %v849
        %2242 = vmatpush1.msra.mxu0 %v848
        %2243 = vmatprep.subr.mxu0 %v853
        %2244 = vmatpush1.msra.mxu0 %v852
        %2245 = vmatprep.subr.mxu0 %v857
        %2246 = vmatpush1.msra.mxu0 %v856
        %2247 = vmatprep.subr.mxu0 %v861
        %2248 = vmatpush1.msra.mxu0 %v860
        %2249 = vmatprep.subr.mxu0 %v865
        %2250 = vmatpush1.msra.mxu0 %v864
        %2251 = vmatprep.subr.mxu0 %v869
        %2252 = vmatpush1.msra.mxu0 %v868
        %2253 = vmatprep.subr.mxu0 %v873
        %2254 = vmatpush1.msra.mxu0 %v872
        %2255 = vmatprep.subr.mxu0 %v877
        %2256 = vmatpush1.msra.mxu0 %v876
        %2257 = vmatprep.mubr.f32.mxu0 %v357
        %2258 = vmatmul.mubr.f32.gmra.mrb[0].mxu0 %v356
        %v2259 = vpop.f32.mrb[0].mxu0
        %v2260 = vadd.f32 %v2189, %v2259
        %v2261 = vpop.f32.mrb[0].mxu0
        %v2262 = vadd.f32 %v2191, %v2261
        %2263 = vdwg.mxu0
        %2264 = vmatprep.subr.mxu0 %v881
        %2265 = vmatpush1.msra.mxu0 %v880
        %2266 = vmatprep.subr.mxu0 %v885
        %2267 = vmatpush1.msra.mxu0 %v884
        %2268 = vmatprep.subr.mxu0 %v889
        %2269 = vmatpush1.msra.mxu0 %v888
        %2270 = vmatprep.subr.mxu0 %v893
        %2271 = vmatpush1.msra.mxu0 %v892
        %2272 = vmatprep.subr.mxu0 %v897
        %2273 = vmatpush1.msra.mxu0 %v896
        %2274 = vmatprep.subr.mxu0 %v901
        %2275 = vmatpush1.msra.mxu0 %v900
        %2276 = vmatprep.subr.mxu0 %v905
        %2277 = vmatpush1.msra.mxu0 %v904
        %2278 = vmatprep.subr.mxu0 %v909
        %2279 = vmatpush1.msra.mxu0 %v908
        %2280 = vmatprep.subr.mxu0 %v913
        %2281 = vmatpush1.msra.mxu0 %v912
        %2282 = vmatprep.subr.mxu0 %v917
        %2283 = vmatpush1.msra.mxu0 %v916
        %2284 = vmatprep.subr.mxu0 %v921
        %2285 = vmatpush1.msra.mxu0 %v920
        %2286 = vmatprep.subr.mxu0 %v925
        %2287 = vmatpush1.msra.mxu0 %v924
        %2288 = vmatprep.subr.mxu0 %v929
        %2289 = vmatpush1.msra.mxu0 %v928
        %2290 = vmatprep.subr.mxu0 %v933
        %2291 = vmatpush1.msra.mxu0 %v932
        %2292 = vmatprep.subr.mxu0 %v937
        %2293 = vmatpush1.msra.mxu0 %v936
        %2294 = vmatprep.subr.mxu0 %v941
        %2295 = vmatpush1.msra.mxu0 %v940
        %2296 = vmatprep.subr.mxu0 %v945
        %2297 = vmatpush1.msra.mxu0 %v944
        %2298 = vmatprep.subr.mxu0 %v949
        %2299 = vmatpush1.msra.mxu0 %v948
        %2300 = vmatprep.subr.mxu0 %v953
        %2301 = vmatpush1.msra.mxu0 %v952
        %2302 = vmatprep.subr.mxu0 %v957
        %2303 = vmatpush1.msra.mxu0 %v956
        %2304 = vmatprep.subr.mxu0 %v961
        %2305 = vmatpush1.msra.mxu0 %v960
        %2306 = vmatprep.subr.mxu0 %v965
        %2307 = vmatpush1.msra.mxu0 %v964
        %2308 = vmatprep.subr.mxu0 %v969
        %2309 = vmatpush1.msra.mxu0 %v968
        %2310 = vmatprep.subr.mxu0 %v973
        %2311 = vmatpush1.msra.mxu0 %v972
        %2312 = vmatprep.subr.mxu0 %v977
        %2313 = vmatpush1.msra.mxu0 %v976
        %2314 = vmatprep.subr.mxu0 %v981
        %2315 = vmatpush1.msra.mxu0 %v980
        %2316 = vmatprep.subr.mxu0 %v985
        %2317 = vmatpush1.msra.mxu0 %v984
        %2318 = vmatprep.subr.mxu0 %v989
        %2319 = vmatpush1.msra.mxu0 %v988
        %2320 = vmatprep.subr.mxu0 %v993
        %2321 = vmatpush1.msra.mxu0 %v992
        %2322 = vmatprep.subr.mxu0 %v997
        %2323 = vmatpush1.msra.mxu0 %v996
        %2324 = vmatprep.subr.mxu0 %v1001
        %2325 = vmatpush1.msra.mxu0 %v1000
        %2326 = vmatprep.subr.mxu0 %v1005
        %2327 = vmatpush1.msra.mxu0 %v1004
        %2328 = vmatprep.mubr.f32.mxu0 %v359
        %2329 = vmatmul.mubr.f32.gmra.mrb[0].mxu0 %v358
        %v2330 = vpop.f32.mrb[0].mxu0
        %v2331 = vadd.f32 %v2260, %v2330
        %v2332 = vpop.f32.mrb[0].mxu0
        %v2333 = vadd.f32 %v2262, %v2332
        %2334 = vdwg.mxu0
        %2335 = vmatprep.subr.mxu0 %v1009
        %2336 = vmatpush1.msra.mxu0 %v1008
        %2337 = vmatprep.subr.mxu0 %v1013
        %2338 = vmatpush1.msra.mxu0 %v1012
        %2339 = vmatprep.subr.mxu0 %v1017
        %2340 = vmatpush1.msra.mxu0 %v1016
        %2341 = vmatprep.subr.mxu0 %v1021
        %2342 = vmatpush1.msra.mxu0 %v1020
        %2343 = vmatprep.subr.mxu0 %v1025
        %2344 = vmatpush1.msra.mxu0 %v1024
        %2345 = vmatprep.subr.mxu0 %v1029
        %2346 = vmatpush1.msra.mxu0 %v1028
        %2347 = vmatprep.subr.mxu0 %v1033
        %2348 = vmatpush1.msra.mxu0 %v1032
        %2349 = vmatprep.subr.mxu0 %v1037
        %2350 = vmatpush1.msra.mxu0 %v1036
        %2351 = vmatprep.subr.mxu0 %v1041
        %2352 = vmatpush1.msra.mxu0 %v1040
        %2353 = vmatprep.subr.mxu0 %v1045
        %2354 = vmatpush1.msra.mxu0 %v1044
        %2355 = vmatprep.subr.mxu0 %v1049
        %2356 = vmatpush1.msra.mxu0 %v1048
        %2357 = vmatprep.subr.mxu0 %v1053
        %2358 = vmatpush1.msra.mxu0 %v1052
        %2359 = vmatprep.subr.mxu0 %v1057
        %2360 = vmatpush1.msra.mxu0 %v1056
        %2361 = vmatprep.subr.mxu0 %v1061
        %2362 = vmatpush1.msra.mxu0 %v1060
        %2363 = vmatprep.subr.mxu0 %v1065
        %2364 = vmatpush1.msra.mxu0 %v1064
        %2365 = vmatprep.subr.mxu0 %v1069
        %2366 = vmatpush1.msra.mxu0 %v1068
        %2367 = vmatprep.subr.mxu0 %v1073
        %2368 = vmatpush1.msra.mxu0 %v1072
        %2369 = vmatprep.subr.mxu0 %v1077
        %2370 = vmatpush1.msra.mxu0 %v1076
        %2371 = vmatprep.subr.mxu0 %v1081
        %2372 = vmatpush1.msra.mxu0 %v1080
        %2373 = vmatprep.subr.mxu0 %v1085
        %2374 = vmatpush1.msra.mxu0 %v1084
        %2375 = vmatprep.subr.mxu0 %v1089
        %2376 = vmatpush1.msra.mxu0 %v1088
        %2377 = vmatprep.subr.mxu0 %v1093
        %2378 = vmatpush1.msra.mxu0 %v1092
        %2379 = vmatprep.subr.mxu0 %v1097
        %2380 = vmatpush1.msra.mxu0 %v1096
        %2381 = vmatprep.subr.mxu0 %v1101
        %2382 = vmatpush1.msra.mxu0 %v1100
        %2383 = vmatprep.subr.mxu0 %v1105
        %2384 = vmatpush1.msra.mxu0 %v1104
        %2385 = vmatprep.subr.mxu0 %v1109
        %2386 = vmatpush1.msra.mxu0 %v1108
        %2387 = vmatprep.subr.mxu0 %v1113
        %2388 = vmatpush1.msra.mxu0 %v1112
        %2389 = vmatprep.subr.mxu0 %v1117
        %2390 = vmatpush1.msra.mxu0 %v1116
        %2391 = vmatprep.subr.mxu0 %v1121
        %2392 = vmatpush1.msra.mxu0 %v1120
        %2393 = vmatprep.subr.mxu0 %v1125
        %2394 = vmatpush1.msra.mxu0 %v1124
        %2395 = vmatprep.subr.mxu0 %v1129
        %2396 = vmatpush1.msra.mxu0 %v1128
        %2397 = vmatprep.subr.mxu0 %v1133
        %2398 = vmatpush1.msra.mxu0 %v1132
        %2399 = vmatprep.mubr.f32.mxu0 %v361
        %2400 = vmatmul.mubr.f32.gmra.mrb[0].mxu0 %v360
        %v2401 = vpop.f32.mrb[0].mxu0
        %v2402 = vadd.f32 %v2331, %v2401
        %v2403 = vpop.f32.mrb[0].mxu0
        %v2404 = vadd.f32 %v2333, %v2403
        %2405 = vdwg.mxu0
        %2406 = vmatprep.subr.mxu0 %v1137
        %2407 = vmatpush1.msra.mxu0 %v1136
        %2408 = vmatprep.subr.mxu0 %v1141
        %2409 = vmatpush1.msra.mxu0 %v1140
        %2410 = vmatprep.subr.mxu0 %v1145
        %2411 = vmatpush1.msra.mxu0 %v1144
        %2412 = vmatprep.subr.mxu0 %v1149
        %2413 = vmatpush1.msra.mxu0 %v1148
        %2414 = vmatprep.subr.mxu0 %v1153
        %2415 = vmatpush1.msra.mxu0 %v1152
        %2416 = vmatprep.subr.mxu0 %v1157
        %2417 = vmatpush1.msra.mxu0 %v1156
        %2418 = vmatprep.subr.mxu0 %v1161
        %2419 = vmatpush1.msra.mxu0 %v1160
        %2420 = vmatprep.subr.mxu0 %v1165
        %2421 = vmatpush1.msra.mxu0 %v1164
        %2422 = vmatprep.subr.mxu0 %v1169
        %2423 = vmatpush1.msra.mxu0 %v1168
        %2424 = vmatprep.subr.mxu0 %v1173
        %2425 = vmatpush1.msra.mxu0 %v1172
        %2426 = vmatprep.subr.mxu0 %v1177
        %2427 = vmatpush1.msra.mxu0 %v1176
        %2428 = vmatprep.subr.mxu0 %v1181
        %2429 = vmatpush1.msra.mxu0 %v1180
        %2430 = vmatprep.subr.mxu0 %v1185
        %2431 = vmatpush1.msra.mxu0 %v1184
        %2432 = vmatprep.subr.mxu0 %v1189
        %2433 = vmatpush1.msra.mxu0 %v1188
        %2434 = vmatprep.subr.mxu0 %v1193
        %2435 = vmatpush1.msra.mxu0 %v1192
        %2436 = vmatprep.subr.mxu0 %v1197
        %2437 = vmatpush1.msra.mxu0 %v1196
        %2438 = vmatprep.subr.mxu0 %v1201
        %2439 = vmatpush1.msra.mxu0 %v1200
        %2440 = vmatprep.subr.mxu0 %v1205
        %2441 = vmatpush1.msra.mxu0 %v1204
        %2442 = vmatprep.subr.mxu0 %v1209
        %2443 = vmatpush1.msra.mxu0 %v1208
        %2444 = vmatprep.subr.mxu0 %v1213
        %2445 = vmatpush1.msra.mxu0 %v1212
        %2446 = vmatprep.subr.mxu0 %v1217
        %2447 = vmatpush1.msra.mxu0 %v1216
        %2448 = vmatprep.subr.mxu0 %v1221
        %2449 = vmatpush1.msra.mxu0 %v1220
        %2450 = vmatprep.subr.mxu0 %v1225
        %2451 = vmatpush1.msra.mxu0 %v1224
        %2452 = vmatprep.subr.mxu0 %v1229
        %2453 = vmatpush1.msra.mxu0 %v1228
        %2454 = vmatprep.subr.mxu0 %v1233
        %2455 = vmatpush1.msra.mxu0 %v1232
        %2456 = vmatprep.subr.mxu0 %v1237
        %2457 = vmatpush1.msra.mxu0 %v1236
        %2458 = vmatprep.subr.mxu0 %v1241
        %2459 = vmatpush1.msra.mxu0 %v1240
        %2460 = vmatprep.subr.mxu0 %v1245
        %2461 = vmatpush1.msra.mxu0 %v1244
        %2462 = vmatprep.subr.mxu0 %v1249
        %2463 = vmatpush1.msra.mxu0 %v1248
        %2464 = vmatprep.subr.mxu0 %v1253
        %2465 = vmatpush1.msra.mxu0 %v1252
        %2466 = vmatprep.subr.mxu0 %v1257
        %2467 = vmatpush1.msra.mxu0 %v1256
        %2468 = vmatprep.subr.mxu0 %v1261
        %2469 = vmatpush1.msra.mxu0 %v1260
        %2470 = vmatprep.mubr.f32.mxu0 %v363
        %2471 = vmatmul.mubr.f32.gmra.mrb[0].mxu0 %v362
        %v2472 = vpop.f32.mrb[0].mxu0
        %v2473 = vadd.f32 %v2402, %v2472
        %v2474 = vpop.f32.mrb[0].mxu0
        %v2475 = vadd.f32 %v2404, %v2474
        %2476 = vdwg.mxu0
        %2477 = vmatprep.subr.mxu0 %v1265
        %2478 = vmatpush1.msra.mxu0 %v1264
        %2479 = vmatprep.subr.mxu0 %v1269
        %2480 = vmatpush1.msra.mxu0 %v1268
        %2481 = vmatprep.subr.mxu0 %v1273
        %2482 = vmatpush1.msra.mxu0 %v1272
        %2483 = vmatprep.subr.mxu0 %v1277
        %2484 = vmatpush1.msra.mxu0 %v1276
        %2485 = vmatprep.subr.mxu0 %v1281
        %2486 = vmatpush1.msra.mxu0 %v1280
        %2487 = vmatprep.subr.mxu0 %v1285
        %2488 = vmatpush1.msra.mxu0 %v1284
        %2489 = vmatprep.subr.mxu0 %v1289
        %2490 = vmatpush1.msra.mxu0 %v1288
        %2491 = vmatprep.subr.mxu0 %v1293
        %2492 = vmatpush1.msra.mxu0 %v1292
        %2493 = vmatprep.subr.mxu0 %v1297
        %2494 = vmatpush1.msra.mxu0 %v1296
        %2495 = vmatprep.subr.mxu0 %v1301
        %2496 = vmatpush1.msra.mxu0 %v1300
        %2497 = vmatprep.subr.mxu0 %v1305
        %2498 = vmatpush1.msra.mxu0 %v1304
        %2499 = vmatprep.subr.mxu0 %v1309
        %2500 = vmatpush1.msra.mxu0 %v1308
        %2501 = vmatprep.subr.mxu0 %v1313
        %2502 = vmatpush1.msra.mxu0 %v1312
        %2503 = vmatprep.subr.mxu0 %v1317
        %2504 = vmatpush1.msra.mxu0 %v1316
        %2505 = vmatprep.subr.mxu0 %v1321
        %2506 = vmatpush1.msra.mxu0 %v1320
        %2507 = vmatprep.subr.mxu0 %v1325
        %2508 = vmatpush1.msra.mxu0 %v1324
        %2509 = vmatprep.subr.mxu0 %v1329
        %2510 = vmatpush1.msra.mxu0 %v1328
        %2511 = vmatprep.subr.mxu0 %v1333
        %2512 = vmatpush1.msra.mxu0 %v1332
        %2513 = vmatprep.subr.mxu0 %v1337
        %2514 = vmatpush1.msra.mxu0 %v1336
        %2515 = vmatprep.subr.mxu0 %v1341
        %2516 = vmatpush1.msra.mxu0 %v1340
        %2517 = vmatprep.subr.mxu0 %v1345
        %2518 = vmatpush1.msra.mxu0 %v1344
        %2519 = vmatprep.subr.mxu0 %v1349
        %2520 = vmatpush1.msra.mxu0 %v1348
        %2521 = vmatprep.subr.mxu0 %v1353
        %2522 = vmatpush1.msra.mxu0 %v1352
        %2523 = vmatprep.subr.mxu0 %v1357
        %2524 = vmatpush1.msra.mxu0 %v1356
        %2525 = vmatprep.subr.mxu0 %v1361
        %2526 = vmatpush1.msra.mxu0 %v1360
        %2527 = vmatprep.subr.mxu0 %v1365
        %2528 = vmatpush1.msra.mxu0 %v1364
        %2529 = vmatprep.subr.mxu0 %v1369
        %2530 = vmatpush1.msra.mxu0 %v1368
        %2531 = vmatprep.subr.mxu0 %v1373
        %2532 = vmatpush1.msra.mxu0 %v1372
        %2533 = vmatprep.subr.mxu0 %v1377
        %2534 = vmatpush1.msra.mxu0 %v1376
        %2535 = vmatprep.subr.mxu0 %v1381
        %2536 = vmatpush1.msra.mxu0 %v1380
        %2537 = vmatprep.subr.mxu0 %v1385
        %2538 = vmatpush1.msra.mxu0 %v1384
        %2539 = vmatprep.subr.mxu0 %v1389
        %2540 = vmatpush1.msra.mxu0 %v1388
        %2541 = vmatprep.mubr.f32.mxu0 %v365
        %2542 = vmatmul.mubr.f32.gmra.mrb[0].mxu0 %v364
        %v2543 = vpop.f32.mrb[0].mxu0
        %v2544 = vadd.f32 %v2473, %v2543
        %v2545 = vpop.f32.mrb[0].mxu0
        %v2546 = vadd.f32 %v2475, %v2545
        %2547 = vdwg.mxu0
        %v2548 = vmax.f32 %v1976, 0.0
        %v2549 = vmax.f32 %v1978, 0.0
        %v2550 = vmax.f32 %v2544, 0.0
        %v2551 = vmax.f32 %v2546, 0.0
        %v2552 = vld [vmem:[%s334] sm:$0xff]
        %v2553 = vld [vmem:[%s334 + $0x8] sm:$0xff]
        %v2554 = vld [vmem:[%s300] sm:$0xff]
        %v2555 = vld [vmem:[%s300 + $0x8] sm:$0xff]
        %v2556 = vld [vmem:[%s300 + $0x10] sm:$0xff]
        %v2557 = vld [vmem:[%s300 + $0x18] sm:$0xff]
        %v2558 = vld [vmem:[%s300 + $0x20] sm:$0xff]
        %v2559 = vld [vmem:[%s300 + $0x28] sm:$0xff]
        %v2560 = vld [vmem:[%s300 + $0x30] sm:$0xff]
        %v2561 = vld [vmem:[%s300 + $0x38] sm:$0xff]
        %v2562 = vld [vmem:[%s300 + $0x40] sm:$0xff]
        %v2563 = vld [vmem:[%s300 + $0x48] sm:$0xff]
        %v2564 = vld [vmem:[%s300 + $0x50] sm:$0xff]
        %v2565 = vld [vmem:[%s300 + $0x58] sm:$0xff]
        %v2566 = vld [vmem:[%s300 + $0x60] sm:$0xff]
        %v2567 = vld [vmem:[%s300 + $0x68] sm:$0xff]
        %v2568 = vld [vmem:[%s300 + $0x70] sm:$0xff]
        %v2569 = vld [vmem:[%s300 + $0x78] sm:$0xff]
        %v2570 = vld [vmem:[%s300 + $0x80] sm:$0xff]
        %v2571 = vld [vmem:[%s300 + $0x88] sm:$0xff]
        %v2572 = vld [vmem:[%s300 + $0x90] sm:$0xff]
        %v2573 = vld [vmem:[%s300 + $0x98] sm:$0xff]
        %v2574 = vld [vmem:[%s300 + $0xa0] sm:$0xff]
        %v2575 = vld [vmem:[%s300 + $0xa8] sm:$0xff]
        %v2576 = vld [vmem:[%s300 + $0xb0] sm:$0xff]
        %v2577 = vld [vmem:[%s300 + $0xb8] sm:$0xff]
        %v2578 = vld [vmem:[%s300 + $0xc0] sm:$0xff]
        %v2579 = vld [vmem:[%s300 + $0xc8] sm:$0xff]
        %v2580 = vld [vmem:[%s300 + $0xd0] sm:$0xff]
        %v2581 = vld [vmem:[%s300 + $0xd8] sm:$0xff]
        %v2582 = vld [vmem:[%s300 + $0xe0] sm:$0xff]
        %v2583 = vld [vmem:[%s300 + $0xe8] sm:$0xff]
        %v2584 = vld [vmem:[%s300 + $0xf0] sm:$0xff]
        %v2585 = vld [vmem:[%s300 + $0xf8] sm:$0xff]
        %v2586 = vld [vmem:[%s300 + $0x100] sm:$0xff]
        %v2587 = vld [vmem:[%s300 + $0x108] sm:$0xff]
        %v2588 = vld [vmem:[%s300 + $0x110] sm:$0xff]
        %v2589 = vld [vmem:[%s300 + $0x118] sm:$0xff]
        %v2590 = vld [vmem:[%s300 + $0x120] sm:$0xff]
        %v2591 = vld [vmem:[%s300 + $0x128] sm:$0xff]
        %v2592 = vld [vmem:[%s300 + $0x130] sm:$0xff]
        %v2593 = vld [vmem:[%s300 + $0x138] sm:$0xff]
        %v2594 = vld [vmem:[%s300 + $0x140] sm:$0xff]
        %v2595 = vld [vmem:[%s300 + $0x148] sm:$0xff]
        %v2596 = vld [vmem:[%s300 + $0x150] sm:$0xff]
        %v2597 = vld [vmem:[%s300 + $0x158] sm:$0xff]
        %v2598 = vld [vmem:[%s300 + $0x160] sm:$0xff]
        %v2599 = vld [vmem:[%s300 + $0x168] sm:$0xff]
        %v2600 = vld [vmem:[%s300 + $0x170] sm:$0xff]
        %v2601 = vld [vmem:[%s300 + $0x178] sm:$0xff]
        %v2602 = vld [vmem:[%s300 + $0x180] sm:$0xff]
        %v2603 = vld [vmem:[%s300 + $0x188] sm:$0xff]
        %v2604 = vld [vmem:[%s300 + $0x190] sm:$0xff]
        %v2605 = vld [vmem:[%s300 + $0x198] sm:$0xff]
        %v2606 = vld [vmem:[%s300 + $0x1a0] sm:$0xff]
        %v2607 = vld [vmem:[%s300 + $0x1a8] sm:$0xff]
        %v2608 = vld [vmem:[%s300 + $0x1b0] sm:$0xff]
        %v2609 = vld [vmem:[%s300 + $0x1b8] sm:$0xff]
        %v2610 = vld [vmem:[%s300 + $0x1c0] sm:$0xff]
        %v2611 = vld [vmem:[%s300 + $0x1c8] sm:$0xff]
        %v2612 = vld [vmem:[%s300 + $0x1d0] sm:$0xff]
        %v2613 = vld [vmem:[%s300 + $0x1d8] sm:$0xff]
        %v2614 = vld [vmem:[%s300 + $0x1e0] sm:$0xff]
        %v2615 = vld [vmem:[%s300 + $0x1e8] sm:$0xff]
        %v2616 = vld [vmem:[%s300 + $0x1f0] sm:$0xff]
        %v2617 = vld [vmem:[%s300 + $0x1f8] sm:$0xff]
        %v2618 = vld [vmem:[%s300 + $0x200] sm:$0xff]
        %v2619 = vld [vmem:[%s300 + $0x208] sm:$0xff]
        %v2620 = vld [vmem:[%s300 + $0x210] sm:$0xff]
        %v2621 = vld [vmem:[%s300 + $0x218] sm:$0xff]
        %v2622 = vld [vmem:[%s300 + $0x220] sm:$0xff]
        %v2623 = vld [vmem:[%s300 + $0x228] sm:$0xff]
        %v2624 = vld [vmem:[%s300 + $0x230] sm:$0xff]
        %v2625 = vld [vmem:[%s300 + $0x238] sm:$0xff]
        %v2626 = vld [vmem:[%s300 + $0x240] sm:$0xff]
        %v2627 = vld [vmem:[%s300 + $0x248] sm:$0xff]
        %v2628 = vld [vmem:[%s300 + $0x250] sm:$0xff]
        %v2629 = vld [vmem:[%s300 + $0x258] sm:$0xff]
        %v2630 = vld [vmem:[%s300 + $0x260] sm:$0xff]
        %v2631 = vld [vmem:[%s300 + $0x268] sm:$0xff]
        %v2632 = vld [vmem:[%s300 + $0x270] sm:$0xff]
        %v2633 = vld [vmem:[%s300 + $0x278] sm:$0xff]
        %v2634 = vld [vmem:[%s300 + $0x280] sm:$0xff]
        %v2635 = vld [vmem:[%s300 + $0x288] sm:$0xff]
        %v2636 = vld [vmem:[%s300 + $0x290] sm:$0xff]
        %v2637 = vld [vmem:[%s300 + $0x298] sm:$0xff]
        %v2638 = vld [vmem:[%s300 + $0x2a0] sm:$0xff]
        %v2639 = vld [vmem:[%s300 + $0x2a8] sm:$0xff]
        %v2640 = vld [vmem:[%s300 + $0x2b0] sm:$0xff]
        %v2641 = vld [vmem:[%s300 + $0x2b8] sm:$0xff]
        %v2642 = vld [vmem:[%s300 + $0x2c0] sm:$0xff]
        %v2643 = vld [vmem:[%s300 + $0x2c8] sm:$0xff]
        %v2644 = vld [vmem:[%s300 + $0x2d0] sm:$0xff]
        %v2645 = vld [vmem:[%s300 + $0x2d8] sm:$0xff]
        %v2646 = vld [vmem:[%s300 + $0x2e0] sm:$0xff]
        %v2647 = vld [vmem:[%s300 + $0x2e8] sm:$0xff]
        %v2648 = vld [vmem:[%s300 + $0x2f0] sm:$0xff]
        %v2649 = vld [vmem:[%s300 + $0x2f8] sm:$0xff]
        %v2650 = vld [vmem:[%s300 + $0x300] sm:$0xff]
        %v2651 = vld [vmem:[%s300 + $0x308] sm:$0xff]
        %v2652 = vld [vmem:[%s300 + $0x310] sm:$0xff]
        %v2653 = vld [vmem:[%s300 + $0x318] sm:$0xff]
        %v2654 = vld [vmem:[%s300 + $0x320] sm:$0xff]
        %v2655 = vld [vmem:[%s300 + $0x328] sm:$0xff]
        %v2656 = vld [vmem:[%s300 + $0x330] sm:$0xff]
        %v2657 = vld [vmem:[%s300 + $0x338] sm:$0xff]
        %v2658 = vld [vmem:[%s300 + $0x340] sm:$0xff]
        %v2659 = vld [vmem:[%s300 + $0x348] sm:$0xff]
        %v2660 = vld [vmem:[%s300 + $0x350] sm:$0xff]
        %v2661 = vld [vmem:[%s300 + $0x358] sm:$0xff]
        %v2662 = vld [vmem:[%s300 + $0x360] sm:$0xff]
        %v2663 = vld [vmem:[%s300 + $0x368] sm:$0xff]
        %v2664 = vld [vmem:[%s300 + $0x370] sm:$0xff]
        %v2665 = vld [vmem:[%s300 + $0x378] sm:$0xff]
        %v2666 = vld [vmem:[%s300 + $0x380] sm:$0xff]
        %v2667 = vld [vmem:[%s300 + $0x388] sm:$0xff]
        %v2668 = vld [vmem:[%s300 + $0x390] sm:$0xff]
        %v2669 = vld [vmem:[%s300 + $0x398] sm:$0xff]
        %v2670 = vld [vmem:[%s300 + $0x3a0] sm:$0xff]
        %v2671 = vld [vmem:[%s300 + $0x3a8] sm:$0xff]
        %v2672 = vld [vmem:[%s300 + $0x3b0] sm:$0xff]
        %v2673 = vld [vmem:[%s300 + $0x3b8] sm:$0xff]
        %v2674 = vld [vmem:[%s300 + $0x3c0] sm:$0xff]
        %v2675 = vld [vmem:[%s300 + $0x3c8] sm:$0xff]
        %v2676 = vld [vmem:[%s300 + $0x3d0] sm:$0xff]
        %v2677 = vld [vmem:[%s300 + $0x3d8] sm:$0xff]
        %v2678 = vld [vmem:[%s300 + $0x3e0] sm:$0xff]
        %v2679 = vld [vmem:[%s300 + $0x3e8] sm:$0xff]
        %v2680 = vld [vmem:[%s300 + $0x3f0] sm:$0xff]
        %v2681 = vld [vmem:[%s300 + $0x3f8] sm:$0xff]
        %2682 = vmatprep.subr.mxu0 %v2555
        %2683 = vmatpush1.msra.mxu0 %v2554
        %2684 = vmatprep.subr.mxu0 %v2557
        %2685 = vmatpush1.msra.mxu0 %v2556
        %2686 = vmatprep.subr.mxu0 %v2559
        %2687 = vmatpush1.msra.mxu0 %v2558
        %2688 = vmatprep.subr.mxu0 %v2561
        %2689 = vmatpush1.msra.mxu0 %v2560
        %2690 = vmatprep.subr.mxu0 %v2563
        %2691 = vmatpush1.msra.mxu0 %v2562
        %2692 = vmatprep.subr.mxu0 %v2565
        %2693 = vmatpush1.msra.mxu0 %v2564
        %2694 = vmatprep.subr.mxu0 %v2567
        %2695 = vmatpush1.msra.mxu0 %v2566
        %2696 = vmatprep.subr.mxu0 %v2569
        %2697 = vmatpush1.msra.mxu0 %v2568
        %2698 = vmatprep.subr.mxu0 %v2571
        %2699 = vmatpush1.msra.mxu0 %v2570
        %2700 = vmatprep.subr.mxu0 %v2573
        %2701 = vmatpush1.msra.mxu0 %v2572
        %2702 = vmatprep.subr.mxu0 %v2575
        %2703 = vmatpush1.msra.mxu0 %v2574
        %2704 = vmatprep.subr.mxu0 %v2577
        %2705 = vmatpush1.msra.mxu0 %v2576
        %2706 = vmatprep.subr.mxu0 %v2579
        %2707 = vmatpush1.msra.mxu0 %v2578
        %2708 = vmatprep.subr.mxu0 %v2581
        %2709 = vmatpush1.msra.mxu0 %v2580
        %2710 = vmatprep.subr.mxu0 %v2583
        %2711 = vmatpush1.msra.mxu0 %v2582
        %2712 = vmatprep.subr.mxu0 %v2585
        %2713 = vmatpush1.msra.mxu0 %v2584
        %2714 = vmatprep.subr.mxu0 %v2587
        %2715 = vmatpush1.msra.mxu0 %v2586
        %2716 = vmatprep.subr.mxu0 %v2589
        %2717 = vmatpush1.msra.mxu0 %v2588
        %2718 = vmatprep.subr.mxu0 %v2591
        %2719 = vmatpush1.msra.mxu0 %v2590
        %2720 = vmatprep.subr.mxu0 %v2593
        %2721 = vmatpush1.msra.mxu0 %v2592
        %2722 = vmatprep.subr.mxu0 %v2595
        %2723 = vmatpush1.msra.mxu0 %v2594
        %2724 = vmatprep.subr.mxu0 %v2597
        %2725 = vmatpush1.msra.mxu0 %v2596
        %2726 = vmatprep.subr.mxu0 %v2599
        %2727 = vmatpush1.msra.mxu0 %v2598
        %2728 = vmatprep.subr.mxu0 %v2601
        %2729 = vmatpush1.msra.mxu0 %v2600
        %2730 = vmatprep.subr.mxu0 %v2603
        %2731 = vmatpush1.msra.mxu0 %v2602
        %2732 = vmatprep.subr.mxu0 %v2605
        %2733 = vmatpush1.msra.mxu0 %v2604
        %2734 = vmatprep.subr.mxu0 %v2607
        %2735 = vmatpush1.msra.mxu0 %v2606
        %2736 = vmatprep.subr.mxu0 %v2609
        %2737 = vmatpush1.msra.mxu0 %v2608
        %2738 = vmatprep.subr.mxu0 %v2611
        %2739 = vmatpush1.msra.mxu0 %v2610
        %2740 = vmatprep.subr.mxu0 %v2613
        %2741 = vmatpush1.msra.mxu0 %v2612
        %2742 = vmatprep.subr.mxu0 %v2615
        %2743 = vmatpush1.msra.mxu0 %v2614
        %2744 = vmatprep.subr.mxu0 %v2617
        %2745 = vmatpush1.msra.mxu0 %v2616
        %2746 = vmatprep.mubr.f32.mxu0 %v2549
        %2747 = vmatmul.mubr.f32.gmra.mrb[0].mxu0 %v2548
        %v2748 = vpop.f32.mrb[0].mxu0
        %v2749 = vadd.f32 0.0, %v2748
        %v2750 = vpop.f32.mrb[0].mxu0
        %v2751 = vadd.f32 0.0, %v2750
        %2752 = vdwg.mxu0
        %2753 = vmatprep.subr.mxu0 %v2619
        %2754 = vmatpush1.msra.mxu0 %v2618
        %2755 = vmatprep.subr.mxu0 %v2621
        %2756 = vmatpush1.msra.mxu0 %v2620
        %2757 = vmatprep.subr.mxu0 %v2623
        %2758 = vmatpush1.msra.mxu0 %v2622
        %2759 = vmatprep.subr.mxu0 %v2625
        %2760 = vmatpush1.msra.mxu0 %v2624
        %2761 = vmatprep.subr.mxu0 %v2627
        %2762 = vmatpush1.msra.mxu0 %v2626
        %2763 = vmatprep.subr.mxu0 %v2629
        %2764 = vmatpush1.msra.mxu0 %v2628
        %2765 = vmatprep.subr.mxu0 %v2631
        %2766 = vmatpush1.msra.mxu0 %v2630
        %2767 = vmatprep.subr.mxu0 %v2633
        %2768 = vmatpush1.msra.mxu0 %v2632
        %2769 = vmatprep.subr.mxu0 %v2635
        %2770 = vmatpush1.msra.mxu0 %v2634
        %2771 = vmatprep.subr.mxu0 %v2637
        %2772 = vmatpush1.msra.mxu0 %v2636
        %2773 = vmatprep.subr.mxu0 %v2639
        %2774 = vmatpush1.msra.mxu0 %v2638
        %2775 = vmatprep.subr.mxu0 %v2641
        %2776 = vmatpush1.msra.mxu0 %v2640
        %2777 = vmatprep.subr.mxu0 %v2643
        %2778 = vmatpush1.msra.mxu0 %v2642
        %2779 = vmatprep.subr.mxu0 %v2645
        %2780 = vmatpush1.msra.mxu0 %v2644
        %2781 = vmatprep.subr.mxu0 %v2647
        %2782 = vmatpush1.msra.mxu0 %v2646
        %2783 = vmatprep.subr.mxu0 %v2649
        %2784 = vmatpush1.msra.mxu0 %v2648
        %2785 = vmatprep.subr.mxu0 %v2651
        %2786 = vmatpush1.msra.mxu0 %v2650
        %2787 = vmatprep.subr.mxu0 %v2653
        %2788 = vmatpush1.msra.mxu0 %v2652
        %2789 = vmatprep.subr.mxu0 %v2655
        %2790 = vmatpush1.msra.mxu0 %v2654
        %2791 = vmatprep.subr.mxu0 %v2657
        %2792 = vmatpush1.msra.mxu0 %v2656
        %2793 = vmatprep.subr.mxu0 %v2659
        %2794 = vmatpush1.msra.mxu0 %v2658
        %2795 = vmatprep.subr.mxu0 %v2661
        %2796 = vmatpush1.msra.mxu0 %v2660
        %2797 = vmatprep.subr.mxu0 %v2663
        %2798 = vmatpush1.msra.mxu0 %v2662
        %2799 = vmatprep.subr.mxu0 %v2665
        %2800 = vmatpush1.msra.mxu0 %v2664
        %2801 = vmatprep.subr.mxu0 %v2667
        %2802 = vmatpush1.msra.mxu0 %v2666
        %2803 = vmatprep.subr.mxu0 %v2669
        %2804 = vmatpush1.msra.mxu0 %v2668
        %2805 = vmatprep.subr.mxu0 %v2671
        %2806 = vmatpush1.msra.mxu0 %v2670
        %2807 = vmatprep.subr.mxu0 %v2673
        %2808 = vmatpush1.msra.mxu0 %v2672
        %2809 = vmatprep.subr.mxu0 %v2675
        %2810 = vmatpush1.msra.mxu0 %v2674
        %2811 = vmatprep.subr.mxu0 %v2677
        %2812 = vmatpush1.msra.mxu0 %v2676
        %2813 = vmatprep.subr.mxu0 %v2679
        %2814 = vmatpush1.msra.mxu0 %v2678
        %2815 = vmatprep.subr.mxu0 %v2681
        %2816 = vmatpush1.msra.mxu0 %v2680
        %2817 = vmatprep.mubr.f32.mxu0 %v2551
        %2818 = vmatmul.mubr.f32.gmra.mrb[0].mxu0 %v2550
        %v2819 = vpop.f32.mrb[0].mxu0
        %v2820 = vadd.f32 %v2749, %v2819
        %v2821 = vpop.f32.mrb[0].mxu0
        %v2822 = vadd.f32 %v2751, %v2821
        %2823 = vdwg.mxu0
        %v2824 = vadd.f32 %v2552, %v2820
        %v2825 = vadd.f32 %v2553, %v2822
        %2826 = vst [vmem:[%s334] sm:$0xff] %v2824
        %2827 = vst [vmem:[%s334 + $0x8] sm:$0xff] %v2825
        %s2828 = sand.u32 %s156, 1
        %s2829 = scalar_lea.sflag [#allocation4], %s2828
        %s2830 = sand.u32 %s156, 1
        %s2831 = smul.addr %s2830, 16
        %s2832 = scalar_lea.vmem [#allocation10], %s2831
        // Predicated region
        $region57: #{tpu_custom_call.1} parent=35 // pred_check
          %p2833 = pneg %p166
        $region58: #{tpu_custom_call.1} parent=35 // pred_check_branch
          %2835 = sbr.rel (%p2833) target = $region60
        $region59: #{tpu_custom_call.1} parent=35 // pred_region
          %s2837 = ssub.s32 256, 256
          %2838 = vsyncadd %s2829, %s2837
          %s2839 = smul.addr %s29, 2
          %s2840 = smul.addr %s2839, 128
          %s2841 = scalar_lea.hbm %s4, %s2840
          %s2843 = sshll.u32 %s2832, 4
          %s2844 = int_to_ptr.vmem [resolvable:$true] %s2843
          %2846 = dma.vmem_to_hbm [thread:$0]  %s2844, 256, %s2841, %s2829
        $region60: #{tpu_custom_call.1} parent=35 // pred_fallthru
          _
      $region36: #{tpu_custom_call.1} parent=5 // pred_fallthru
        _
      %p2847 = scmp.le.s32.totalorder 2, %s20
      // Predicated region
      $region61: #{tpu_custom_call.1} parent=5 // pred_check
        %p2848 = pneg %p2847
      $region62: #{tpu_custom_call.1} parent=5 // pred_check_branch
        %2850 = sbr.rel (%p2848) target = $region64
      $region63: #{tpu_custom_call.1} parent=5 // pred_region
        %s2851 = ssub.s32 %s20, 2
        // Predicated region
        $region65: #{tpu_custom_call.1} parent=63 // pred_check
          %p2852 = pneg %p172
        $region66: #{tpu_custom_call.1} parent=63 // pred_check_branch
          %2854 = sbr.rel (%p2852) target = $region68
        $region67: #{tpu_custom_call.1} parent=63 // pred_region
          %s2855 = sand.u32 %s157, 1
          %s2856 = scalar_lea.sflag [#allocation4], %s2855
          %s2857 = sand.u32 %s157, 1
          %s2858 = smul.addr %s2857, 16
          %s2859 = scalar_lea.vmem [#allocation10], %s2858
          %2860 = dma.done %s2856, 256
        $region68: #{tpu_custom_call.1} parent=63 // pred_fallthru
          _
      $region64: #{tpu_custom_call.1} parent=5 // pred_fallthru
        _
    $region6: #{tpu_custom_call.1} parent=1 // loop_footer
      %s24 = sadd.s32 1, %s20
    $region7: #{tpu_custom_call.1} parent=1 // loop_footer_branch
      %19 = sbr.rel target = $region3
    $region8: #{tpu_custom_call.1} parent=1 // loop_exit
      _
    %2861 = vsyncpa [#allocation3], 1
    %s2862 = scalar_lea.sflag [#allocation3], 1
    %2863 = vsyncpa %s2862, 1
    %2864 = vsyncpa [#allocation6], 1
    %s2865 = scalar_lea.sflag [#allocation6], 1
    %2866 = vsyncpa %s2865, 1
    %2867 = vsyncpa [#allocation9], 1
    %s2868 = scalar_lea.sflag [#allocation9], 1
    %2869 = vsyncpa %s2868, 1
    %2870 = vsyncpa [#allocation4], 1
    %s2871 = scalar_lea.sflag [#allocation4], 1
    %2872 = vsyncpa %s2871, 1

</llo_original>
